<compile_context>
chip_gen: v7x
topology: tpu7x:2x2x1
jax: 0.10.0
libtpu: 0.0.40
codegen_flags: <defaults>
</compile_context>

<pallas_src>
import functools

import numpy as np
import jax
import jax.numpy as jnp
from jax.experimental import pallas as pl
from jax.experimental.pallas import tpu as pltpu


# ----------------------------------------------------------------------------
# In-kernel building blocks (pure values; all 2-D matmul / elementwise / exp).
# ----------------------------------------------------------------------------
def _group_softmax(s, gsum, gbc, inv_t):
    """Exact softmax over each group of consecutive rows of s [G*T, H].

    gsum [G, G*T] sums a group's rows, gbc [G*T, G] broadcasts a per-group row
    back to its members.  Mean-stabilised: the per-group constant cancels
    exactly, and the denominator is always >= 1 (exp(max - mean) >= 1).
    """
    mu = jnp.dot(gsum, s, preferred_element_type=jnp.float32) * inv_t       # [G, H]
    p = jnp.exp(s - jnp.dot(gbc, mu, preferred_element_type=jnp.float32))   # [G*T, H]
    denom = jnp.dot(gsum, p, preferred_element_type=jnp.float32)            # [G, H]
    inv = pl.reciprocal(denom, approx=True)
    return p * jnp.dot(gbc, inv, preferred_element_type=jnp.float32)        # [G*T, H]


def _agg_attention(xf, wq, wk, gsum, gbc, hsum, hexp, inv_t):
    """Mean-query aggregation attention over groups of T tokens, all heads at
    once.  xf: [G*T, F] -> [G, F].  wq already carries the 1/sqrt(dk) scale."""
    xm = jnp.dot(gsum, xf, preferred_element_type=jnp.float32) * inv_t      # [G, F]
    q = jnp.dot(xm, wq, preferred_element_type=jnp.float32)                 # [G, KQ]
    k = jnp.dot(xf, wk, preferred_element_type=jnp.float32)                 # [G*T, KQ]
    qf = jnp.dot(gbc, q, preferred_element_type=jnp.float32)                # [G*T, KQ]
    s = jnp.dot(qf * k, hsum, preferred_element_type=jnp.float32)           # [G*T, H]
    a = _group_softmax(s, gsum, gbc, inv_t)                                 # [G*T, H]
    af = jnp.dot(a, hexp, preferred_element_type=jnp.float32)               # [G*T, F]
    return jnp.dot(gsum, af * xf, preferred_element_type=jnp.float32)       # [G, F]


def _interpoint_attention(x, loc, wq, wk, wv, wo, wloc,
                          eq, ek, sumj, hsum, hexp, inv_n):
    """Multi-head self-attention over N points with learned location bias and
    residual.  x: [N, F], loc: [N*N, 3] (row i*N+j = coords diff of (i, j))."""
    q = jnp.dot(x, wq, preferred_element_type=jnp.float32)                  # [N, KQ]
    k = jnp.dot(x, wk, preferred_element_type=jnp.float32)                  # [N, KQ]
    v = jnp.dot(x, wv, preferred_element_type=jnp.float32)                  # [N, F]
    qf = jnp.dot(eq, q, preferred_element_type=jnp.float32)                 # [NN, KQ]
    kf = jnp.dot(ek, k, preferred_element_type=jnp.float32)                 # [NN, KQ]
    bias = jnp.dot(loc, wloc, preferred_element_type=jnp.float32)           # [NN, H]
    s = jnp.dot(qf * kf, hsum, preferred_element_type=jnp.float32) + bias   # [NN, H]
    a = _group_softmax(s, sumj, eq, inv_n)                                  # [NN, H]
    af = jnp.dot(a, hexp, preferred_element_type=jnp.float32)               # [NN, F]
    vf = jnp.dot(ek, v, preferred_element_type=jnp.float32)                 # [NN, F]
    attn = jnp.dot(sumj, af * vf, preferred_element_type=jnp.float32)       # [N, F]
    return jnp.dot(attn, wo, preferred_element_type=jnp.float32) + x        # residual


# ----------------------------------------------------------------------------
# Fused kernel: one grid step = one batch element.
# ----------------------------------------------------------------------------
def _hifanet_kernel(img_ref, loc_ref,
                    gsum_p_ref, gbc_p_ref, gsum_i_ref, gbc_i_ref,
                    hsum_ref, hexp_ref, eq_ref, ek_ref, sumj_ref,
                    pwq_ref, pwk_ref, iwq_ref, iwk_ref,
                    ipq_ref, ipk_ref, ipv_ref, ipo_ref, wloc_ref,
                    w1_ref, b1_ref, w2_ref, b2_ref,
                    out_ref, *, inv_P, inv_O, inv_N):
    xf = img_ref[0]                                   # [N*O*P, F]
    hsum = hsum_ref[...]                              # [KQ, H]
    hexp = hexp_ref[...]                              # [H, F]

    # Patch-level attention: pool ps*ps patch tokens per observation.
    x1 = _agg_attention(xf, pwq_ref[...], pwk_ref[...],
                        gsum_p_ref[...], gbc_p_ref[...], hsum, hexp, inv_P)  # [N*O, F]

    # Instance-level attention: pool obs_num observations per point.
    x2 = _agg_attention(x1, iwq_ref[...], iwk_ref[...],
                        gsum_i_ref[...], gbc_i_ref[...], hsum, hexp, inv_O)  # [N, F]

    # Inter-point attention over the N points (location bias + residual).
    x3 = _interpoint_attention(x2, loc_ref[0],
                               ipq_ref[...], ipk_ref[...], ipv_ref[...],
                               ipo_ref[...], wloc_ref[...],
                               eq_ref[...], ek_ref[...], sumj_ref[...],
                               hsum, hexp, inv_N)                            # [N, F]

    # Classification head: Linear -> ReLU -> Linear (class dim padded to 128).
    h = jnp.dot(x3, w1_ref[...], preferred_element_type=jnp.float32) + b1_ref[...]
    h = jnp.maximum(h, 0.0)
    logits = jnp.dot(h, w2_ref[...], preferred_element_type=jnp.float32) + b2_ref[...]
    out_ref[0] = logits.astype(out_ref.dtype)


# ----------------------------------------------------------------------------
# Wrapper: builds the constant routing matrices and launches the fused kernel.
# ----------------------------------------------------------------------------
def hifanet_forward(img_feat, point_loc, params, *, num_heads, class_num):
    B, N, O, ps1, ps2, F = img_feat.shape
    P = ps1 * ps2
    NOP = N * O * P
    NN = N * N
    KQ = params["patch_wq"].shape[1]
    cpad = params["head_w2"].shape[1]
    assert F % num_heads == 0 and KQ % num_heads == 0

    x = img_feat.reshape(B, NOP, F)            # tokens channels-last
    loc = point_loc.reshape(B, NN, 3)          # row i*N+j = (i, j) pair

    # Constant 0/1 routing matrices (built host-side, tiny).
    eyeH = np.eye(num_heads, dtype=np.float32)
    gsum_p = np.kron(np.eye(N * O, dtype=np.float32), np.ones((1, P), np.float32))
    gsum_i = np.kron(np.eye(N, dtype=np.float32), np.ones((1, O), np.float32))
    hsum = np.kron(eyeH, np.ones((KQ // num_heads, 1), np.float32))   # [KQ, H]
    hexp = np.kron(eyeH, np.ones((1, F // num_heads), np.float32))    # [H, F]
    eq = np.repeat(np.eye(N, dtype=np.float32), N, axis=0)            # [NN, N] row->query i
    ek = np.tile(np.eye(N, dtype=np.float32), (N, 1))                 # [NN, N] row->key j
    consts = [jnp.asarray(a) for a in
              (gsum_p, gsum_p.T, gsum_i, gsum_i.T, hsum, hexp, eq, ek, eq.T)]

    weights = [params["patch_wq"], params["patch_wk"],
               params["inst_wq"], params["inst_wk"],
               params["ip_wq"], params["ip_wk"], params["ip_wv"], params["ip_wo"],
               params["ip_wloc"],
               params["head_w1"], params["head_b1"],
               params["head_w2"], params["head_b2"]]

    def _full2d(shape):
        return pl.BlockSpec(shape, lambda b: (0, 0))

    kern = functools.partial(_hifanet_kernel,
                             inv_P=1.0 / P, inv_O=1.0 / O, inv_N=1.0 / N)
    out = pl.pallas_call(
        kern,
        out_shape=jax.ShapeDtypeStruct((B, N, cpad), jnp.float32),
        grid=(B,),
        in_specs=[pl.BlockSpec((1, NOP, F), lambda b: (b, 0, 0)),
                  pl.BlockSpec((1, NN, 3), lambda b: (b, 0, 0))]
                 + [_full2d(a.shape) for a in consts]
                 + [_full2d(a.shape) for a in weights],
        out_specs=pl.BlockSpec((1, N, cpad), lambda b: (b, 0, 0)),
        compiler_params=pltpu.CompilerParams(
            dimension_semantics=("parallel",)),
    )(x, loc, *consts, *weights)

    return out[..., :class_num]                # drop lane padding


def init_params(in_features, kq_len, num_heads, class_num, hidden=512, seed=42):
    key = jax.random.PRNGKey(seed)
    ks = jax.random.split(key, 11)

    def rnd(k, shape, scale=0.05):
        return (scale * jax.random.normal(k, shape)).astype(jnp.float32)

    dk = kq_len // num_heads
    qscale = 1.0 / float(dk) ** 0.5                   # folded attention scale
    cpad = ((class_num + 127) // 128) * 128           # lane-dense logits
    w2 = jnp.zeros((hidden, cpad), jnp.float32)
    w2 = w2.at[:, :class_num].set(rnd(ks[10], (hidden, class_num)))

    return {
        "patch_wq": rnd(ks[0], (in_features, kq_len)) * qscale,
        "patch_wk": rnd(ks[1], (in_features, kq_len)),
        "inst_wq": rnd(ks[2], (in_features, kq_len)) * qscale,
        "inst_wk": rnd(ks[3], (in_features, kq_len)),
        "ip_wq": rnd(ks[4], (in_features, kq_len)) * qscale,
        "ip_wk": rnd(ks[5], (in_features, kq_len)),
        "ip_wv": rnd(ks[6], (in_features, in_features)),
        "ip_wo": rnd(ks[7], (in_features, in_features)),
        "ip_wloc": rnd(ks[8], (3, num_heads)),
        "head_w1": rnd(ks[9], (in_features, hidden)),
        "head_b1": jnp.zeros((1, hidden), jnp.float32),
        "head_w2": w2,
        "head_b2": jnp.zeros((1, cpad), jnp.float32),
    }


if __name__ == "__main__":
    # Small config consistent with the module's signature.
    B, N, obs_num, patch_size = 2, 6, 3, 2
    in_features, kq_len, num_heads, class_num = 32, 16, 4, 14

    params = init_params(in_features, kq_len, num_heads, class_num)

    key = jax.random.PRNGKey(0)
    k1, k2 = jax.random.split(key)
    img_feat = jax.random.normal(
        k1, (B, N, obs_num, patch_size, patch_size, in_features), jnp.float32)
    point_loc = jax.random.normal(k2, (B, N, N, 3), jnp.float32)

    fwd = jax.jit(functools.partial(hifanet_forward, num_heads=num_heads,
                                    class_num=class_num))
    logits = fwd(img_feat, point_loc, params)
    jax.block_until_ready(logits)
    assert logits.shape == (B, N, class_num)
    assert bool(jnp.all(jnp.isfinite(logits)))
    print("KERNEL_OK")
</pallas_src>

<mosaic_0001>
module attributes {stable_mosaic.version = 11 : i64} {
  func.func @_hifanet_kernel(%arg0: i32, %arg1: memref<1x72x32xf32, #tpu.memory_space<vmem>>, %arg2: memref<1x36x3xf32, #tpu.memory_space<vmem>>, %arg3: memref<18x72xf32, #tpu.memory_space<vmem>>, %arg4: memref<72x18xf32, #tpu.memory_space<vmem>>, %arg5: memref<6x18xf32, #tpu.memory_space<vmem>>, %arg6: memref<18x6xf32, #tpu.memory_space<vmem>>, %arg7: memref<16x4xf32, #tpu.memory_space<vmem>>, %arg8: memref<4x32xf32, #tpu.memory_space<vmem>>, %arg9: memref<36x6xf32, #tpu.memory_space<vmem>>, %arg10: memref<36x6xf32, #tpu.memory_space<vmem>>, %arg11: memref<6x36xf32, #tpu.memory_space<vmem>>, %arg12: memref<32x16xf32, #tpu.memory_space<vmem>>, %arg13: memref<32x16xf32, #tpu.memory_space<vmem>>, %arg14: memref<32x16xf32, #tpu.memory_space<vmem>>, %arg15: memref<32x16xf32, #tpu.memory_space<vmem>>, %arg16: memref<32x16xf32, #tpu.memory_space<vmem>>, %arg17: memref<32x16xf32, #tpu.memory_space<vmem>>, %arg18: memref<32x32xf32, #tpu.memory_space<vmem>>, %arg19: memref<32x32xf32, #tpu.memory_space<vmem>>, %arg20: memref<3x4xf32, #tpu.memory_space<vmem>>, %arg21: memref<32x512xf32, #tpu.memory_space<vmem>>, %arg22: memref<1x512xf32, #tpu.memory_space<vmem>>, %arg23: memref<512x128xf32, #tpu.memory_space<vmem>>, %arg24: memref<1x128xf32, #tpu.memory_space<vmem>>, %arg25: memref<1x6x128xf32, #tpu.memory_space<vmem>>) attributes {dimension_semantics = [#tpu.dimension_semantics<parallel>], iteration_bounds = array<i64: 2>, scalar_prefetch = 0 : i64, scratch_operands = 0 : i64, tpu.core_type = #tpu.core_type<tc>, window_params = [{transform_indices = @transform_0, window_bounds = array<i64: 1, 72, 32>}, {transform_indices = @transform_1, window_bounds = array<i64: 1, 36, 3>}, {pipeline_mode = #tpu.pipeline_mode<synchronous>, transform_indices = @transform_2, window_bounds = array<i64: 18, 72>}, {pipeline_mode = #tpu.pipeline_mode<synchronous>, transform_indices = @transform_3, window_bounds = array<i64: 72, 18>}, {pipeline_mode = #tpu.pipeline_mode<synchronous>, transform_indices = @transform_4, window_bounds = array<i64: 6, 18>}, {pipeline_mode = #tpu.pipeline_mode<synchronous>, transform_indices = @transform_5, window_bounds = array<i64: 18, 6>}, {pipeline_mode = #tpu.pipeline_mode<synchronous>, transform_indices = @transform_6, window_bounds = array<i64: 16, 4>}, {pipeline_mode = #tpu.pipeline_mode<synchronous>, transform_indices = @transform_7, window_bounds = array<i64: 4, 32>}, {pipeline_mode = #tpu.pipeline_mode<synchronous>, transform_indices = @transform_8, window_bounds = array<i64: 36, 6>}, {pipeline_mode = #tpu.pipeline_mode<synchronous>, transform_indices = @transform_9, window_bounds = array<i64: 36, 6>}, {pipeline_mode = #tpu.pipeline_mode<synchronous>, transform_indices = @transform_10, window_bounds = array<i64: 6, 36>}, {pipeline_mode = #tpu.pipeline_mode<synchronous>, transform_indices = @transform_11, window_bounds = array<i64: 32, 16>}, {pipeline_mode = #tpu.pipeline_mode<synchronous>, transform_indices = @transform_12, window_bounds = array<i64: 32, 16>}, {pipeline_mode = #tpu.pipeline_mode<synchronous>, transform_indices = @transform_13, window_bounds = array<i64: 32, 16>}, {pipeline_mode = #tpu.pipeline_mode<synchronous>, transform_indices = @transform_14, window_bounds = array<i64: 32, 16>}, {pipeline_mode = #tpu.pipeline_mode<synchronous>, transform_indices = @transform_15, window_bounds = array<i64: 32, 16>}, {pipeline_mode = #tpu.pipeline_mode<synchronous>, transform_indices = @transform_16, window_bounds = array<i64: 32, 16>}, {pipeline_mode = #tpu.pipeline_mode<synchronous>, transform_indices = @transform_17, window_bounds = array<i64: 32, 32>}, {pipeline_mode = #tpu.pipeline_mode<synchronous>, transform_indices = @transform_18, window_bounds = array<i64: 32, 32>}, {pipeline_mode = #tpu.pipeline_mode<synchronous>, transform_indices = @transform_19, window_bounds = array<i64: 3, 4>}, {pipeline_mode = #tpu.pipeline_mode<synchronous>, transform_indices = @transform_20, window_bounds = array<i64: 32, 512>}, {pipeline_mode = #tpu.pipeline_mode<synchronous>, transform_indices = @transform_21, window_bounds = array<i64: 1, 512>}, {pipeline_mode = #tpu.pipeline_mode<synchronous>, transform_indices = @transform_22, window_bounds = array<i64: 512, 128>}, {pipeline_mode = #tpu.pipeline_mode<synchronous>, transform_indices = @transform_23, window_bounds = array<i64: 1, 128>}, {transform_indices = @transform_24, window_bounds = array<i64: 1, 6, 128>}]} {
    %c0 = arith.constant 0 : index
    %c0_0 = arith.constant 0 : index
    %c0_1 = arith.constant 0 : index
    %0 = vector.load %arg1[%c0, %c0_0, %c0_1] : memref<1x72x32xf32, #tpu.memory_space<vmem>>, vector<1x72x32xf32>
    %1 = vector.shape_cast %0 : vector<1x72x32xf32> to vector<72x32xf32>
    %c0_2 = arith.constant 0 : index
    %c0_3 = arith.constant 0 : index
    %2 = vector.load %arg7[%c0_2, %c0_3] : memref<16x4xf32, #tpu.memory_space<vmem>>, vector<16x4xf32>
    %c0_4 = arith.constant 0 : index
    %c0_5 = arith.constant 0 : index
    %3 = vector.load %arg8[%c0_4, %c0_5] : memref<4x32xf32, #tpu.memory_space<vmem>>, vector<4x32xf32>
    %c0_6 = arith.constant 0 : index
    %c0_7 = arith.constant 0 : index
    %4 = vector.load %arg12[%c0_6, %c0_7] : memref<32x16xf32, #tpu.memory_space<vmem>>, vector<32x16xf32>
    %c0_8 = arith.constant 0 : index
    %c0_9 = arith.constant 0 : index
    %5 = vector.load %arg13[%c0_8, %c0_9] : memref<32x16xf32, #tpu.memory_space<vmem>>, vector<32x16xf32>
    %c0_10 = arith.constant 0 : index
    %c0_11 = arith.constant 0 : index
    %6 = vector.load %arg3[%c0_10, %c0_11] : memref<18x72xf32, #tpu.memory_space<vmem>>, vector<18x72xf32>
    %c0_12 = arith.constant 0 : index
    %c0_13 = arith.constant 0 : index
    %7 = vector.load %arg4[%c0_12, %c0_13] : memref<72x18xf32, #tpu.memory_space<vmem>>, vector<72x18xf32>
    %cst = arith.constant dense<0.000000e+00> : vector<18x32xf32>
    %8 = tpu.matmul %6, %1, %cst {dimension_numbers = #tpu.dot_dimension_numbers<[1], [0], [0], [1], [0, 0, 1, 1], [], []>} : vector<18x72xf32>, vector<72x32xf32>, vector<18x32xf32> -> vector<18x32xf32>
    %cst_14 = arith.constant 2.500000e-01 : f32
    %9 = vector.broadcast %cst_14 : f32 to vector<18x32xf32>
    %10 = arith.mulf %8, %9 : vector<18x32xf32>
    %cst_15 = arith.constant dense<0.000000e+00> : vector<18x16xf32>
    %11 = tpu.matmul %10, %4, %cst_15 {dimension_numbers = #tpu.dot_dimension_numbers<[1], [0], [0], [1], [0, 0, 1, 1], [], []>} : vector<18x32xf32>, vector<32x16xf32>, vector<18x16xf32> -> vector<18x16xf32>
    %cst_16 = arith.constant dense<0.000000e+00> : vector<72x16xf32>
    %12 = tpu.matmul %1, %5, %cst_16 {dimension_numbers = #tpu.dot_dimension_numbers<[1], [0], [0], [1], [0, 0, 1, 1], [], []>} : vector<72x32xf32>, vector<32x16xf32>, vector<72x16xf32> -> vector<72x16xf32>
    %cst_17 = arith.constant dense<0.000000e+00> : vector<72x16xf32>
    %13 = tpu.matmul %7, %11, %cst_17 {dimension_numbers = #tpu.dot_dimension_numbers<[1], [0], [0], [1], [0, 0, 1, 1], [], []>} : vector<72x18xf32>, vector<18x16xf32>, vector<72x16xf32> -> vector<72x16xf32>
    %14 = arith.mulf %13, %12 : vector<72x16xf32>
    %cst_18 = arith.constant dense<0.000000e+00> : vector<72x4xf32>
    %15 = tpu.matmul %14, %2, %cst_18 {dimension_numbers = #tpu.dot_dimension_numbers<[1], [0], [0], [1], [0, 0, 1, 1], [], []>} : vector<72x16xf32>, vector<16x4xf32>, vector<72x4xf32> -> vector<72x4xf32>
    %cst_19 = arith.constant dense<0.000000e+00> : vector<18x4xf32>
    %16 = tpu.matmul %6, %15, %cst_19 {dimension_numbers = #tpu.dot_dimension_numbers<[1], [0], [0], [1], [0, 0, 1, 1], [], []>} : vector<18x72xf32>, vector<72x4xf32>, vector<18x4xf32> -> vector<18x4xf32>
    %cst_20 = arith.constant 2.500000e-01 : f32
    %17 = vector.broadcast %cst_20 : f32 to vector<18x4xf32>
    %18 = arith.mulf %16, %17 : vector<18x4xf32>
    %cst_21 = arith.constant dense<0.000000e+00> : vector<72x4xf32>
    %19 = tpu.matmul %7, %18, %cst_21 {dimension_numbers = #tpu.dot_dimension_numbers<[1], [0], [0], [1], [0, 0, 1, 1], [], []>} : vector<72x18xf32>, vector<18x4xf32>, vector<72x4xf32> -> vector<72x4xf32>
    %20 = arith.subf %15, %19 : vector<72x4xf32>
    %21 = math.exp %20 : vector<72x4xf32>
    %cst_22 = arith.constant dense<0.000000e+00> : vector<18x4xf32>
    %22 = tpu.matmul %6, %21, %cst_22 {dimension_numbers = #tpu.dot_dimension_numbers<[1], [0], [0], [1], [0, 0, 1, 1], [], []>} : vector<18x72xf32>, vector<72x4xf32>, vector<18x4xf32> -> vector<18x4xf32>
    %23 = tpu.reciprocal %22 {approx = true} : vector<18x4xf32> -> vector<18x4xf32>
    %cst_23 = arith.constant dense<0.000000e+00> : vector<72x4xf32>
    %24 = tpu.matmul %7, %23, %cst_23 {dimension_numbers = #tpu.dot_dimension_numbers<[1], [0], [0], [1], [0, 0, 1, 1], [], []>} : vector<72x18xf32>, vector<18x4xf32>, vector<72x4xf32> -> vector<72x4xf32>
    %25 = arith.mulf %21, %24 : vector<72x4xf32>
    %cst_24 = arith.constant dense<0.000000e+00> : vector<72x32xf32>
    %26 = tpu.matmul %25, %3, %cst_24 {dimension_numbers = #tpu.dot_dimension_numbers<[1], [0], [0], [1], [0, 0, 1, 1], [], []>} : vector<72x4xf32>, vector<4x32xf32>, vector<72x32xf32> -> vector<72x32xf32>
    %27 = arith.mulf %26, %1 : vector<72x32xf32>
    %cst_25 = arith.constant dense<0.000000e+00> : vector<18x32xf32>
    %28 = tpu.matmul %6, %27, %cst_25 {dimension_numbers = #tpu.dot_dimension_numbers<[1], [0], [0], [1], [0, 0, 1, 1], [], []>} : vector<18x72xf32>, vector<72x32xf32>, vector<18x32xf32> -> vector<18x32xf32>
    %c0_26 = arith.constant 0 : index
    %c0_27 = arith.constant 0 : index
    %29 = vector.load %arg14[%c0_26, %c0_27] : memref<32x16xf32, #tpu.memory_space<vmem>>, vector<32x16xf32>
    %c0_28 = arith.constant 0 : index
    %c0_29 = arith.constant 0 : index
    %30 = vector.load %arg15[%c0_28, %c0_29] : memref<32x16xf32, #tpu.memory_space<vmem>>, vector<32x16xf32>
    %c0_30 = arith.constant 0 : index
    %c0_31 = arith.constant 0 : index
    %31 = vector.load %arg5[%c0_30, %c0_31] : memref<6x18xf32, #tpu.memory_space<vmem>>, vector<6x18xf32>
    %c0_32 = arith.constant 0 : index
    %c0_33 = arith.constant 0 : index
    %32 = vector.load %arg6[%c0_32, %c0_33] : memref<18x6xf32, #tpu.memory_space<vmem>>, vector<18x6xf32>
    %cst_34 = arith.constant dense<0.000000e+00> : vector<6x32xf32>
    %33 = tpu.matmul %31, %28, %cst_34 {dimension_numbers = #tpu.dot_dimension_numbers<[1], [0], [0], [1], [0, 0, 1, 1], [], []>} : vector<6x18xf32>, vector<18x32xf32>, vector<6x32xf32> -> vector<6x32xf32>
    %cst_35 = arith.constant 0.333333343 : f32
    %34 = vector.broadcast %cst_35 : f32 to vector<6x32xf32>
    %35 = arith.mulf %33, %34 : vector<6x32xf32>
    %cst_36 = arith.constant dense<0.000000e+00> : vector<6x16xf32>
    %36 = tpu.matmul %35, %29, %cst_36 {dimension_numbers = #tpu.dot_dimension_numbers<[1], [0], [0], [1], [0, 0, 1, 1], [], []>} : vector<6x32xf32>, vector<32x16xf32>, vector<6x16xf32> -> vector<6x16xf32>
    %cst_37 = arith.constant dense<0.000000e+00> : vector<18x16xf32>
    %37 = tpu.matmul %28, %30, %cst_37 {dimension_numbers = #tpu.dot_dimension_numbers<[1], [0], [0], [1], [0, 0, 1, 1], [], []>} : vector<18x32xf32>, vector<32x16xf32>, vector<18x16xf32> -> vector<18x16xf32>
    %cst_38 = arith.constant dense<0.000000e+00> : vector<18x16xf32>
    %38 = tpu.matmul %32, %36, %cst_38 {dimension_numbers = #tpu.dot_dimension_numbers<[1], [0], [0], [1], [0, 0, 1, 1], [], []>} : vector<18x6xf32>, vector<6x16xf32>, vector<18x16xf32> -> vector<18x16xf32>
    %39 = arith.mulf %38, %37 : vector<18x16xf32>
    %cst_39 = arith.constant dense<0.000000e+00> : vector<18x4xf32>
    %40 = tpu.matmul %39, %2, %cst_39 {dimension_numbers = #tpu.dot_dimension_numbers<[1], [0], [0], [1], [0, 0, 1, 1], [], []>} : vector<18x16xf32>, vector<16x4xf32>, vector<18x4xf32> -> vector<18x4xf32>
    %cst_40 = arith.constant dense<0.000000e+00> : vector<6x4xf32>
    %41 = tpu.matmul %31, %40, %cst_40 {dimension_numbers = #tpu.dot_dimension_numbers<[1], [0], [0], [1], [0, 0, 1, 1], [], []>} : vector<6x18xf32>, vector<18x4xf32>, vector<6x4xf32> -> vector<6x4xf32>
    %cst_41 = arith.constant 0.333333343 : f32
    %42 = vector.broadcast %cst_41 : f32 to vector<6x4xf32>
    %43 = arith.mulf %41, %42 : vector<6x4xf32>
    %cst_42 = arith.constant dense<0.000000e+00> : vector<18x4xf32>
    %44 = tpu.matmul %32, %43, %cst_42 {dimension_numbers = #tpu.dot_dimension_numbers<[1], [0], [0], [1], [0, 0, 1, 1], [], []>} : vector<18x6xf32>, vector<6x4xf32>, vector<18x4xf32> -> vector<18x4xf32>
    %45 = arith.subf %40, %44 : vector<18x4xf32>
    %46 = math.exp %45 : vector<18x4xf32>
    %cst_43 = arith.constant dense<0.000000e+00> : vector<6x4xf32>
    %47 = tpu.matmul %31, %46, %cst_43 {dimension_numbers = #tpu.dot_dimension_numbers<[1], [0], [0], [1], [0, 0, 1, 1], [], []>} : vector<6x18xf32>, vector<18x4xf32>, vector<6x4xf32> -> vector<6x4xf32>
    %48 = tpu.reciprocal %47 {approx = true} : vector<6x4xf32> -> vector<6x4xf32>
    %cst_44 = arith.constant dense<0.000000e+00> : vector<18x4xf32>
    %49 = tpu.matmul %32, %48, %cst_44 {dimension_numbers = #tpu.dot_dimension_numbers<[1], [0], [0], [1], [0, 0, 1, 1], [], []>} : vector<18x6xf32>, vector<6x4xf32>, vector<18x4xf32> -> vector<18x4xf32>
    %50 = arith.mulf %46, %49 : vector<18x4xf32>
    %cst_45 = arith.constant dense<0.000000e+00> : vector<18x32xf32>
    %51 = tpu.matmul %50, %3, %cst_45 {dimension_numbers = #tpu.dot_dimension_numbers<[1], [0], [0], [1], [0, 0, 1, 1], [], []>} : vector<18x4xf32>, vector<4x32xf32>, vector<18x32xf32> -> vector<18x32xf32>
    %52 = arith.mulf %51, %28 : vector<18x32xf32>
    %cst_46 = arith.constant dense<0.000000e+00> : vector<6x32xf32>
    %53 = tpu.matmul %31, %52, %cst_46 {dimension_numbers = #tpu.dot_dimension_numbers<[1], [0], [0], [1], [0, 0, 1, 1], [], []>} : vector<6x18xf32>, vector<18x32xf32>, vector<6x32xf32> -> vector<6x32xf32>
    %c0_47 = arith.constant 0 : index
    %c0_48 = arith.constant 0 : index
    %c0_49 = arith.constant 0 : index
    %54 = vector.load %arg2[%c0_47, %c0_48, %c0_49] : memref<1x36x3xf32, #tpu.memory_space<vmem>>, vector<1x36x3xf32>
    %55 = vector.shape_cast %54 : vector<1x36x3xf32> to vector<36x3xf32>
    %c0_50 = arith.constant 0 : index
    %c0_51 = arith.constant 0 : index
    %56 = vector.load %arg16[%c0_50, %c0_51] : memref<32x16xf32, #tpu.memory_space<vmem>>, vector<32x16xf32>
    %c0_52 = arith.constant 0 : index
    %c0_53 = arith.constant 0 : index
    %57 = vector.load %arg17[%c0_52, %c0_53] : memref<32x16xf32, #tpu.memory_space<vmem>>, vector<32x16xf32>
    %c0_54 = arith.constant 0 : index
    %c0_55 = arith.constant 0 : index
    %58 = vector.load %arg18[%c0_54, %c0_55] : memref<32x32xf32, #tpu.memory_space<vmem>>, vector<32x32xf32>
    %c0_56 = arith.constant 0 : index
    %c0_57 = arith.constant 0 : index
    %59 = vector.load %arg19[%c0_56, %c0_57] : memref<32x32xf32, #tpu.memory_space<vmem>>, vector<32x32xf32>
    %c0_58 = arith.constant 0 : index
    %c0_59 = arith.constant 0 : index
    %60 = vector.load %arg20[%c0_58, %c0_59] : memref<3x4xf32, #tpu.memory_space<vmem>>, vector<3x4xf32>
    %c0_60 = arith.constant 0 : index
    %c0_61 = arith.constant 0 : index
    %61 = vector.load %arg9[%c0_60, %c0_61] : memref<36x6xf32, #tpu.memory_space<vmem>>, vector<36x6xf32>
    %c0_62 = arith.constant 0 : index
    %c0_63 = arith.constant 0 : index
    %62 = vector.load %arg10[%c0_62, %c0_63] : memref<36x6xf32, #tpu.memory_space<vmem>>, vector<36x6xf32>
    %c0_64 = arith.constant 0 : index
    %c0_65 = arith.constant 0 : index
    %63 = vector.load %arg11[%c0_64, %c0_65] : memref<6x36xf32, #tpu.memory_space<vmem>>, vector<6x36xf32>
    %cst_66 = arith.constant dense<0.000000e+00> : vector<6x16xf32>
    %64 = tpu.matmul %53, %56, %cst_66 {dimension_numbers = #tpu.dot_dimension_numbers<[1], [0], [0], [1], [0, 0, 1, 1], [], []>} : vector<6x32xf32>, vector<32x16xf32>, vector<6x16xf32> -> vector<6x16xf32>
    %cst_67 = arith.constant dense<0.000000e+00> : vector<6x16xf32>
    %65 = tpu.matmul %53, %57, %cst_67 {dimension_numbers = #tpu.dot_dimension_numbers<[1], [0], [0], [1], [0, 0, 1, 1], [], []>} : vector<6x32xf32>, vector<32x16xf32>, vector<6x16xf32> -> vector<6x16xf32>
    %cst_68 = arith.constant dense<0.000000e+00> : vector<6x32xf32>
    %66 = tpu.matmul %53, %58, %cst_68 {dimension_numbers = #tpu.dot_dimension_numbers<[1], [0], [0], [1], [0, 0, 1, 1], [], []>} : vector<6x32xf32>, vector<32x32xf32>, vector<6x32xf32> -> vector<6x32xf32>
    %cst_69 = arith.constant dense<0.000000e+00> : vector<36x16xf32>
    %67 = tpu.matmul %61, %64, %cst_69 {dimension_numbers = #tpu.dot_dimension_numbers<[1], [0], [0], [1], [0, 0, 1, 1], [], []>} : vector<36x6xf32>, vector<6x16xf32>, vector<36x16xf32> -> vector<36x16xf32>
    %cst_70 = arith.constant dense<0.000000e+00> : vector<36x16xf32>
    %68 = tpu.matmul %62, %65, %cst_70 {dimension_numbers = #tpu.dot_dimension_numbers<[1], [0], [0], [1], [0, 0, 1, 1], [], []>} : vector<36x6xf32>, vector<6x16xf32>, vector<36x16xf32> -> vector<36x16xf32>
    %cst_71 = arith.constant dense<0.000000e+00> : vector<36x4xf32>
    %69 = tpu.matmul %55, %60, %cst_71 {dimension_numbers = #tpu.dot_dimension_numbers<[1], [0], [0], [1], [0, 0, 1, 1], [], []>} : vector<36x3xf32>, vector<3x4xf32>, vector<36x4xf32> -> vector<36x4xf32>
    %70 = arith.mulf %67, %68 : vector<36x16xf32>
    %cst_72 = arith.constant dense<0.000000e+00> : vector<36x4xf32>
    %71 = tpu.matmul %70, %2, %cst_72 {dimension_numbers = #tpu.dot_dimension_numbers<[1], [0], [0], [1], [0, 0, 1, 1], [], []>} : vector<36x16xf32>, vector<16x4xf32>, vector<36x4xf32> -> vector<36x4xf32>
    %72 = arith.addf %71, %69 : vector<36x4xf32>
    %cst_73 = arith.constant dense<0.000000e+00> : vector<6x4xf32>
    %73 = tpu.matmul %63, %72, %cst_73 {dimension_numbers = #tpu.dot_dimension_numbers<[1], [0], [0], [1], [0, 0, 1, 1], [], []>} : vector<6x36xf32>, vector<36x4xf32>, vector<6x4xf32> -> vector<6x4xf32>
    %cst_74 = arith.constant 0.166666672 : f32
    %74 = vector.broadcast %cst_74 : f32 to vector<6x4xf32>
    %75 = arith.mulf %73, %74 : vector<6x4xf32>
    %cst_75 = arith.constant dense<0.000000e+00> : vector<36x4xf32>
    %76 = tpu.matmul %61, %75, %cst_75 {dimension_numbers = #tpu.dot_dimension_numbers<[1], [0], [0], [1], [0, 0, 1, 1], [], []>} : vector<36x6xf32>, vector<6x4xf32>, vector<36x4xf32> -> vector<36x4xf32>
    %77 = arith.subf %72, %76 : vector<36x4xf32>
    %78 = math.exp %77 : vector<36x4xf32>
    %cst_76 = arith.constant dense<0.000000e+00> : vector<6x4xf32>
    %79 = tpu.matmul %63, %78, %cst_76 {dimension_numbers = #tpu.dot_dimension_numbers<[1], [0], [0], [1], [0, 0, 1, 1], [], []>} : vector<6x36xf32>, vector<36x4xf32>, vector<6x4xf32> -> vector<6x4xf32>
    %80 = tpu.reciprocal %79 {approx = true} : vector<6x4xf32> -> vector<6x4xf32>
    %cst_77 = arith.constant dense<0.000000e+00> : vector<36x4xf32>
    %81 = tpu.matmul %61, %80, %cst_77 {dimension_numbers = #tpu.dot_dimension_numbers<[1], [0], [0], [1], [0, 0, 1, 1], [], []>} : vector<36x6xf32>, vector<6x4xf32>, vector<36x4xf32> -> vector<36x4xf32>
    %82 = arith.mulf %78, %81 : vector<36x4xf32>
    %cst_78 = arith.constant dense<0.000000e+00> : vector<36x32xf32>
    %83 = tpu.matmul %82, %3, %cst_78 {dimension_numbers = #tpu.dot_dimension_numbers<[1], [0], [0], [1], [0, 0, 1, 1], [], []>} : vector<36x4xf32>, vector<4x32xf32>, vector<36x32xf32> -> vector<36x32xf32>
    %cst_79 = arith.constant dense<0.000000e+00> : vector<36x32xf32>
    %84 = tpu.matmul %62, %66, %cst_79 {dimension_numbers = #tpu.dot_dimension_numbers<[1], [0], [0], [1], [0, 0, 1, 1], [], []>} : vector<36x6xf32>, vector<6x32xf32>, vector<36x32xf32> -> vector<36x32xf32>
    %85 = arith.mulf %83, %84 : vector<36x32xf32>
    %cst_80 = arith.constant dense<0.000000e+00> : vector<6x32xf32>
    %86 = tpu.matmul %63, %85, %cst_80 {dimension_numbers = #tpu.dot_dimension_numbers<[1], [0], [0], [1], [0, 0, 1, 1], [], []>} : vector<6x36xf32>, vector<36x32xf32>, vector<6x32xf32> -> vector<6x32xf32>
    %cst_81 = arith.constant dense<0.000000e+00> : vector<6x32xf32>
    %87 = tpu.matmul %86, %59, %cst_81 {dimension_numbers = #tpu.dot_dimension_numbers<[1], [0], [0], [1], [0, 0, 1, 1], [], []>} : vector<6x32xf32>, vector<32x32xf32>, vector<6x32xf32> -> vector<6x32xf32>
    %88 = arith.addf %87, %53 : vector<6x32xf32>
    %c0_82 = arith.constant 0 : index
    %c0_83 = arith.constant 0 : index
    %89 = vector.load %arg21[%c0_82, %c0_83] : memref<32x512xf32, #tpu.memory_space<vmem>>, vector<32x512xf32>
    %cst_84 = arith.constant dense<0.000000e+00> : vector<6x512xf32>
    %90 = tpu.matmul %88, %89, %cst_84 {dimension_numbers = #tpu.dot_dimension_numbers<[1], [0], [0], [1], [0, 0, 1, 1], [], []>} : vector<6x32xf32>, vector<32x512xf32>, vector<6x512xf32> -> vector<6x512xf32>
    %c0_85 = arith.constant 0 : index
    %c0_86 = arith.constant 0 : index
    %91 = vector.load %arg22[%c0_85, %c0_86] : memref<1x512xf32, #tpu.memory_space<vmem>>, vector<1x512xf32>
    %92 = vector.broadcast %91 : vector<1x512xf32> to vector<6x512xf32>
    %93 = arith.addf %90, %92 : vector<6x512xf32>
    %cst_87 = arith.constant 0.000000e+00 : f32
    %94 = vector.broadcast %cst_87 : f32 to vector<6x512xf32>
    %95 = arith.maximumf %93, %94 : vector<6x512xf32>
    %c0_88 = arith.constant 0 : index
    %c0_89 = arith.constant 0 : index
    %96 = vector.load %arg23[%c0_88, %c0_89] : memref<512x128xf32, #tpu.memory_space<vmem>>, vector<512x128xf32>
    %cst_90 = arith.constant dense<0.000000e+00> : vector<6x128xf32>
    %97 = tpu.matmul %95, %96, %cst_90 {dimension_numbers = #tpu.dot_dimension_numbers<[1], [0], [0], [1], [0, 0, 1, 1], [], []>} : vector<6x512xf32>, vector<512x128xf32>, vector<6x128xf32> -> vector<6x128xf32>
    %c0_91 = arith.constant 0 : index
    %c0_92 = arith.constant 0 : index
    %98 = vector.load %arg24[%c0_91, %c0_92] : memref<1x128xf32, #tpu.memory_space<vmem>>, vector<1x128xf32>
    %99 = vector.broadcast %98 : vector<1x128xf32> to vector<6x128xf32>
    %100 = arith.addf %97, %99 : vector<6x128xf32>
    %c0_93 = arith.constant 0 : index
    %c0_94 = arith.constant 0 : index
    %c0_95 = arith.constant 0 : index
    %101 = vector.load %arg25[%c0_93, %c0_94, %c0_95] : memref<1x6x128xf32, #tpu.memory_space<vmem>>, vector<1x6x128xf32>
    %102 = vector.shape_cast %101 : vector<1x6x128xf32> to vector<6x128xf32>
    %103 = vector.shape_cast %100 : vector<6x128xf32> to vector<1x6x128xf32>
    tpu.vector_store %arg25[%c0_93, %c0_94, %c0_95], %103 {strides = array<i32>} : memref<1x6x128xf32, #tpu.memory_space<vmem>>, vector<1x6x128xf32>,
    return
  }
  func.func @transform_0(%arg0: i32) -> (i32, i32, i32) {
    %c0_i32 = arith.constant 0 : i32
    %c0_i32_0 = arith.constant 0 : i32
    %c0_i32_1 = arith.constant 0 : i32
    return %arg0, %c0_i32, %c0_i32_0 : i32, i32, i32
  }
  func.func @transform_1(%arg0: i32) -> (i32, i32, i32) {
    %c0_i32 = arith.constant 0 : i32
    %c0_i32_0 = arith.constant 0 : i32
    %c0_i32_1 = arith.constant 0 : i32
    return %arg0, %c0_i32, %c0_i32_0 : i32, i32, i32
  }
  func.func @transform_2(%arg0: i32) -> (i32, i32) {
    %c0_i32 = arith.constant 0 : i32
    %c0_i32_0 = arith.constant 0 : i32
    %c0_i32_1 = arith.constant 0 : i32
    return %c0_i32, %c0_i32_0 : i32, i32
  }
  func.func @transform_3(%arg0: i32) -> (i32, i32) {
    %c0_i32 = arith.constant 0 : i32
    %c0_i32_0 = arith.constant 0 : i32
    %c0_i32_1 = arith.constant 0 : i32
    return %c0_i32, %c0_i32_0 : i32, i32
  }
  func.func @transform_4(%arg0: i32) -> (i32, i32) {
    %c0_i32 = arith.constant 0 : i32
    %c0_i32_0 = arith.constant 0 : i32
    %c0_i32_1 = arith.constant 0 : i32
    return %c0_i32, %c0_i32_0 : i32, i32
  }
  func.func @transform_5(%arg0: i32) -> (i32, i32) {
    %c0_i32 = arith.constant 0 : i32
    %c0_i32_0 = arith.constant 0 : i32
    %c0_i32_1 = arith.constant 0 : i32
    return %c0_i32, %c0_i32_0 : i32, i32
  }
  func.func @transform_6(%arg0: i32) -> (i32, i32) {
    %c0_i32 = arith.constant 0 : i32
    %c0_i32_0 = arith.constant 0 : i32
    %c0_i32_1 = arith.constant 0 : i32
    return %c0_i32, %c0_i32_0 : i32, i32
  }
  func.func @transform_7(%arg0: i32) -> (i32, i32) {
    %c0_i32 = arith.constant 0 : i32
    %c0_i32_0 = arith.constant 0 : i32
    %c0_i32_1 = arith.constant 0 : i32
    return %c0_i32, %c0_i32_0 : i32, i32
  }
  func.func @transform_8(%arg0: i32) -> (i32, i32) {
    %c0_i32 = arith.constant 0 : i32
    %c0_i32_0 = arith.constant 0 : i32
    %c0_i32_1 = arith.constant 0 : i32
    return %c0_i32, %c0_i32_0 : i32, i32
  }
  func.func @transform_9(%arg0: i32) -> (i32, i32) {
    %c0_i32 = arith.constant 0 : i32
    %c0_i32_0 = arith.constant 0 : i32
    %c0_i32_1 = arith.constant 0 : i32
    return %c0_i32, %c0_i32_0 : i32, i32
  }
  func.func @transform_10(%arg0: i32) -> (i32, i32) {
    %c0_i32 = arith.constant 0 : i32
    %c0_i32_0 = arith.constant 0 : i32
    %c0_i32_1 = arith.constant 0 : i32
    return %c0_i32, %c0_i32_0 : i32, i32
  }
  func.func @transform_11(%arg0: i32) -> (i32, i32) {
    %c0_i32 = arith.constant 0 : i32
    %c0_i32_0 = arith.constant 0 : i32
    %c0_i32_1 = arith.constant 0 : i32
    return %c0_i32, %c0_i32_0 : i32, i32
  }
  func.func @transform_12(%arg0: i32) -> (i32, i32) {
    %c0_i32 = arith.constant 0 : i32
    %c0_i32_0 = arith.constant 0 : i32
    %c0_i32_1 = arith.constant 0 : i32
    return %c0_i32, %c0_i32_0 : i32, i32
  }
  func.func @transform_13(%arg0: i32) -> (i32, i32) {
    %c0_i32 = arith.constant 0 : i32
    %c0_i32_0 = arith.constant 0 : i32
    %c0_i32_1 = arith.constant 0 : i32
    return %c0_i32, %c0_i32_0 : i32, i32
  }
  func.func @transform_14(%arg0: i32) -> (i32, i32) {
    %c0_i32 = arith.constant 0 : i32
    %c0_i32_0 = arith.constant 0 : i32
    %c0_i32_1 = arith.constant 0 : i32
    return %c0_i32, %c0_i32_0 : i32, i32
  }
  func.func @transform_15(%arg0: i32) -> (i32, i32) {
    %c0_i32 = arith.constant 0 : i32
    %c0_i32_0 = arith.constant 0 : i32
    %c0_i32_1 = arith.constant 0 : i32
    return %c0_i32, %c0_i32_0 : i32, i32
  }
  func.func @transform_16(%arg0: i32) -> (i32, i32) {
    %c0_i32 = arith.constant 0 : i32
    %c0_i32_0 = arith.constant 0 : i32
    %c0_i32_1 = arith.constant 0 : i32
    return %c0_i32, %c0_i32_0 : i32, i32
  }
  func.func @transform_17(%arg0: i32) -> (i32, i32) {
    %c0_i32 = arith.constant 0 : i32
    %c0_i32_0 = arith.constant 0 : i32
    %c0_i32_1 = arith.constant 0 : i32
    return %c0_i32, %c0_i32_0 : i32, i32
  }
  func.func @transform_18(%arg0: i32) -> (i32, i32) {
    %c0_i32 = arith.constant 0 : i32
    %c0_i32_0 = arith.constant 0 : i32
    %c0_i32_1 = arith.constant 0 : i32
    return %c0_i32, %c0_i32_0 : i32, i32
  }
  func.func @transform_19(%arg0: i32) -> (i32, i32) {
    %c0_i32 = arith.constant 0 : i32
    %c0_i32_0 = arith.constant 0 : i32
    %c0_i32_1 = arith.constant 0 : i32
    return %c0_i32, %c0_i32_0 : i32, i32
  }
  func.func @transform_20(%arg0: i32) -> (i32, i32) {
    %c0_i32 = arith.constant 0 : i32
    %c0_i32_0 = arith.constant 0 : i32
    %c0_i32_1 = arith.constant 0 : i32
    return %c0_i32, %c0_i32_0 : i32, i32
  }
  func.func @transform_21(%arg0: i32) -> (i32, i32) {
    %c0_i32 = arith.constant 0 : i32
    %c0_i32_0 = arith.constant 0 : i32
    %c0_i32_1 = arith.constant 0 : i32
    return %c0_i32, %c0_i32_0 : i32, i32
  }
  func.func @transform_22(%arg0: i32) -> (i32, i32) {
    %c0_i32 = arith.constant 0 : i32
    %c0_i32_0 = arith.constant 0 : i32
    %c0_i32_1 = arith.constant 0 : i32
    return %c0_i32, %c0_i32_0 : i32, i32
  }
  func.func @transform_23(%arg0: i32) -> (i32, i32) {
    %c0_i32 = arith.constant 0 : i32
    %c0_i32_0 = arith.constant 0 : i32
    %c0_i32_1 = arith.constant 0 : i32
    return %c0_i32, %c0_i32_0 : i32, i32
  }
  func.func @transform_24(%arg0: i32) -> (i32, i32, i32) {
    %c0_i32 = arith.constant 0 : i32
    %c0_i32_0 = arith.constant 0 : i32
    %c0_i32_1 = arith.constant 0 : i32
    return %arg0, %c0_i32, %c0_i32_0 : i32, i32, i32
  }
}

</mosaic_0001>

<llo_original>
// kernel: hifanet_forward.1
$region0: #{hifanet_forward.1}
  #allocation0 [shape = 'u32[]', space=smem, size = 0x4, offset = 0x4, fixed_abs, tag = 'smem constant byte address 0x4 - core index']
  #allocation1 [shape = 'u32[144,128]{1,0:T(1,128)}', space=vmem, size = 0x12000, scoped, tag = 'internal scratch']
  %s0 = inlined_call_operand.hbm [shape: f32[2,72,32], index: 0, kind: input, shape index: {}]
  %s1 = inlined_call_operand.vmem [shape: f32[2,36,3], index: 1, kind: input, shape index: {}]
  %s2 = inlined_call_operand.hbm [shape: f32[18,72], index: 2, kind: input, shape index: {}]
  %s3 = inlined_call_operand.hbm [shape: f32[72,18], index: 3, kind: input, shape index: {}]
  %s4 = inlined_call_operand.hbm [shape: f32[6,18], index: 4, kind: input, shape index: {}]
  %s5 = inlined_call_operand.hbm [shape: f32[18,6], index: 5, kind: input, shape index: {}]
  %s6 = inlined_call_operand.hbm [shape: f32[16,4], index: 6, kind: input, shape index: {}]
  %s7 = inlined_call_operand.hbm [shape: f32[4,32], index: 7, kind: input, shape index: {}]
  %s8 = inlined_call_operand.vmem [shape: f32[36,6], index: 8, kind: input, shape index: {}]
  %s9 = inlined_call_operand.vmem [shape: f32[36,6], index: 9, kind: input, shape index: {}]
  %s10 = inlined_call_operand.vmem [shape: f32[6,36], index: 10, kind: input, shape index: {}]
  %s11 = inlined_call_operand.vmem [shape: f32[32,16], index: 11, kind: input, shape index: {}]
  %s12 = inlined_call_operand.vmem [shape: f32[32,16], index: 12, kind: input, shape index: {}]
  %s13 = inlined_call_operand.vmem [shape: f32[32,16], index: 13, kind: input, shape index: {}]
  %s14 = inlined_call_operand.vmem [shape: f32[32,16], index: 14, kind: input, shape index: {}]
  %s15 = inlined_call_operand.vmem [shape: f32[32,16], index: 15, kind: input, shape index: {}]
  %s16 = inlined_call_operand.vmem [shape: f32[32,16], index: 16, kind: input, shape index: {}]
  %s17 = inlined_call_operand.hbm [shape: f32[32,32], index: 17, kind: input, shape index: {}]
  %s18 = inlined_call_operand.hbm [shape: f32[32,32], index: 18, kind: input, shape index: {}]
  %s19 = inlined_call_operand.hbm [shape: f32[3,4], index: 19, kind: input, shape index: {}]
  %s20 = inlined_call_operand.hbm [shape: f32[32,512], index: 20, kind: input, shape index: {}]
  %s21 = inlined_call_operand.hbm [shape: f32[1,512], index: 21, kind: input, shape index: {}]
  %s22 = inlined_call_operand.vmem [shape: f32[512,128], index: 22, kind: input, shape index: {}]
  %s23 = inlined_call_operand.vmem [shape: f32[1,128], index: 23, kind: input, shape index: {}]
  %s24 = inlined_call_operand.vmem [shape: f32[2,6,128], index: 24, kind: output, shape index: {}]
  %s25 = sld [smem:[#allocation0]]
  $region177: #{hifanet_forward.1} parent=0
    _
  %s27 = ssub.s32 1, %s25
  %s28 = scalar_select 0, %s27, %s25
  $region1: #{hifanet_forward.1} parent=0
    #allocation2 [shape = 'u8[73728]{0}', space=vmem, size = 0x12000, scoped, tag = 'input window, operand 0']
    #allocation3 [shape = 's32[2]{0}', space=sflag, size = 0x8, scoped, tag = 'scoped memory for hifanet_forward.1']
    #allocation4 [shape = 'u8[12288]{0}', space=vmem, size = 0x3000, scoped, tag = 'input window, operand 2, single buffered']
    #allocation5 [shape = 's32[1]{0}', space=sflag, size = 0x4, scoped, tag = 'scoped memory for hifanet_forward.1']
    #allocation6 [shape = 'u8[36864]{0}', space=vmem, size = 0x9000, scoped, tag = 'input window, operand 3, single buffered']
    #allocation7 [shape = 'u8[4096]{0}', space=vmem, size = 0x1000, scoped, tag = 'input window, operand 4, single buffered']
    #allocation8 [shape = 's32[1]{0}', space=sflag, size = 0x4, scoped, tag = 'scoped memory for hifanet_forward.1']
    #allocation9 [shape = 'u8[12288]{0}', space=vmem, size = 0x3000, scoped, tag = 'input window, operand 5, single buffered']
    #allocation10 [shape = 'u8[8192]{0}', space=vmem, size = 0x2000, scoped, tag = 'input window, operand 6, single buffered']
    #allocation11 [shape = 's32[1]{0}', space=sflag, size = 0x4, scoped, tag = 'scoped memory for hifanet_forward.1']
    #allocation12 [shape = 'u8[2048]{0}', space=vmem, size = 0x800, scoped, tag = 'input window, operand 7, single buffered']
    #allocation13 [shape = 'u8[16384]{0}', space=vmem, size = 0x4000, scoped, tag = 'input window, operand 17, single buffered']
    #allocation14 [shape = 's32[1]{0}', space=sflag, size = 0x4, scoped, tag = 'scoped memory for hifanet_forward.1']
    #allocation15 [shape = 'u8[16384]{0}', space=vmem, size = 0x4000, scoped, tag = 'input window, operand 18, single buffered']
    #allocation16 [shape = 'u8[2048]{0}', space=vmem, size = 0x800, scoped, tag = 'input window, operand 19, single buffered']
    #allocation17 [shape = 's32[1]{0}', space=sflag, size = 0x4, scoped, tag = 'scoped memory for hifanet_forward.1']
    #allocation18 [shape = 'u8[65536]{0}', space=vmem, size = 0x10000, scoped, tag = 'input window, operand 20, single buffered']
    #allocation19 [shape = 'u8[2048]{0}', space=vmem, size = 0x800, scoped, tag = 'input window, operand 21, single buffered']
    #allocation20 [shape = 's32[1]{0}', space=sflag, size = 0x4, scoped, tag = 'scoped memory for hifanet_forward.1']
    %29 = vsyncpa [#allocation3], 0
    %s30 = scalar_lea.sflag [#allocation3], 1
    %31 = vsyncpa %s30, 0
    %32 = vsyncpa [#allocation5], 0
    %33 = vsyncpa [#allocation8], 0
    %34 = vsyncpa [#allocation11], 0
    %35 = vsyncpa [#allocation14], 0
    %36 = vsyncpa [#allocation17], 0
    %37 = vsyncpa [#allocation20], 0
    loop: start=0, step=1, limit=4
    $region2: #{hifanet_forward.1} parent=1 // loop_pre_header
      _
    $region3: #{hifanet_forward.1} parent=1 // loop_header
      %s39 = sphi 0, %s43
      %p40 = scmp.ge.s32.totalorder %s39, 4
      %s49 = sphi 0, %s51
      %s52 = sphi 0, %s49
      %s53 = sphi 0, %s52
      %s69 = sphi 0, %s53
      %s75 = sphi 0, %s77
      %s78 = sphi 0, %s75
      %s79 = sphi 0, %s78
      %s95 = sphi 0, %s79
      %s99 = sphi 0, %s99
      %s101 = sphi 0, %s99
      %s102 = sphi 0, %s101
      %s116 = sphi 0, %s102
      %s120 = sphi 0, %s120
      %s122 = sphi 0, %s120
      %s123 = sphi 0, %s122
      %s137 = sphi 0, %s123
      %s141 = sphi 0, %s141
      %s143 = sphi 0, %s141
      %s144 = sphi 0, %s143
      %s158 = sphi 0, %s144
      %s162 = sphi 0, %s162
      %s164 = sphi 0, %s162
      %s165 = sphi 0, %s164
      %s179 = sphi 0, %s165
      %s183 = sphi 0, %s183
      %s185 = sphi 0, %s183
      %s186 = sphi 0, %s185
      %s200 = sphi 0, %s186
      %s204 = sphi 0, %s204
      %s206 = sphi 0, %s204
      %s207 = sphi 0, %s206
      %s221 = sphi 0, %s207
      %s225 = sphi 0, %s225
      %s227 = sphi 0, %s225
      %s228 = sphi 0, %s227
      %s242 = sphi 0, %s228
      %s246 = sphi 0, %s246
      %s248 = sphi 0, %s246
      %s249 = sphi 0, %s248
      %s263 = sphi 0, %s249
      %s267 = sphi 0, %s267
      %s269 = sphi 0, %s267
      %s270 = sphi 0, %s269
      %s284 = sphi 0, %s270
      %s288 = sphi 0, %s288
      %s290 = sphi 0, %s288
      %s291 = sphi 0, %s290
      %s305 = sphi 0, %s291
      %s309 = sphi 0, %s309
      %s311 = sphi 0, %s309
      %s312 = sphi 0, %s311
      %s326 = sphi 0, %s312
      %s330 = sphi 0, %s330
      %s332 = sphi 0, %s330
      %s333 = sphi 0, %s332
      %s347 = sphi 0, %s333
      %s351 = sphi 0, %s351
      %s353 = sphi 0, %s351
      %s354 = sphi 0, %s353
      %s368 = sphi 0, %s354
      %s372 = sphi 0, %s372
      %s374 = sphi 0, %s372
      %s375 = sphi 0, %s374
      %s389 = sphi 0, %s375
      %s393 = sphi 0, %s393
      %s395 = sphi 0, %s393
      %s396 = sphi 0, %s395
      %s410 = sphi 0, %s396
      %s414 = sphi 0, %s414
      %s416 = sphi 0, %s414
      %s417 = sphi 0, %s416
      %s431 = sphi 0, %s417
      %s435 = sphi 0, %s435
      %s437 = sphi 0, %s435
      %s438 = sphi 0, %s437
      %s452 = sphi 0, %s438
      %s456 = sphi 0, %s456
      %s458 = sphi 0, %s456
      %s459 = sphi 0, %s458
      %s473 = sphi 0, %s459
      %s477 = sphi 0, %s477
      %s479 = sphi 0, %s477
      %s480 = sphi 0, %s479
      %s494 = sphi 0, %s480
      %s498 = sphi 0, %s498
      %s500 = sphi 0, %s498
      %s501 = sphi 0, %s500
      %s515 = sphi 0, %s501
      %s519 = sphi 0, %s519
      %s521 = sphi 0, %s519
      %s522 = sphi 0, %s521
      %s536 = sphi 0, %s522
      %s540 = sphi 0, %s540
      %s542 = sphi 0, %s540
      %s543 = sphi 0, %s542
      %s557 = sphi 0, %s543
      %s563 = sphi 0, %s565
      %s566 = sphi 0, %s563
      %s567 = sphi 0, %s566
      %s583 = sphi 0, %s567
    $region4: #{hifanet_forward.1} parent=1 // loop_header_branch
      %42 = sbr.rel (%p40) target = $region8
    $region5: #{hifanet_forward.1} parent=1 // loop_body
      %s44 = ssub.s32 %s39, 1
      %s45 = ssub.s32 %s39, 2
      %s46 = sadd.s32 %s39, 1
      %s47 = ssub.s32 %s39, %s46
      %p48 = scmp.eq.s32.totalorder %s47, 0
      %s50 = sadd.s32 %s49, 1
      %s51 = scalar_select %p48, %s49, %s50
      %p54 = pneg %p48
      %p55 = scmp.eq.s32.totalorder %s39, 1
      %p56 = por %p54, %p55
      %p57 = scmp.ne.s32.totalorder %s49, %s52
      %p58 = scmp.eq.s32.totalorder %s39, 0
      %p59 = por %p57, %p58
      %p60 = scmp.ne.s32.totalorder %s49, %s52
      %p61 = scmp.eq.s32.totalorder %s44, 1
      %p62 = por %p60, %p61
      %p63 = scmp.ne.s32.totalorder %s52, %s53
      %p64 = scmp.eq.s32.totalorder %s44, 0
      %p65 = por %p63, %p64
      %p66 = scmp.ne.s32.totalorder %s52, %s53
      %p67 = scmp.eq.s32.totalorder %s45, 1
      %p68 = por %p66, %p67
      %p70 = scmp.ne.s32.totalorder %s53, %s69
      %p71 = scmp.eq.s32.totalorder %s45, 0
      %p72 = por %p70, %p71
      %s73 = ssub.s32 %s39, %s46
      %p74 = scmp.eq.s32.totalorder %s73, 0
      %s76 = sadd.s32 %s75, 1
      %s77 = scalar_select %p74, %s75, %s76
      %p80 = pneg %p74
      %p81 = scmp.eq.s32.totalorder %s39, 1
      %p82 = por %p80, %p81
      %p83 = scmp.ne.s32.totalorder %s75, %s78
      %p84 = scmp.eq.s32.totalorder %s39, 0
      %p85 = por %p83, %p84
      %p86 = scmp.ne.s32.totalorder %s75, %s78
      %p87 = scmp.eq.s32.totalorder %s44, 1
      %p88 = por %p86, %p87
      %p89 = scmp.ne.s32.totalorder %s78, %s79
      %p90 = scmp.eq.s32.totalorder %s44, 0
      %p91 = por %p89, %p90
      %p92 = scmp.ne.s32.totalorder %s78, %s79
      %p93 = scmp.eq.s32.totalorder %s45, 1
      %p94 = por %p92, %p93
      %p96 = scmp.ne.s32.totalorder %s79, %s95
      %p97 = scmp.eq.s32.totalorder %s45, 0
      %p98 = por %p96, %p97
      %s100 = sadd.s32 %s99, 1
      %p103 = scmp.eq.s32.totalorder %s39, 1
      %p104 = scmp.ne.s32.totalorder %s99, %s101
      %p105 = scmp.eq.s32.totalorder %s39, 0
      %p106 = por %p104, %p105
      %p107 = scmp.ne.s32.totalorder %s99, %s101
      %p108 = scmp.eq.s32.totalorder %s44, 1
      %p109 = por %p107, %p108
      %p110 = scmp.ne.s32.totalorder %s101, %s102
      %p111 = scmp.eq.s32.totalorder %s44, 0
      %p112 = por %p110, %p111
      %p113 = scmp.ne.s32.totalorder %s101, %s102
      %p114 = scmp.eq.s32.totalorder %s45, 1
      %p115 = por %p113, %p114
      %p117 = scmp.ne.s32.totalorder %s102, %s116
      %p118 = scmp.eq.s32.totalorder %s45, 0
      %p119 = por %p117, %p118
      %s121 = sadd.s32 %s120, 1
      %p124 = scmp.eq.s32.totalorder %s39, 1
      %p125 = scmp.ne.s32.totalorder %s120, %s122
      %p126 = scmp.eq.s32.totalorder %s39, 0
      %p127 = por %p125, %p126
      %p128 = scmp.ne.s32.totalorder %s120, %s122
      %p129 = scmp.eq.s32.totalorder %s44, 1
      %p130 = por %p128, %p129
      %p131 = scmp.ne.s32.totalorder %s122, %s123
      %p132 = scmp.eq.s32.totalorder %s44, 0
      %p133 = por %p131, %p132
      %p134 = scmp.ne.s32.totalorder %s122, %s123
      %p135 = scmp.eq.s32.totalorder %s45, 1
      %p136 = por %p134, %p135
      %p138 = scmp.ne.s32.totalorder %s123, %s137
      %p139 = scmp.eq.s32.totalorder %s45, 0
      %p140 = por %p138, %p139
      %s142 = sadd.s32 %s141, 1
      %p145 = scmp.eq.s32.totalorder %s39, 1
      %p146 = scmp.ne.s32.totalorder %s141, %s143
      %p147 = scmp.eq.s32.totalorder %s39, 0
      %p148 = por %p146, %p147
      %p149 = scmp.ne.s32.totalorder %s141, %s143
      %p150 = scmp.eq.s32.totalorder %s44, 1
      %p151 = por %p149, %p150
      %p152 = scmp.ne.s32.totalorder %s143, %s144
      %p153 = scmp.eq.s32.totalorder %s44, 0
      %p154 = por %p152, %p153
      %p155 = scmp.ne.s32.totalorder %s143, %s144
      %p156 = scmp.eq.s32.totalorder %s45, 1
      %p157 = por %p155, %p156
      %p159 = scmp.ne.s32.totalorder %s144, %s158
      %p160 = scmp.eq.s32.totalorder %s45, 0
      %p161 = por %p159, %p160
      %s163 = sadd.s32 %s162, 1
      %p166 = scmp.eq.s32.totalorder %s39, 1
      %p167 = scmp.ne.s32.totalorder %s162, %s164
      %p168 = scmp.eq.s32.totalorder %s39, 0
      %p169 = por %p167, %p168
      %p170 = scmp.ne.s32.totalorder %s162, %s164
      %p171 = scmp.eq.s32.totalorder %s44, 1
      %p172 = por %p170, %p171
      %p173 = scmp.ne.s32.totalorder %s164, %s165
      %p174 = scmp.eq.s32.totalorder %s44, 0
      %p175 = por %p173, %p174
      %p176 = scmp.ne.s32.totalorder %s164, %s165
      %p177 = scmp.eq.s32.totalorder %s45, 1
      %p178 = por %p176, %p177
      %p180 = scmp.ne.s32.totalorder %s165, %s179
      %p181 = scmp.eq.s32.totalorder %s45, 0
      %p182 = por %p180, %p181
      %s184 = sadd.s32 %s183, 1
      %p187 = scmp.eq.s32.totalorder %s39, 1
      %p188 = scmp.ne.s32.totalorder %s183, %s185
      %p189 = scmp.eq.s32.totalorder %s39, 0
      %p190 = por %p188, %p189
      %p191 = scmp.ne.s32.totalorder %s183, %s185
      %p192 = scmp.eq.s32.totalorder %s44, 1
      %p193 = por %p191, %p192
      %p194 = scmp.ne.s32.totalorder %s185, %s186
      %p195 = scmp.eq.s32.totalorder %s44, 0
      %p196 = por %p194, %p195
      %p197 = scmp.ne.s32.totalorder %s185, %s186
      %p198 = scmp.eq.s32.totalorder %s45, 1
      %p199 = por %p197, %p198
      %p201 = scmp.ne.s32.totalorder %s186, %s200
      %p202 = scmp.eq.s32.totalorder %s45, 0
      %p203 = por %p201, %p202
      %s205 = sadd.s32 %s204, 1
      %p208 = scmp.eq.s32.totalorder %s39, 1
      %p209 = scmp.ne.s32.totalorder %s204, %s206
      %p210 = scmp.eq.s32.totalorder %s39, 0
      %p211 = por %p209, %p210
      %p212 = scmp.ne.s32.totalorder %s204, %s206
      %p213 = scmp.eq.s32.totalorder %s44, 1
      %p214 = por %p212, %p213
      %p215 = scmp.ne.s32.totalorder %s206, %s207
      %p216 = scmp.eq.s32.totalorder %s44, 0
      %p217 = por %p215, %p216
      %p218 = scmp.ne.s32.totalorder %s206, %s207
      %p219 = scmp.eq.s32.totalorder %s45, 1
      %p220 = por %p218, %p219
      %p222 = scmp.ne.s32.totalorder %s207, %s221
      %p223 = scmp.eq.s32.totalorder %s45, 0
      %p224 = por %p222, %p223
      %s226 = sadd.s32 %s225, 1
      %p229 = scmp.eq.s32.totalorder %s39, 1
      %p230 = scmp.ne.s32.totalorder %s225, %s227
      %p231 = scmp.eq.s32.totalorder %s39, 0
      %p232 = por %p230, %p231
      %p233 = scmp.ne.s32.totalorder %s225, %s227
      %p234 = scmp.eq.s32.totalorder %s44, 1
      %p235 = por %p233, %p234
      %p236 = scmp.ne.s32.totalorder %s227, %s228
      %p237 = scmp.eq.s32.totalorder %s44, 0
      %p238 = por %p236, %p237
      %p239 = scmp.ne.s32.totalorder %s227, %s228
      %p240 = scmp.eq.s32.totalorder %s45, 1
      %p241 = por %p239, %p240
      %p243 = scmp.ne.s32.totalorder %s228, %s242
      %p244 = scmp.eq.s32.totalorder %s45, 0
      %p245 = por %p243, %p244
      %s247 = sadd.s32 %s246, 1
      %p250 = scmp.eq.s32.totalorder %s39, 1
      %p251 = scmp.ne.s32.totalorder %s246, %s248
      %p252 = scmp.eq.s32.totalorder %s39, 0
      %p253 = por %p251, %p252
      %p254 = scmp.ne.s32.totalorder %s246, %s248
      %p255 = scmp.eq.s32.totalorder %s44, 1
      %p256 = por %p254, %p255
      %p257 = scmp.ne.s32.totalorder %s248, %s249
      %p258 = scmp.eq.s32.totalorder %s44, 0
      %p259 = por %p257, %p258
      %p260 = scmp.ne.s32.totalorder %s248, %s249
      %p261 = scmp.eq.s32.totalorder %s45, 1
      %p262 = por %p260, %p261
      %p264 = scmp.ne.s32.totalorder %s249, %s263
      %p265 = scmp.eq.s32.totalorder %s45, 0
      %p266 = por %p264, %p265
      %s268 = sadd.s32 %s267, 1
      %p271 = scmp.eq.s32.totalorder %s39, 1
      %p272 = scmp.ne.s32.totalorder %s267, %s269
      %p273 = scmp.eq.s32.totalorder %s39, 0
      %p274 = por %p272, %p273
      %p275 = scmp.ne.s32.totalorder %s267, %s269
      %p276 = scmp.eq.s32.totalorder %s44, 1
      %p277 = por %p275, %p276
      %p278 = scmp.ne.s32.totalorder %s269, %s270
      %p279 = scmp.eq.s32.totalorder %s44, 0
      %p280 = por %p278, %p279
      %p281 = scmp.ne.s32.totalorder %s269, %s270
      %p282 = scmp.eq.s32.totalorder %s45, 1
      %p283 = por %p281, %p282
      %p285 = scmp.ne.s32.totalorder %s270, %s284
      %p286 = scmp.eq.s32.totalorder %s45, 0
      %p287 = por %p285, %p286
      %s289 = sadd.s32 %s288, 1
      %p292 = scmp.eq.s32.totalorder %s39, 1
      %p293 = scmp.ne.s32.totalorder %s288, %s290
      %p294 = scmp.eq.s32.totalorder %s39, 0
      %p295 = por %p293, %p294
      %p296 = scmp.ne.s32.totalorder %s288, %s290
      %p297 = scmp.eq.s32.totalorder %s44, 1
      %p298 = por %p296, %p297
      %p299 = scmp.ne.s32.totalorder %s290, %s291
      %p300 = scmp.eq.s32.totalorder %s44, 0
      %p301 = por %p299, %p300
      %p302 = scmp.ne.s32.totalorder %s290, %s291
      %p303 = scmp.eq.s32.totalorder %s45, 1
      %p304 = por %p302, %p303
      %p306 = scmp.ne.s32.totalorder %s291, %s305
      %p307 = scmp.eq.s32.totalorder %s45, 0
      %p308 = por %p306, %p307
      %s310 = sadd.s32 %s309, 1
      %p313 = scmp.eq.s32.totalorder %s39, 1
      %p314 = scmp.ne.s32.totalorder %s309, %s311
      %p315 = scmp.eq.s32.totalorder %s39, 0
      %p316 = por %p314, %p315
      %p317 = scmp.ne.s32.totalorder %s309, %s311
      %p318 = scmp.eq.s32.totalorder %s44, 1
      %p319 = por %p317, %p318
      %p320 = scmp.ne.s32.totalorder %s311, %s312
      %p321 = scmp.eq.s32.totalorder %s44, 0
      %p322 = por %p320, %p321
      %p323 = scmp.ne.s32.totalorder %s311, %s312
      %p324 = scmp.eq.s32.totalorder %s45, 1
      %p325 = por %p323, %p324
      %p327 = scmp.ne.s32.totalorder %s312, %s326
      %p328 = scmp.eq.s32.totalorder %s45, 0
      %p329 = por %p327, %p328
      %s331 = sadd.s32 %s330, 1
      %p334 = scmp.eq.s32.totalorder %s39, 1
      %p335 = scmp.ne.s32.totalorder %s330, %s332
      %p336 = scmp.eq.s32.totalorder %s39, 0
      %p337 = por %p335, %p336
      %p338 = scmp.ne.s32.totalorder %s330, %s332
      %p339 = scmp.eq.s32.totalorder %s44, 1
      %p340 = por %p338, %p339
      %p341 = scmp.ne.s32.totalorder %s332, %s333
      %p342 = scmp.eq.s32.totalorder %s44, 0
      %p343 = por %p341, %p342
      %p344 = scmp.ne.s32.totalorder %s332, %s333
      %p345 = scmp.eq.s32.totalorder %s45, 1
      %p346 = por %p344, %p345
      %p348 = scmp.ne.s32.totalorder %s333, %s347
      %p349 = scmp.eq.s32.totalorder %s45, 0
      %p350 = por %p348, %p349
      %s352 = sadd.s32 %s351, 1
      %p355 = scmp.eq.s32.totalorder %s39, 1
      %p356 = scmp.ne.s32.totalorder %s351, %s353
      %p357 = scmp.eq.s32.totalorder %s39, 0
      %p358 = por %p356, %p357
      %p359 = scmp.ne.s32.totalorder %s351, %s353
      %p360 = scmp.eq.s32.totalorder %s44, 1
      %p361 = por %p359, %p360
      %p362 = scmp.ne.s32.totalorder %s353, %s354
      %p363 = scmp.eq.s32.totalorder %s44, 0
      %p364 = por %p362, %p363
      %p365 = scmp.ne.s32.totalorder %s353, %s354
      %p366 = scmp.eq.s32.totalorder %s45, 1
      %p367 = por %p365, %p366
      %p369 = scmp.ne.s32.totalorder %s354, %s368
      %p370 = scmp.eq.s32.totalorder %s45, 0
      %p371 = por %p369, %p370
      %s373 = sadd.s32 %s372, 1
      %p376 = scmp.eq.s32.totalorder %s39, 1
      %p377 = scmp.ne.s32.totalorder %s372, %s374
      %p378 = scmp.eq.s32.totalorder %s39, 0
      %p379 = por %p377, %p378
      %p380 = scmp.ne.s32.totalorder %s372, %s374
      %p381 = scmp.eq.s32.totalorder %s44, 1
      %p382 = por %p380, %p381
      %p383 = scmp.ne.s32.totalorder %s374, %s375
      %p384 = scmp.eq.s32.totalorder %s44, 0
      %p385 = por %p383, %p384
      %p386 = scmp.ne.s32.totalorder %s374, %s375
      %p387 = scmp.eq.s32.totalorder %s45, 1
      %p388 = por %p386, %p387
      %p390 = scmp.ne.s32.totalorder %s375, %s389
      %p391 = scmp.eq.s32.totalorder %s45, 0
      %p392 = por %p390, %p391
      %s394 = sadd.s32 %s393, 1
      %p397 = scmp.eq.s32.totalorder %s39, 1
      %p398 = scmp.ne.s32.totalorder %s393, %s395
      %p399 = scmp.eq.s32.totalorder %s39, 0
      %p400 = por %p398, %p399
      %p401 = scmp.ne.s32.totalorder %s393, %s395
      %p402 = scmp.eq.s32.totalorder %s44, 1
      %p403 = por %p401, %p402
      %p404 = scmp.ne.s32.totalorder %s395, %s396
      %p405 = scmp.eq.s32.totalorder %s44, 0
      %p406 = por %p404, %p405
      %p407 = scmp.ne.s32.totalorder %s395, %s396
      %p408 = scmp.eq.s32.totalorder %s45, 1
      %p409 = por %p407, %p408
      %p411 = scmp.ne.s32.totalorder %s396, %s410
      %p412 = scmp.eq.s32.totalorder %s45, 0
      %p413 = por %p411, %p412
      %s415 = sadd.s32 %s414, 1
      %p418 = scmp.eq.s32.totalorder %s39, 1
      %p419 = scmp.ne.s32.totalorder %s414, %s416
      %p420 = scmp.eq.s32.totalorder %s39, 0
      %p421 = por %p419, %p420
      %p422 = scmp.ne.s32.totalorder %s414, %s416
      %p423 = scmp.eq.s32.totalorder %s44, 1
      %p424 = por %p422, %p423
      %p425 = scmp.ne.s32.totalorder %s416, %s417
      %p426 = scmp.eq.s32.totalorder %s44, 0
      %p427 = por %p425, %p426
      %p428 = scmp.ne.s32.totalorder %s416, %s417
      %p429 = scmp.eq.s32.totalorder %s45, 1
      %p430 = por %p428, %p429
      %p432 = scmp.ne.s32.totalorder %s417, %s431
      %p433 = scmp.eq.s32.totalorder %s45, 0
      %p434 = por %p432, %p433
      %s436 = sadd.s32 %s435, 1
      %p439 = scmp.eq.s32.totalorder %s39, 1
      %p440 = scmp.ne.s32.totalorder %s435, %s437
      %p441 = scmp.eq.s32.totalorder %s39, 0
      %p442 = por %p440, %p441
      %p443 = scmp.ne.s32.totalorder %s435, %s437
      %p444 = scmp.eq.s32.totalorder %s44, 1
      %p445 = por %p443, %p444
      %p446 = scmp.ne.s32.totalorder %s437, %s438
      %p447 = scmp.eq.s32.totalorder %s44, 0
      %p448 = por %p446, %p447
      %p449 = scmp.ne.s32.totalorder %s437, %s438
      %p450 = scmp.eq.s32.totalorder %s45, 1
      %p451 = por %p449, %p450
      %p453 = scmp.ne.s32.totalorder %s438, %s452
      %p454 = scmp.eq.s32.totalorder %s45, 0
      %p455 = por %p453, %p454
      %s457 = sadd.s32 %s456, 1
      %p460 = scmp.eq.s32.totalorder %s39, 1
      %p461 = scmp.ne.s32.totalorder %s456, %s458
      %p462 = scmp.eq.s32.totalorder %s39, 0
      %p463 = por %p461, %p462
      %p464 = scmp.ne.s32.totalorder %s456, %s458
      %p465 = scmp.eq.s32.totalorder %s44, 1
      %p466 = por %p464, %p465
      %p467 = scmp.ne.s32.totalorder %s458, %s459
      %p468 = scmp.eq.s32.totalorder %s44, 0
      %p469 = por %p467, %p468
      %p470 = scmp.ne.s32.totalorder %s458, %s459
      %p471 = scmp.eq.s32.totalorder %s45, 1
      %p472 = por %p470, %p471
      %p474 = scmp.ne.s32.totalorder %s459, %s473
      %p475 = scmp.eq.s32.totalorder %s45, 0
      %p476 = por %p474, %p475
      %s478 = sadd.s32 %s477, 1
      %p481 = scmp.eq.s32.totalorder %s39, 1
      %p482 = scmp.ne.s32.totalorder %s477, %s479
      %p483 = scmp.eq.s32.totalorder %s39, 0
      %p484 = por %p482, %p483
      %p485 = scmp.ne.s32.totalorder %s477, %s479
      %p486 = scmp.eq.s32.totalorder %s44, 1
      %p487 = por %p485, %p486
      %p488 = scmp.ne.s32.totalorder %s479, %s480
      %p489 = scmp.eq.s32.totalorder %s44, 0
      %p490 = por %p488, %p489
      %p491 = scmp.ne.s32.totalorder %s479, %s480
      %p492 = scmp.eq.s32.totalorder %s45, 1
      %p493 = por %p491, %p492
      %p495 = scmp.ne.s32.totalorder %s480, %s494
      %p496 = scmp.eq.s32.totalorder %s45, 0
      %p497 = por %p495, %p496
      %s499 = sadd.s32 %s498, 1
      %p502 = scmp.eq.s32.totalorder %s39, 1
      %p503 = scmp.ne.s32.totalorder %s498, %s500
      %p504 = scmp.eq.s32.totalorder %s39, 0
      %p505 = por %p503, %p504
      %p506 = scmp.ne.s32.totalorder %s498, %s500
      %p507 = scmp.eq.s32.totalorder %s44, 1
      %p508 = por %p506, %p507
      %p509 = scmp.ne.s32.totalorder %s500, %s501
      %p510 = scmp.eq.s32.totalorder %s44, 0
      %p511 = por %p509, %p510
      %p512 = scmp.ne.s32.totalorder %s500, %s501
      %p513 = scmp.eq.s32.totalorder %s45, 1
      %p514 = por %p512, %p513
      %p516 = scmp.ne.s32.totalorder %s501, %s515
      %p517 = scmp.eq.s32.totalorder %s45, 0
      %p518 = por %p516, %p517
      %s520 = sadd.s32 %s519, 1
      %p523 = scmp.eq.s32.totalorder %s39, 1
      %p524 = scmp.ne.s32.totalorder %s519, %s521
      %p525 = scmp.eq.s32.totalorder %s39, 0
      %p526 = por %p524, %p525
      %p527 = scmp.ne.s32.totalorder %s519, %s521
      %p528 = scmp.eq.s32.totalorder %s44, 1
      %p529 = por %p527, %p528
      %p530 = scmp.ne.s32.totalorder %s521, %s522
      %p531 = scmp.eq.s32.totalorder %s44, 0
      %p532 = por %p530, %p531
      %p533 = scmp.ne.s32.totalorder %s521, %s522
      %p534 = scmp.eq.s32.totalorder %s45, 1
      %p535 = por %p533, %p534
      %p537 = scmp.ne.s32.totalorder %s522, %s536
      %p538 = scmp.eq.s32.totalorder %s45, 0
      %p539 = por %p537, %p538
      %s541 = sadd.s32 %s540, 1
      %p544 = scmp.eq.s32.totalorder %s39, 1
      %p545 = scmp.ne.s32.totalorder %s540, %s542
      %p546 = scmp.eq.s32.totalorder %s39, 0
      %p547 = por %p545, %p546
      %p548 = scmp.ne.s32.totalorder %s540, %s542
      %p549 = scmp.eq.s32.totalorder %s44, 1
      %p550 = por %p548, %p549
      %p551 = scmp.ne.s32.totalorder %s542, %s543
      %p552 = scmp.eq.s32.totalorder %s44, 0
      %p553 = por %p551, %p552
      %p554 = scmp.ne.s32.totalorder %s542, %s543
      %p555 = scmp.eq.s32.totalorder %s45, 1
      %p556 = por %p554, %p555
      %p558 = scmp.ne.s32.totalorder %s543, %s557
      %p559 = scmp.eq.s32.totalorder %s45, 0
      %p560 = por %p558, %p559
      %s561 = ssub.s32 %s39, %s46
      %p562 = scmp.eq.s32.totalorder %s561, 0
      %s564 = sadd.s32 %s563, 1
      %s565 = scalar_select %p562, %s563, %s564
      %p568 = pneg %p562
      %p569 = scmp.eq.s32.totalorder %s39, 1
      %p570 = por %p568, %p569
      %p571 = scmp.ne.s32.totalorder %s563, %s566
      %p572 = scmp.eq.s32.totalorder %s39, 0
      %p573 = por %p571, %p572
      %p574 = scmp.ne.s32.totalorder %s563, %s566
      %p575 = scmp.eq.s32.totalorder %s44, 1
      %p576 = por %p574, %p575
      %p577 = scmp.ne.s32.totalorder %s566, %s567
      %p578 = scmp.eq.s32.totalorder %s44, 0
      %p579 = por %p577, %p578
      %p580 = scmp.ne.s32.totalorder %s566, %s567
      %p581 = scmp.eq.s32.totalorder %s45, 1
      %p582 = por %p580, %p581
      %p584 = scmp.ne.s32.totalorder %s567, %s583
      %p585 = scmp.eq.s32.totalorder %s45, 0
      %p586 = por %p584, %p585
      %p587 = scmp.le.s32.totalorder 1, %s39
      %p588 = scmp.lt.s32.totalorder %s39, 3
      %p589 = pnand %p587, %p588
      %p590 = pneg %p589
      // Predicated region
      $region9: #{hifanet_forward.1} parent=5 // pred_check
        _
      $region10: #{hifanet_forward.1} parent=5 // pred_check_branch
        %592 = sbr.rel (%p589) target = $region12
      $region11: #{hifanet_forward.1} parent=5 // pred_region
        %s593 = ssub.s32 %s39, 1
        // Predicated region
        $region13: #{hifanet_forward.1} parent=11 // pred_check
          %p594 = pneg %p112
        $region14: #{hifanet_forward.1} parent=11 // pred_check_branch
          %596 = sbr.rel (%p594) target = $region16
        $region15: #{hifanet_forward.1} parent=11 // pred_region
          %s598 = ssub.s32 384, 384
          %599 = vsyncadd [#allocation5], %s598
          %s600 = sshll.u32 [#allocation4], 4
          %s601 = int_to_ptr.vmem [resolvable:$true] %s600
          %606 = dma.hbm_to_vmem [thread:$0]  %s2, 384, %s601, [#allocation5], 128, 128, 8
        $region16: #{hifanet_forward.1} parent=11 // pred_fallthru
          _
        // Predicated region
        $region17: #{hifanet_forward.1} parent=11 // pred_check
          %p607 = pneg %p133
        $region18: #{hifanet_forward.1} parent=11 // pred_check_branch
          %609 = sbr.rel (%p607) target = $region20
        $region19: #{hifanet_forward.1} parent=11 // pred_region
          %s611 = ssub.s32 1152, 1152
          %612 = vsyncadd [#allocation5], %s611
          %s613 = sshll.u32 [#allocation6], 4
          %s614 = int_to_ptr.vmem [resolvable:$true] %s613
          %619 = dma.hbm_to_vmem [thread:$0]  %s3, 1152, %s614, [#allocation5], 128, 128, 8
        $region20: #{hifanet_forward.1} parent=11 // pred_fallthru
          _
        // Predicated region
        $region21: #{hifanet_forward.1} parent=11 // pred_check
          %p620 = pneg %p154
        $region22: #{hifanet_forward.1} parent=11 // pred_check_branch
          %622 = sbr.rel (%p620) target = $region24
        $region23: #{hifanet_forward.1} parent=11 // pred_region
          %s624 = ssub.s32 128, 128
          %625 = vsyncadd [#allocation8], %s624
          %s627 = sshll.u32 [#allocation7], 4
          %s628 = int_to_ptr.vmem [resolvable:$true] %s627
          %630 = dma.hbm_to_vmem [thread:$0]  %s4, 128, %s628, [#allocation8]
        $region24: #{hifanet_forward.1} parent=11 // pred_fallthru
          _
        // Predicated region
        $region25: #{hifanet_forward.1} parent=11 // pred_check
          %p631 = pneg %p175
        $region26: #{hifanet_forward.1} parent=11 // pred_check_branch
          %633 = sbr.rel (%p631) target = $region28
        $region27: #{hifanet_forward.1} parent=11 // pred_region
          %s635 = ssub.s32 384, 384
          %636 = vsyncadd [#allocation8], %s635
          %s637 = sshll.u32 [#allocation9], 4
          %s638 = int_to_ptr.vmem [resolvable:$true] %s637
          %643 = dma.hbm_to_vmem [thread:$0]  %s5, 384, %s638, [#allocation8], 128, 128, 8
        $region28: #{hifanet_forward.1} parent=11 // pred_fallthru
          _
        // Predicated region
        $region29: #{hifanet_forward.1} parent=11 // pred_check
          %p644 = pneg %p196
        $region30: #{hifanet_forward.1} parent=11 // pred_check_branch
          %646 = sbr.rel (%p644) target = $region32
        $region31: #{hifanet_forward.1} parent=11 // pred_region
          %s648 = ssub.s32 256, 256
          %649 = vsyncadd [#allocation11], %s648
          %s650 = sshll.u32 [#allocation10], 4
          %s651 = int_to_ptr.vmem [resolvable:$true] %s650
          %656 = dma.hbm_to_vmem [thread:$0]  %s6, 256, %s651, [#allocation11], 128, 128, 8
        $region32: #{hifanet_forward.1} parent=11 // pred_fallthru
          _
        // Predicated region
        $region33: #{hifanet_forward.1} parent=11 // pred_check
          %p657 = pneg %p217
        $region34: #{hifanet_forward.1} parent=11 // pred_check_branch
          %659 = sbr.rel (%p657) target = $region36
        $region35: #{hifanet_forward.1} parent=11 // pred_region
          %s661 = ssub.s32 64, 64
          %662 = vsyncadd [#allocation11], %s661
          %s664 = sshll.u32 [#allocation12], 4
          %s665 = int_to_ptr.vmem [resolvable:$true] %s664
          %667 = dma.hbm_to_vmem [thread:$0]  %s7, 64, %s665, [#allocation11]
        $region36: #{hifanet_forward.1} parent=11 // pred_fallthru
          _
        // Predicated region
        $region37: #{hifanet_forward.1} parent=11 // pred_check
          %p668 = pneg %p238
        $region38: #{hifanet_forward.1} parent=11 // pred_check_branch
          %670 = sbr.rel (%p668) target = $region40
        $region39: #{hifanet_forward.1} parent=11 // pred_region
          _
        $region40: #{hifanet_forward.1} parent=11 // pred_fallthru
          _
        // Predicated region
        $region41: #{hifanet_forward.1} parent=11 // pred_check
          %p671 = pneg %p259
        $region42: #{hifanet_forward.1} parent=11 // pred_check_branch
          %673 = sbr.rel (%p671) target = $region44
        $region43: #{hifanet_forward.1} parent=11 // pred_region
          _
        $region44: #{hifanet_forward.1} parent=11 // pred_fallthru
          _
        // Predicated region
        $region45: #{hifanet_forward.1} parent=11 // pred_check
          %p674 = pneg %p280
        $region46: #{hifanet_forward.1} parent=11 // pred_check_branch
          %676 = sbr.rel (%p674) target = $region48
        $region47: #{hifanet_forward.1} parent=11 // pred_region
          _
        $region48: #{hifanet_forward.1} parent=11 // pred_fallthru
          _
        // Predicated region
        $region49: #{hifanet_forward.1} parent=11 // pred_check
          %p677 = pneg %p301
        $region50: #{hifanet_forward.1} parent=11 // pred_check_branch
          %679 = sbr.rel (%p677) target = $region52
        $region51: #{hifanet_forward.1} parent=11 // pred_region
          _
        $region52: #{hifanet_forward.1} parent=11 // pred_fallthru
          _
        // Predicated region
        $region53: #{hifanet_forward.1} parent=11 // pred_check
          %p680 = pneg %p322
        $region54: #{hifanet_forward.1} parent=11 // pred_check_branch
          %682 = sbr.rel (%p680) target = $region56
        $region55: #{hifanet_forward.1} parent=11 // pred_region
          _
        $region56: #{hifanet_forward.1} parent=11 // pred_fallthru
          _
        // Predicated region
        $region57: #{hifanet_forward.1} parent=11 // pred_check
          %p683 = pneg %p343
        $region58: #{hifanet_forward.1} parent=11 // pred_check_branch
          %685 = sbr.rel (%p683) target = $region60
        $region59: #{hifanet_forward.1} parent=11 // pred_region
          _
        $region60: #{hifanet_forward.1} parent=11 // pred_fallthru
          _
        // Predicated region
        $region61: #{hifanet_forward.1} parent=11 // pred_check
          %p686 = pneg %p364
        $region62: #{hifanet_forward.1} parent=11 // pred_check_branch
          %688 = sbr.rel (%p686) target = $region64
        $region63: #{hifanet_forward.1} parent=11 // pred_region
          _
        $region64: #{hifanet_forward.1} parent=11 // pred_fallthru
          _
        // Predicated region
        $region65: #{hifanet_forward.1} parent=11 // pred_check
          %p689 = pneg %p385
        $region66: #{hifanet_forward.1} parent=11 // pred_check_branch
          %691 = sbr.rel (%p689) target = $region68
        $region67: #{hifanet_forward.1} parent=11 // pred_region
          _
        $region68: #{hifanet_forward.1} parent=11 // pred_fallthru
          _
        // Predicated region
        $region69: #{hifanet_forward.1} parent=11 // pred_check
          %p692 = pneg %p406
        $region70: #{hifanet_forward.1} parent=11 // pred_check_branch
          %694 = sbr.rel (%p692) target = $region72
        $region71: #{hifanet_forward.1} parent=11 // pred_region
          _
        $region72: #{hifanet_forward.1} parent=11 // pred_fallthru
          _
        // Predicated region
        $region73: #{hifanet_forward.1} parent=11 // pred_check
          %p695 = pneg %p427
        $region74: #{hifanet_forward.1} parent=11 // pred_check_branch
          %697 = sbr.rel (%p695) target = $region76
        $region75: #{hifanet_forward.1} parent=11 // pred_region
          %s699 = ssub.s32 512, 512
          %700 = vsyncadd [#allocation14], %s699
          %s701 = sshll.u32 [#allocation13], 4
          %s702 = int_to_ptr.vmem [resolvable:$true] %s701
          %707 = dma.hbm_to_vmem [thread:$0]  %s17, 512, %s702, [#allocation14], 128, 128, 8
        $region76: #{hifanet_forward.1} parent=11 // pred_fallthru
          _
        // Predicated region
        $region77: #{hifanet_forward.1} parent=11 // pred_check
          %p708 = pneg %p448
        $region78: #{hifanet_forward.1} parent=11 // pred_check_branch
          %710 = sbr.rel (%p708) target = $region80
        $region79: #{hifanet_forward.1} parent=11 // pred_region
          %s712 = ssub.s32 512, 512
          %713 = vsyncadd [#allocation14], %s712
          %s714 = sshll.u32 [#allocation15], 4
          %s715 = int_to_ptr.vmem [resolvable:$true] %s714
          %720 = dma.hbm_to_vmem [thread:$0]  %s18, 512, %s715, [#allocation14], 128, 128, 8
        $region80: #{hifanet_forward.1} parent=11 // pred_fallthru
          _
        // Predicated region
        $region81: #{hifanet_forward.1} parent=11 // pred_check
          %p721 = pneg %p469
        $region82: #{hifanet_forward.1} parent=11 // pred_check_branch
          %723 = sbr.rel (%p721) target = $region84
        $region83: #{hifanet_forward.1} parent=11 // pred_region
          %s725 = ssub.s32 64, 64
          %726 = vsyncadd [#allocation17], %s725
          %s728 = sshll.u32 [#allocation16], 4
          %s729 = int_to_ptr.vmem [resolvable:$true] %s728
          %731 = dma.hbm_to_vmem [thread:$0]  %s19, 64, %s729, [#allocation17]
        $region84: #{hifanet_forward.1} parent=11 // pred_fallthru
          _
        // Predicated region
        $region85: #{hifanet_forward.1} parent=11 // pred_check
          %p732 = pneg %p490
        $region86: #{hifanet_forward.1} parent=11 // pred_check_branch
          %734 = sbr.rel (%p732) target = $region88
        $region87: #{hifanet_forward.1} parent=11 // pred_region
          %s736 = ssub.s32 2048, 2048
          %737 = vsyncadd [#allocation17], %s736
          %s738 = sshll.u32 [#allocation18], 4
          %s739 = int_to_ptr.vmem [resolvable:$true] %s738
          %744 = dma.hbm_to_vmem [thread:$0]  %s20, 2048, %s739, [#allocation17], 512, 512, 32
        $region88: #{hifanet_forward.1} parent=11 // pred_fallthru
          _
        // Predicated region
        $region89: #{hifanet_forward.1} parent=11 // pred_check
          %p745 = pneg %p511
        $region90: #{hifanet_forward.1} parent=11 // pred_check_branch
          %747 = sbr.rel (%p745) target = $region92
        $region91: #{hifanet_forward.1} parent=11 // pred_region
          %s749 = ssub.s32 64, 64
          %750 = vsyncadd [#allocation20], %s749
          %s752 = sshll.u32 [#allocation19], 4
          %s753 = int_to_ptr.vmem [resolvable:$true] %s752
          %755 = dma.hbm_to_vmem [thread:$0]  %s21, 64, %s753, [#allocation20]
        $region92: #{hifanet_forward.1} parent=11 // pred_fallthru
          _
        // Predicated region
        $region93: #{hifanet_forward.1} parent=11 // pred_check
          %p756 = pneg %p532
        $region94: #{hifanet_forward.1} parent=11 // pred_check_branch
          %758 = sbr.rel (%p756) target = $region96
        $region95: #{hifanet_forward.1} parent=11 // pred_region
          _
        $region96: #{hifanet_forward.1} parent=11 // pred_fallthru
          _
        // Predicated region
        $region97: #{hifanet_forward.1} parent=11 // pred_check
          %p759 = pneg %p553
        $region98: #{hifanet_forward.1} parent=11 // pred_check_branch
          %761 = sbr.rel (%p759) target = $region100
        $region99: #{hifanet_forward.1} parent=11 // pred_region
          _
        $region100: #{hifanet_forward.1} parent=11 // pred_fallthru
          _
      $region12: #{hifanet_forward.1} parent=5 // pred_fallthru
        _
      %p762 = scmp.lt.s32.totalorder %s39, 2
      // Predicated region
      $region101: #{hifanet_forward.1} parent=5 // pred_check
        %p763 = pneg %p762
      $region102: #{hifanet_forward.1} parent=5 // pred_check_branch
        %765 = sbr.rel (%p763) target = $region104
      $region103: #{hifanet_forward.1} parent=5 // pred_region
        // Predicated region
        $region105: #{hifanet_forward.1} parent=103 // pred_check
          %p766 = pneg %p59
        $region106: #{hifanet_forward.1} parent=103 // pred_check_branch
          %768 = sbr.rel (%p766) target = $region108
        $region107: #{hifanet_forward.1} parent=103 // pred_region
          %s769 = sand.u32 %s49, 1
          %s770 = scalar_lea.sflag [#allocation3], %s769
          %s771 = sand.u32 %s49, 1
          %s772 = smul.addr %s771, 72
          %s773 = scalar_lea.vmem [#allocation2], %s772
          %s775 = ssub.s32 1152, 1152
          %776 = vsyncadd %s770, %s775
          %s777 = smul.addr %s39, 9
          %s778 = smul.addr %s777, 128
          %s779 = scalar_lea.hbm %s0, %s778
          %s780 = sshll.u32 %s773, 4
          %s781 = int_to_ptr.vmem [resolvable:$true] %s780
          %786 = dma.hbm_to_vmem [thread:$0]  %s779, 1152, %s781, %s770, 128, 128, 8
        $region108: #{hifanet_forward.1} parent=103 // pred_fallthru
          _
        // Predicated region
        $region109: #{hifanet_forward.1} parent=103 // pred_check
          %p787 = pneg %p85
        $region110: #{hifanet_forward.1} parent=103 // pred_check_branch
          %789 = sbr.rel (%p787) target = $region112
        $region111: #{hifanet_forward.1} parent=103 // pred_region
          %p790 = scmp.lt.s32.totalorder %s39, 1
          %s791 = scalar_select %p790, %s39, 1
          %s792 = smul.addr %s791, 5
          %s793 = smul.addr %s792, 8
          %s794 = scalar_lea.vmem %s1, %s793
        $region112: #{hifanet_forward.1} parent=103 // pred_fallthru
          _
      $region104: #{hifanet_forward.1} parent=5 // pred_fallthru
        _
      %p795 = scmp.le.s32.totalorder 1, %s39
      %p796 = scmp.lt.s32.totalorder %s39, 3
      %p797 = pnand %p795, %p796
      %p798 = pneg %p797
      // Predicated region
      $region113: #{hifanet_forward.1} parent=5 // pred_check
        _
      $region114: #{hifanet_forward.1} parent=5 // pred_check_branch
        %800 = sbr.rel (%p797) target = $region116
      $region115: #{hifanet_forward.1} parent=5 // pred_region
        %s801 = ssub.s32 %s39, 1
        %s802 = sand.u32 %s52, 1
        %s803 = scalar_lea.sflag [#allocation3], %s802
        %s804 = sand.u32 %s52, 1
        %s805 = smul.addr %s804, 72
        %s806 = scalar_lea.vmem [#allocation2], %s805
        // Predicated region
        $region117: #{hifanet_forward.1} parent=115 // pred_check
          %p807 = pneg %p65
        $region118: #{hifanet_forward.1} parent=115 // pred_check_branch
          %809 = sbr.rel (%p807) target = $region120
        $region119: #{hifanet_forward.1} parent=115 // pred_region
          %810 = dma.done %s803, 1152
        $region120: #{hifanet_forward.1} parent=115 // pred_fallthru
          _
        // Predicated region
        $region121: #{hifanet_forward.1} parent=115 // pred_check
          %p811 = pneg %p112
        $region122: #{hifanet_forward.1} parent=115 // pred_check_branch
          %813 = sbr.rel (%p811) target = $region124
        $region123: #{hifanet_forward.1} parent=115 // pred_region
          %814 = dma.done [#allocation5], 384
        $region124: #{hifanet_forward.1} parent=115 // pred_fallthru
          _
        // Predicated region
        $region125: #{hifanet_forward.1} parent=115 // pred_check
          %p815 = pneg %p133
        $region126: #{hifanet_forward.1} parent=115 // pred_check_branch
          %817 = sbr.rel (%p815) target = $region128
        $region127: #{hifanet_forward.1} parent=115 // pred_region
          %818 = dma.done [#allocation5], 1152
        $region128: #{hifanet_forward.1} parent=115 // pred_fallthru
          _
        // Predicated region
        $region129: #{hifanet_forward.1} parent=115 // pred_check
          %p819 = pneg %p154
        $region130: #{hifanet_forward.1} parent=115 // pred_check_branch
          %821 = sbr.rel (%p819) target = $region132
        $region131: #{hifanet_forward.1} parent=115 // pred_region
          %822 = dma.done [#allocation8], 128
        $region132: #{hifanet_forward.1} parent=115 // pred_fallthru
          _
        // Predicated region
        $region133: #{hifanet_forward.1} parent=115 // pred_check
          %p823 = pneg %p175
        $region134: #{hifanet_forward.1} parent=115 // pred_check_branch
          %825 = sbr.rel (%p823) target = $region136
        $region135: #{hifanet_forward.1} parent=115 // pred_region
          %826 = dma.done [#allocation8], 384
        $region136: #{hifanet_forward.1} parent=115 // pred_fallthru
          _
        // Predicated region
        $region137: #{hifanet_forward.1} parent=115 // pred_check
          %p827 = pneg %p196
        $region138: #{hifanet_forward.1} parent=115 // pred_check_branch
          %829 = sbr.rel (%p827) target = $region140
        $region139: #{hifanet_forward.1} parent=115 // pred_region
          %830 = dma.done [#allocation11], 256
        $region140: #{hifanet_forward.1} parent=115 // pred_fallthru
          _
        // Predicated region
        $region141: #{hifanet_forward.1} parent=115 // pred_check
          %p831 = pneg %p217
        $region142: #{hifanet_forward.1} parent=115 // pred_check_branch
          %833 = sbr.rel (%p831) target = $region144
        $region143: #{hifanet_forward.1} parent=115 // pred_region
          %834 = dma.done [#allocation11], 64
        $region144: #{hifanet_forward.1} parent=115 // pred_fallthru
          _
        // Predicated region
        $region145: #{hifanet_forward.1} parent=115 // pred_check
          %p835 = pneg %p427
        $region146: #{hifanet_forward.1} parent=115 // pred_check_branch
          %837 = sbr.rel (%p835) target = $region148
        $region147: #{hifanet_forward.1} parent=115 // pred_region
          %838 = dma.done [#allocation14], 512
        $region148: #{hifanet_forward.1} parent=115 // pred_fallthru
          _
        // Predicated region
        $region149: #{hifanet_forward.1} parent=115 // pred_check
          %p839 = pneg %p448
        $region150: #{hifanet_forward.1} parent=115 // pred_check_branch
          %841 = sbr.rel (%p839) target = $region152
        $region151: #{hifanet_forward.1} parent=115 // pred_region
          %842 = dma.done [#allocation14], 512
        $region152: #{hifanet_forward.1} parent=115 // pred_fallthru
          _
        // Predicated region
        $region153: #{hifanet_forward.1} parent=115 // pred_check
          %p843 = pneg %p469
        $region154: #{hifanet_forward.1} parent=115 // pred_check_branch
          %845 = sbr.rel (%p843) target = $region156
        $region155: #{hifanet_forward.1} parent=115 // pred_region
          %846 = dma.done [#allocation17], 64
        $region156: #{hifanet_forward.1} parent=115 // pred_fallthru
          _
        // Predicated region
        $region157: #{hifanet_forward.1} parent=115 // pred_check
          %p847 = pneg %p490
        $region158: #{hifanet_forward.1} parent=115 // pred_check_branch
          %849 = sbr.rel (%p847) target = $region160
        $region159: #{hifanet_forward.1} parent=115 // pred_region
          %850 = dma.done [#allocation17], 2048
        $region160: #{hifanet_forward.1} parent=115 // pred_fallthru
          _
        // Predicated region
        $region161: #{hifanet_forward.1} parent=115 // pred_check
          %p851 = pneg %p511
        $region162: #{hifanet_forward.1} parent=115 // pred_check_branch
          %853 = sbr.rel (%p851) target = $region164
        $region163: #{hifanet_forward.1} parent=115 // pred_region
          %854 = dma.done [#allocation20], 64
        $region164: #{hifanet_forward.1} parent=115 // pred_fallthru
          _
        %s855 = sand.u32 %s52, 1
        %s856 = scalar_lea.sflag [#allocation3], %s855
        %s857 = sand.u32 %s52, 1
        %s858 = smul.addr %s857, 72
        %s859 = scalar_lea.vmem [#allocation2], %s858
        %p860 = pneg %p65
        %p861 = pneg %p62
        %p862 = scmp.lt.s32.totalorder %s44, 1
        %s863 = scalar_select %p862, %s44, 1
        %s864 = smul.addr %s863, 5
        %s865 = smul.addr %s864, 8
        %s866 = scalar_lea.vmem %s1, %s865
        %p867 = pneg %p91
        %p868 = pneg %p88
        %p869 = pneg %p112
        %p870 = pneg %p109
        %p871 = pneg %p133
        %p872 = pneg %p130
        %p873 = pneg %p154
        %p874 = pneg %p151
        %p875 = pneg %p175
        %p876 = pneg %p172
        %p877 = pneg %p196
        %p878 = pneg %p193
        %p879 = pneg %p217
        %p880 = pneg %p214
        %p881 = pneg %p238
        %p882 = pneg %p235
        %p883 = pneg %p259
        %p884 = pneg %p256
        %p885 = pneg %p280
        %p886 = pneg %p277
        %p887 = pneg %p301
        %p888 = pneg %p298
        %p889 = pneg %p322
        %p890 = pneg %p319
        %p891 = pneg %p343
        %p892 = pneg %p340
        %p893 = pneg %p364
        %p894 = pneg %p361
        %p895 = pneg %p385
        %p896 = pneg %p382
        %p897 = pneg %p406
        %p898 = pneg %p403
        %p899 = pneg %p427
        %p900 = pneg %p424
        %p901 = pneg %p448
        %p902 = pneg %p445
        %p903 = pneg %p469
        %p904 = pneg %p466
        %p905 = pneg %p490
        %p906 = pneg %p487
        %p907 = pneg %p511
        %p908 = pneg %p508
        %p909 = pneg %p532
        %p910 = pneg %p529
        %p911 = pneg %p553
        %p912 = pneg %p550
        %p913 = pneg %p579
        %p914 = pneg %p576
        %p915 = scmp.lt.s32.totalorder %s44, 1
        %s916 = scalar_select %p915, %s44, 1
        %s917 = smul.addr %s916, 8
        %s918 = scalar_lea.vmem %s24, %s917
        %p919 = scmp.lt.s32.totalorder %s44, 1
        %s920 = scalar_select %p919, %s44, 1
        %s921 = smul.addr %s920, 5
        %s922 = smul.addr %s921, 8
        %s923 = scalar_lea.vmem %s1, %s922
        %p924 = scmp.lt.s32.totalorder %s44, 1
        %s925 = scalar_select %p924, %s44, 1
        %s926 = smul.addr %s925, 8
        %s927 = scalar_lea.vmem %s24, %s926
        %v928 = vld [vmem:[%s806] sm:$0xff]
        %v929 = vld [vmem:[%s806 + $0x8] sm:$0xff]
        %v930 = vld [vmem:[%s806 + $0x10] sm:$0xff]
        %v931 = vld [vmem:[%s806 + $0x18] sm:$0xff]
        %v932 = vld [vmem:[%s806 + $0x20] sm:$0xff]
        %v933 = vld [vmem:[%s806 + $0x28] sm:$0xff]
        %v934 = vld [vmem:[%s806 + $0x30] sm:$0xff]
        %v935 = vld [vmem:[%s806 + $0x38] sm:$0xff]
        %v936 = vld [vmem:[%s806 + $0x40] sm:$0xff]
        %v937 = vld [vmem:[#allocation10] sm:$0xff]
        %v938 = vld [vmem:[#allocation10 + $0x8] sm:$0xff]
        %v939 = vld [vmem:[#allocation12] sm:$0xf]
        %v940 = vld [vmem:[%s11] sm:$0xff]
        %v941 = vld [vmem:[%s11 + $0x8] sm:$0xff]
        %v942 = vld [vmem:[%s11 + $0x10] sm:$0xff]
        %v943 = vld [vmem:[%s11 + $0x18] sm:$0xff]
        %v944 = vld [vmem:[%s12] sm:$0xff]
        %v945 = vld [vmem:[%s12 + $0x8] sm:$0xff]
        %v946 = vld [vmem:[%s12 + $0x10] sm:$0xff]
        %v947 = vld [vmem:[%s12 + $0x18] sm:$0xff]
        %v948 = vld [vmem:[#allocation4] sm:$0xff]
        %v949 = vld [vmem:[#allocation4 + $0x8] sm:$0xff]
        %v950 = vld [vmem:[#allocation4 + $0x10] sm:$0x3]
        %v951 = vld [vmem:[#allocation6] sm:$0xff]
        %v952 = vld [vmem:[#allocation6 + $0x8] sm:$0xff]
        %v953 = vld [vmem:[#allocation6 + $0x10] sm:$0xff]
        %v954 = vld [vmem:[#allocation6 + $0x18] sm:$0xff]
        %v955 = vld [vmem:[#allocation6 + $0x20] sm:$0xff]
        %v956 = vld [vmem:[#allocation6 + $0x28] sm:$0xff]
        %v957 = vld [vmem:[#allocation6 + $0x30] sm:$0xff]
        %v958 = vld [vmem:[#allocation6 + $0x38] sm:$0xff]
        %v959 = vld [vmem:[#allocation6 + $0x40] sm:$0xff]
        %vm960 = vcmask 588800
        %v962 = vsel %vm960, %v948, 0
        %v965 = vsel %vm960, %v949, 0
        %v968 = vsel %vm960, %v950, 0
        %970 = vmatprep.subr.mxu0 0.0
        %971 = vmatpush1.msra.mxu0 %v928
        %972 = vmatprep.subr.mxu0 0.0
        %973 = vmatpush1.msra.mxu0 %v929
        %974 = vmatprep.subr.mxu0 0.0
        %975 = vmatpush1.msra.mxu0 %v930
        %976 = vmatprep.subr.mxu0 0.0
        %977 = vmatpush1.msra.mxu0 %v931
        %978 = vmatprep.subr.mxu0 0.0
        %979 = vmatpush1.msra.mxu0 %v932
        %980 = vmatprep.subr.mxu0 0.0
        %981 = vmatpush1.msra.mxu0 %v933
        %982 = vmatprep.subr.mxu0 0.0
        %983 = vmatpush1.msra.mxu0 %v934
        %984 = vmatprep.subr.mxu0 0.0
        %985 = vmatpush1.msra.mxu0 %v935
        %986 = vmatprep.subr.mxu0 0.0
        %987 = vmatpush1.msra.mxu0 %v936
        %988 = vmatprep.subr.mxu0 0.0
        %989 = vmatpush1.msra.mxu0 0.0
        %990 = vmatprep.subr.mxu0 0.0
        %991 = vmatpush1.msra.mxu0 0.0
        %992 = vmatprep.subr.mxu0 0.0
        %993 = vmatpush1.msra.mxu0 0.0
        %994 = vmatprep.subr.mxu0 0.0
        %995 = vmatpush1.msra.mxu0 0.0
        %996 = vmatprep.subr.mxu0 0.0
        %997 = vmatpush1.msra.mxu0 0.0
        %998 = vmatprep.subr.mxu0 0.0
        %999 = vmatpush1.msra.mxu0 0.0
        %1000 = vmatprep.subr.mxu0 0.0
        %1001 = vmatpush1.msra.mxu0 0.0
        %1002 = vmatprep.subr.mxu0 0.0
        %1003 = vmatpush1.msra.mxu0 0.0
        %1004 = vmatprep.subr.mxu0 0.0
        %1005 = vmatpush1.msra.mxu0 0.0
        %1006 = vmatprep.subr.mxu0 0.0
        %1007 = vmatpush1.msra.mxu0 0.0
        %1008 = vmatprep.subr.mxu0 0.0
        %1009 = vmatpush1.msra.mxu0 0.0
        %1010 = vmatprep.subr.mxu0 0.0
        %1011 = vmatpush1.msra.mxu0 0.0
        %1012 = vmatprep.subr.mxu0 0.0
        %1013 = vmatpush1.msra.mxu0 0.0
        %1014 = vmatprep.subr.mxu0 0.0
        %1015 = vmatpush1.msra.mxu0 0.0
        %1016 = vmatprep.subr.mxu0 0.0
        %1017 = vmatpush1.msra.mxu0 0.0
        %1018 = vmatprep.subr.mxu0 0.0
        %1019 = vmatpush1.msra.mxu0 0.0
        %1020 = vmatprep.subr.mxu0 0.0
        %1021 = vmatpush1.msra.mxu0 0.0
        %1022 = vmatprep.subr.mxu0 0.0
        %1023 = vmatpush1.msra.mxu0 0.0
        %1024 = vmatprep.subr.mxu0 0.0
        %1025 = vmatpush1.msra.mxu0 0.0
        %1026 = vmatprep.subr.mxu0 0.0
        %1027 = vmatpush1.msra.mxu0 0.0
        %1028 = vmatprep.subr.mxu0 0.0
        %1029 = vmatpush1.msra.mxu0 0.0
        %1030 = vmatprep.subr.mxu0 0.0
        %1031 = vmatpush1.msra.mxu0 0.0
        %1032 = vmatprep.subr.mxu0 0.0
        %1033 = vmatpush1.msra.mxu0 0.0
        %1034 = vmatprep.mubr.f32.mxu0 0.0
        %1035 = vmatmul.mubr.f32.gmra.mrb[0].mxu0 %v962
        %v1036 = vpop.f32.mrb[0].mxu0
        %v1037 = vadd.f32 0.0, %v1036
        %v1038 = vpop.f32.mrb[0].mxu0
        %1039 = vmatprep.mubr.f32.mxu0 0.0
        %1040 = vmatmul.mubr.f32.gmra.mrb[0].mxu0 %v965
        %v1041 = vpop.f32.mrb[0].mxu0
        %v1042 = vadd.f32 0.0, %v1041
        %v1043 = vpop.f32.mrb[0].mxu0
        %1044 = vmatprep.mubr.f32.mxu0 0.0
        %1045 = vmatmul.mubr.f32.gmra.mrb[0].mxu0 %v968
        %v1046 = vpop.f32.mrb[0].mxu0
        %v1047 = vadd.f32 0.0, %v1046
        %v1048 = vpop.f32.mrb[0].mxu0
        %1049 = vdwg.mxu0
        %v1050 = vmul.f32 %v1037, 0.25
        %v1051 = vmul.f32 %v1042, 0.25
        %v1052 = vmul.f32 %v1047, 0.25
        %vm1053 = vcmask 261120
        %v1055 = vsel %vm1053, %v1050, 0
        %v1058 = vsel %vm1053, %v1051, 0
        %v1061 = vsel %vm1053, %v1052, 0
        %1063 = vmatprep.subr.mxu0 0.0
        %1064 = vmatpush1.msra.mxu0 %v940
        %1065 = vmatprep.subr.mxu0 0.0
        %1066 = vmatpush1.msra.mxu0 %v941
        %1067 = vmatprep.subr.mxu0 0.0
        %1068 = vmatpush1.msra.mxu0 %v942
        %1069 = vmatprep.subr.mxu0 0.0
        %1070 = vmatpush1.msra.mxu0 %v943
        %1071 = vmatprep.subr.mxu0 0.0
        %1072 = vmatpush1.msra.mxu0 0.0
        %1073 = vmatprep.subr.mxu0 0.0
        %1074 = vmatpush1.msra.mxu0 0.0
        %1075 = vmatprep.subr.mxu0 0.0
        %1076 = vmatpush1.msra.mxu0 0.0
        %1077 = vmatprep.subr.mxu0 0.0
        %1078 = vmatpush1.msra.mxu0 0.0
        %1079 = vmatprep.subr.mxu0 0.0
        %1080 = vmatpush1.msra.mxu0 0.0
        %1081 = vmatprep.subr.mxu0 0.0
        %1082 = vmatpush1.msra.mxu0 0.0
        %1083 = vmatprep.subr.mxu0 0.0
        %1084 = vmatpush1.msra.mxu0 0.0
        %1085 = vmatprep.subr.mxu0 0.0
        %1086 = vmatpush1.msra.mxu0 0.0
        %1087 = vmatprep.subr.mxu0 0.0
        %1088 = vmatpush1.msra.mxu0 0.0
        %1089 = vmatprep.subr.mxu0 0.0
        %1090 = vmatpush1.msra.mxu0 0.0
        %1091 = vmatprep.subr.mxu0 0.0
        %1092 = vmatpush1.msra.mxu0 0.0
        %1093 = vmatprep.subr.mxu0 0.0
        %1094 = vmatpush1.msra.mxu0 0.0
        %1095 = vmatprep.subr.mxu0 0.0
        %1096 = vmatpush1.msra.mxu0 0.0
        %1097 = vmatprep.subr.mxu0 0.0
        %1098 = vmatpush1.msra.mxu0 0.0
        %1099 = vmatprep.subr.mxu0 0.0
        %1100 = vmatpush1.msra.mxu0 0.0
        %1101 = vmatprep.subr.mxu0 0.0
        %1102 = vmatpush1.msra.mxu0 0.0
        %1103 = vmatprep.subr.mxu0 0.0
        %1104 = vmatpush1.msra.mxu0 0.0
        %1105 = vmatprep.subr.mxu0 0.0
        %1106 = vmatpush1.msra.mxu0 0.0
        %1107 = vmatprep.subr.mxu0 0.0
        %1108 = vmatpush1.msra.mxu0 0.0
        %1109 = vmatprep.subr.mxu0 0.0
        %1110 = vmatpush1.msra.mxu0 0.0
        %1111 = vmatprep.subr.mxu0 0.0
        %1112 = vmatpush1.msra.mxu0 0.0
        %1113 = vmatprep.subr.mxu0 0.0
        %1114 = vmatpush1.msra.mxu0 0.0
        %1115 = vmatprep.subr.mxu0 0.0
        %1116 = vmatpush1.msra.mxu0 0.0
        %1117 = vmatprep.subr.mxu0 0.0
        %1118 = vmatpush1.msra.mxu0 0.0
        %1119 = vmatprep.subr.mxu0 0.0
        %1120 = vmatpush1.msra.mxu0 0.0
        %1121 = vmatprep.subr.mxu0 0.0
        %1122 = vmatpush1.msra.mxu0 0.0
        %1123 = vmatprep.subr.mxu0 0.0
        %1124 = vmatpush1.msra.mxu0 0.0
        %1125 = vmatprep.subr.mxu0 0.0
        %1126 = vmatpush1.msra.mxu0 0.0
        %1127 = vmatprep.mubr.f32.mxu0 0.0
        %1128 = vmatmul.mubr.f32.gmra.mrb[0].mxu0 %v1055
        %v1129 = vpop.f32.mrb[0].mxu0
        %v1130 = vadd.f32 0.0, %v1129
        %v1131 = vpop.f32.mrb[0].mxu0
        %1132 = vmatprep.mubr.f32.mxu0 0.0
        %1133 = vmatmul.mubr.f32.gmra.mrb[0].mxu0 %v1058
        %v1134 = vpop.f32.mrb[0].mxu0
        %v1135 = vadd.f32 0.0, %v1134
        %v1136 = vpop.f32.mrb[0].mxu0
        %1137 = vmatprep.mubr.f32.mxu0 0.0
        %1138 = vmatmul.mubr.f32.gmra.mrb[0].mxu0 %v1061
        %v1139 = vpop.f32.mrb[0].mxu0
        %v1140 = vadd.f32 0.0, %v1139
        %v1141 = vpop.f32.mrb[0].mxu0
        %1142 = vdwg.mxu0
        %v1144 = vsel %vm1053, %v928, 0
        %v1147 = vsel %vm1053, %v929, 0
        %v1150 = vsel %vm1053, %v930, 0
        %v1153 = vsel %vm1053, %v931, 0
        %v1156 = vsel %vm1053, %v932, 0
        %v1159 = vsel %vm1053, %v933, 0
        %v1162 = vsel %vm1053, %v934, 0
        %v1165 = vsel %vm1053, %v935, 0
        %v1168 = vsel %vm1053, %v936, 0
        %1170 = vmatprep.subr.mxu0 0.0
        %1171 = vmatpush1.msra.mxu0 %v944
        %1172 = vmatprep.subr.mxu0 0.0
        %1173 = vmatpush1.msra.mxu0 %v945
        %1174 = vmatprep.subr.mxu0 0.0
        %1175 = vmatpush1.msra.mxu0 %v946
        %1176 = vmatprep.subr.mxu0 0.0
        %1177 = vmatpush1.msra.mxu0 %v947
        %1178 = vmatprep.subr.mxu0 0.0
        %1179 = vmatpush1.msra.mxu0 0.0
        %1180 = vmatprep.subr.mxu0 0.0
        %1181 = vmatpush1.msra.mxu0 0.0
        %1182 = vmatprep.subr.mxu0 0.0
        %1183 = vmatpush1.msra.mxu0 0.0
        %1184 = vmatprep.subr.mxu0 0.0
        %1185 = vmatpush1.msra.mxu0 0.0
        %1186 = vmatprep.subr.mxu0 0.0
        %1187 = vmatpush1.msra.mxu0 0.0
        %1188 = vmatprep.subr.mxu0 0.0
        %1189 = vmatpush1.msra.mxu0 0.0
        %1190 = vmatprep.subr.mxu0 0.0
        %1191 = vmatpush1.msra.mxu0 0.0
        %1192 = vmatprep.subr.mxu0 0.0
        %1193 = vmatpush1.msra.mxu0 0.0
        %1194 = vmatprep.subr.mxu0 0.0
        %1195 = vmatpush1.msra.mxu0 0.0
        %1196 = vmatprep.subr.mxu0 0.0
        %1197 = vmatpush1.msra.mxu0 0.0
        %1198 = vmatprep.subr.mxu0 0.0
        %1199 = vmatpush1.msra.mxu0 0.0
        %1200 = vmatprep.subr.mxu0 0.0
        %1201 = vmatpush1.msra.mxu0 0.0
        %1202 = vmatprep.subr.mxu0 0.0
        %1203 = vmatpush1.msra.mxu0 0.0
        %1204 = vmatprep.subr.mxu0 0.0
        %1205 = vmatpush1.msra.mxu0 0.0
        %1206 = vmatprep.subr.mxu0 0.0
        %1207 = vmatpush1.msra.mxu0 0.0
        %1208 = vmatprep.subr.mxu0 0.0
        %1209 = vmatpush1.msra.mxu0 0.0
        %1210 = vmatprep.subr.mxu0 0.0
        %1211 = vmatpush1.msra.mxu0 0.0
        %1212 = vmatprep.subr.mxu0 0.0
        %1213 = vmatpush1.msra.mxu0 0.0
        %1214 = vmatprep.subr.mxu0 0.0
        %1215 = vmatpush1.msra.mxu0 0.0
        %1216 = vmatprep.subr.mxu0 0.0
        %1217 = vmatpush1.msra.mxu0 0.0
        %1218 = vmatprep.subr.mxu0 0.0
        %1219 = vmatpush1.msra.mxu0 0.0
        %1220 = vmatprep.subr.mxu0 0.0
        %1221 = vmatpush1.msra.mxu0 0.0
        %1222 = vmatprep.subr.mxu0 0.0
        %1223 = vmatpush1.msra.mxu0 0.0
        %1224 = vmatprep.subr.mxu0 0.0
        %1225 = vmatpush1.msra.mxu0 0.0
        %1226 = vmatprep.subr.mxu0 0.0
        %1227 = vmatpush1.msra.mxu0 0.0
        %1228 = vmatprep.subr.mxu0 0.0
        %1229 = vmatpush1.msra.mxu0 0.0
        %1230 = vmatprep.subr.mxu0 0.0
        %1231 = vmatpush1.msra.mxu0 0.0
        %1232 = vmatprep.subr.mxu0 0.0
        %1233 = vmatpush1.msra.mxu0 0.0
        %1234 = vmatprep.mubr.f32.mxu0 0.0
        %1235 = vmatmul.mubr.f32.gmra.mrb[0].mxu0 %v1144
        %v1236 = vpop.f32.mrb[0].mxu0
        %v1237 = vadd.f32 0.0, %v1236
        %v1238 = vpop.f32.mrb[0].mxu0
        %1239 = vmatprep.mubr.f32.mxu0 0.0
        %1240 = vmatmul.mubr.f32.gmra.mrb[0].mxu0 %v1147
        %v1241 = vpop.f32.mrb[0].mxu0
        %v1242 = vadd.f32 0.0, %v1241
        %v1243 = vpop.f32.mrb[0].mxu0
        %1244 = vmatprep.mubr.f32.mxu0 0.0
        %1245 = vmatmul.mubr.f32.gmra.mrb[0].mxu0 %v1150
        %v1246 = vpop.f32.mrb[0].mxu0
        %v1247 = vadd.f32 0.0, %v1246
        %v1248 = vpop.f32.mrb[0].mxu0
        %1249 = vmatprep.mubr.f32.mxu0 0.0
        %1250 = vmatmul.mubr.f32.gmra.mrb[0].mxu0 %v1153
        %v1251 = vpop.f32.mrb[0].mxu0
        %v1252 = vadd.f32 0.0, %v1251
        %v1253 = vpop.f32.mrb[0].mxu0
        %1254 = vmatprep.mubr.f32.mxu0 0.0
        %1255 = vmatmul.mubr.f32.gmra.mrb[0].mxu0 %v1156
        %v1256 = vpop.f32.mrb[0].mxu0
        %v1257 = vadd.f32 0.0, %v1256
        %v1258 = vpop.f32.mrb[0].mxu0
        %1259 = vmatprep.mubr.f32.mxu0 0.0
        %1260 = vmatmul.mubr.f32.gmra.mrb[0].mxu0 %v1159
        %v1261 = vpop.f32.mrb[0].mxu0
        %v1262 = vadd.f32 0.0, %v1261
        %v1263 = vpop.f32.mrb[0].mxu0
        %1264 = vmatprep.mubr.f32.mxu0 0.0
        %1265 = vmatmul.mubr.f32.gmra.mrb[0].mxu0 %v1162
        %v1266 = vpop.f32.mrb[0].mxu0
        %v1267 = vadd.f32 0.0, %v1266
        %v1268 = vpop.f32.mrb[0].mxu0
        %1269 = vmatprep.mubr.f32.mxu0 0.0
        %1270 = vmatmul.mubr.f32.gmra.mrb[0].mxu0 %v1165
        %v1271 = vpop.f32.mrb[0].mxu0
        %v1272 = vadd.f32 0.0, %v1271
        %v1273 = vpop.f32.mrb[0].mxu0
        %1274 = vmatprep.mubr.f32.mxu0 0.0
        %1275 = vmatmul.mubr.f32.gmra.mrb[0].mxu0 %v1168
        %v1276 = vpop.f32.mrb[0].mxu0
        %v1277 = vadd.f32 0.0, %v1276
        %v1278 = vpop.f32.mrb[0].mxu0
        %1279 = vdwg.mxu0
        %vm1280 = vcmask 146432
        %v1282 = vsel %vm1280, %v951, 0
        %v1285 = vsel %vm1280, %v952, 0
        %v1288 = vsel %vm1280, %v953, 0
        %v1291 = vsel %vm1280, %v954, 0
        %v1294 = vsel %vm1280, %v955, 0
        %v1297 = vsel %vm1280, %v956, 0
        %v1300 = vsel %vm1280, %v957, 0
        %v1303 = vsel %vm1280, %v958, 0
        %v1306 = vsel %vm1280, %v959, 0
        %vm1308 = vcmask 1041408
        %v1310 = vsel %vm1308, %v1140, 0
        %1312 = vmatprep.subr.mxu0 0.0
        %1313 = vmatpush1.msra.mxu0 %v1130
        %1314 = vmatprep.subr.mxu0 0.0
        %1315 = vmatpush1.msra.mxu0 %v1135
        %1316 = vmatprep.subr.mxu0 0.0
        %1317 = vmatpush1.msra.mxu0 %v1310
        %1318 = vmatprep.subr.mxu0 0.0
        %1319 = vmatpush1.msra.mxu0 0.0
        %1320 = vmatprep.subr.mxu0 0.0
        %1321 = vmatpush1.msra.mxu0 0.0
        %1322 = vmatprep.subr.mxu0 0.0
        %1323 = vmatpush1.msra.mxu0 0.0
        %1324 = vmatprep.subr.mxu0 0.0
        %1325 = vmatpush1.msra.mxu0 0.0
        %1326 = vmatprep.subr.mxu0 0.0
        %1327 = vmatpush1.msra.mxu0 0.0
        %1328 = vmatprep.subr.mxu0 0.0
        %1329 = vmatpush1.msra.mxu0 0.0
        %1330 = vmatprep.subr.mxu0 0.0
        %1331 = vmatpush1.msra.mxu0 0.0
        %1332 = vmatprep.subr.mxu0 0.0
        %1333 = vmatpush1.msra.mxu0 0.0
        %1334 = vmatprep.subr.mxu0 0.0
        %1335 = vmatpush1.msra.mxu0 0.0
        %1336 = vmatprep.subr.mxu0 0.0
        %1337 = vmatpush1.msra.mxu0 0.0
        %1338 = vmatprep.subr.mxu0 0.0
        %1339 = vmatpush1.msra.mxu0 0.0
        %1340 = vmatprep.subr.mxu0 0.0
        %1341 = vmatpush1.msra.mxu0 0.0
        %1342 = vmatprep.subr.mxu0 0.0
        %1343 = vmatpush1.msra.mxu0 0.0
        %1344 = vmatprep.subr.mxu0 0.0
        %1345 = vmatpush1.msra.mxu0 0.0
        %1346 = vmatprep.subr.mxu0 0.0
        %1347 = vmatpush1.msra.mxu0 0.0
        %1348 = vmatprep.subr.mxu0 0.0
        %1349 = vmatpush1.msra.mxu0 0.0
        %1350 = vmatprep.subr.mxu0 0.0
        %1351 = vmatpush1.msra.mxu0 0.0
        %1352 = vmatprep.subr.mxu0 0.0
        %1353 = vmatpush1.msra.mxu0 0.0
        %1354 = vmatprep.subr.mxu0 0.0
        %1355 = vmatpush1.msra.mxu0 0.0
        %1356 = vmatprep.subr.mxu0 0.0
        %1357 = vmatpush1.msra.mxu0 0.0
        %1358 = vmatprep.subr.mxu0 0.0
        %1359 = vmatpush1.msra.mxu0 0.0
        %1360 = vmatprep.subr.mxu0 0.0
        %1361 = vmatpush1.msra.mxu0 0.0
        %1362 = vmatprep.subr.mxu0 0.0
        %1363 = vmatpush1.msra.mxu0 0.0
        %1364 = vmatprep.subr.mxu0 0.0
        %1365 = vmatpush1.msra.mxu0 0.0
        %1366 = vmatprep.subr.mxu0 0.0
        %1367 = vmatpush1.msra.mxu0 0.0
        %1368 = vmatprep.subr.mxu0 0.0
        %1369 = vmatpush1.msra.mxu0 0.0
        %1370 = vmatprep.subr.mxu0 0.0
        %1371 = vmatpush1.msra.mxu0 0.0
        %1372 = vmatprep.subr.mxu0 0.0
        %1373 = vmatpush1.msra.mxu0 0.0
        %1374 = vmatprep.subr.mxu0 0.0
        %1375 = vmatpush1.msra.mxu0 0.0
        %1376 = vmatprep.mubr.f32.mxu0 0.0
        %1377 = vmatmul.mubr.f32.gmra.mrb[0].mxu0 %v1282
        %v1378 = vpop.f32.mrb[0].mxu0
        %v1379 = vadd.f32 0.0, %v1378
        %v1380 = vpop.f32.mrb[0].mxu0
        %1381 = vmatprep.mubr.f32.mxu0 0.0
        %1382 = vmatmul.mubr.f32.gmra.mrb[0].mxu0 %v1285
        %v1383 = vpop.f32.mrb[0].mxu0
        %v1384 = vadd.f32 0.0, %v1383
        %v1385 = vpop.f32.mrb[0].mxu0
        %1386 = vmatprep.mubr.f32.mxu0 0.0
        %1387 = vmatmul.mubr.f32.gmra.mrb[0].mxu0 %v1288
        %v1388 = vpop.f32.mrb[0].mxu0
        %v1389 = vadd.f32 0.0, %v1388
        %v1390 = vpop.f32.mrb[0].mxu0
        %1391 = vmatprep.mubr.f32.mxu0 0.0
        %1392 = vmatmul.mubr.f32.gmra.mrb[0].mxu0 %v1291
        %v1393 = vpop.f32.mrb[0].mxu0
        %v1394 = vadd.f32 0.0, %v1393
        %v1395 = vpop.f32.mrb[0].mxu0
        %1396 = vmatprep.mubr.f32.mxu0 0.0
        %1397 = vmatmul.mubr.f32.gmra.mrb[0].mxu0 %v1294
        %v1398 = vpop.f32.mrb[0].mxu0
        %v1399 = vadd.f32 0.0, %v1398
        %v1400 = vpop.f32.mrb[0].mxu0
        %1401 = vmatprep.mubr.f32.mxu0 0.0
        %1402 = vmatmul.mubr.f32.gmra.mrb[0].mxu0 %v1297
        %v1403 = vpop.f32.mrb[0].mxu0
        %v1404 = vadd.f32 0.0, %v1403
        %v1405 = vpop.f32.mrb[0].mxu0
        %1406 = vmatprep.mubr.f32.mxu0 0.0
        %1407 = vmatmul.mubr.f32.gmra.mrb[0].mxu0 %v1300
        %v1408 = vpop.f32.mrb[0].mxu0
        %v1409 = vadd.f32 0.0, %v1408
        %v1410 = vpop.f32.mrb[0].mxu0
        %1411 = vmatprep.mubr.f32.mxu0 0.0
        %1412 = vmatmul.mubr.f32.gmra.mrb[0].mxu0 %v1303
        %v1413 = vpop.f32.mrb[0].mxu0
        %v1414 = vadd.f32 0.0, %v1413
        %v1415 = vpop.f32.mrb[0].mxu0
        %1416 = vmatprep.mubr.f32.mxu0 0.0
        %1417 = vmatmul.mubr.f32.gmra.mrb[0].mxu0 %v1306
        %v1418 = vpop.f32.mrb[0].mxu0
        %v1419 = vadd.f32 0.0, %v1418
        %v1420 = vpop.f32.mrb[0].mxu0
        %1421 = vdwg.mxu0
        %v1422 = vmul.f32 %v1379, %v1237
        %v1423 = vmul.f32 %v1384, %v1242
        %v1424 = vmul.f32 %v1389, %v1247
        %v1425 = vmul.f32 %v1394, %v1252
        %v1426 = vmul.f32 %v1399, %v1257
        %v1427 = vmul.f32 %v1404, %v1262
        %v1428 = vmul.f32 %v1409, %v1267
        %v1429 = vmul.f32 %v1414, %v1272
        %v1430 = vmul.f32 %v1419, %v1277
        %vm1431 = vcmask 130048
        %v1433 = vsel %vm1431, %v1422, 0
        %v1436 = vsel %vm1431, %v1423, 0
        %v1439 = vsel %vm1431, %v1424, 0
        %v1442 = vsel %vm1431, %v1425, 0
        %v1445 = vsel %vm1431, %v1426, 0
        %v1448 = vsel %vm1431, %v1427, 0
        %v1451 = vsel %vm1431, %v1428, 0
        %v1454 = vsel %vm1431, %v1429, 0
        %v1457 = vsel %vm1431, %v1430, 0
        %1459 = vmatprep.subr.mxu0 0.0
        %1460 = vmatpush1.msra.mxu0 %v937
        %1461 = vmatprep.subr.mxu0 0.0
        %1462 = vmatpush1.msra.mxu0 %v938
        %1463 = vmatprep.subr.mxu0 0.0
        %1464 = vmatpush1.msra.mxu0 0.0
        %1465 = vmatprep.subr.mxu0 0.0
        %1466 = vmatpush1.msra.mxu0 0.0
        %1467 = vmatprep.subr.mxu0 0.0
        %1468 = vmatpush1.msra.mxu0 0.0
        %1469 = vmatprep.subr.mxu0 0.0
        %1470 = vmatpush1.msra.mxu0 0.0
        %1471 = vmatprep.subr.mxu0 0.0
        %1472 = vmatpush1.msra.mxu0 0.0
        %1473 = vmatprep.subr.mxu0 0.0
        %1474 = vmatpush1.msra.mxu0 0.0
        %1475 = vmatprep.subr.mxu0 0.0
        %1476 = vmatpush1.msra.mxu0 0.0
        %1477 = vmatprep.subr.mxu0 0.0
        %1478 = vmatpush1.msra.mxu0 0.0
        %1479 = vmatprep.subr.mxu0 0.0
        %1480 = vmatpush1.msra.mxu0 0.0
        %1481 = vmatprep.subr.mxu0 0.0
        %1482 = vmatpush1.msra.mxu0 0.0
        %1483 = vmatprep.subr.mxu0 0.0
        %1484 = vmatpush1.msra.mxu0 0.0
        %1485 = vmatprep.subr.mxu0 0.0
        %1486 = vmatpush1.msra.mxu0 0.0
        %1487 = vmatprep.subr.mxu0 0.0
        %1488 = vmatpush1.msra.mxu0 0.0
        %1489 = vmatprep.subr.mxu0 0.0
        %1490 = vmatpush1.msra.mxu0 0.0
        %1491 = vmatprep.subr.mxu0 0.0
        %1492 = vmatpush1.msra.mxu0 0.0
        %1493 = vmatprep.subr.mxu0 0.0
        %1494 = vmatpush1.msra.mxu0 0.0
        %1495 = vmatprep.subr.mxu0 0.0
        %1496 = vmatpush1.msra.mxu0 0.0
        %1497 = vmatprep.subr.mxu0 0.0
        %1498 = vmatpush1.msra.mxu0 0.0
        %1499 = vmatprep.subr.mxu0 0.0
        %1500 = vmatpush1.msra.mxu0 0.0
        %1501 = vmatprep.subr.mxu0 0.0
        %1502 = vmatpush1.msra.mxu0 0.0
        %1503 = vmatprep.subr.mxu0 0.0
        %1504 = vmatpush1.msra.mxu0 0.0
        %1505 = vmatprep.subr.mxu0 0.0
        %1506 = vmatpush1.msra.mxu0 0.0
        %1507 = vmatprep.subr.mxu0 0.0
        %1508 = vmatpush1.msra.mxu0 0.0
        %1509 = vmatprep.subr.mxu0 0.0
        %1510 = vmatpush1.msra.mxu0 0.0
        %1511 = vmatprep.subr.mxu0 0.0
        %1512 = vmatpush1.msra.mxu0 0.0
        %1513 = vmatprep.subr.mxu0 0.0
        %1514 = vmatpush1.msra.mxu0 0.0
        %1515 = vmatprep.subr.mxu0 0.0
        %1516 = vmatpush1.msra.mxu0 0.0
        %1517 = vmatprep.subr.mxu0 0.0
        %1518 = vmatpush1.msra.mxu0 0.0
        %1519 = vmatprep.subr.mxu0 0.0
        %1520 = vmatpush1.msra.mxu0 0.0
        %1521 = vmatprep.subr.mxu0 0.0
        %1522 = vmatpush1.msra.mxu0 0.0
        %1523 = vmatprep.mubr.f32.mxu0 0.0
        %1524 = vmatmul.mubr.f32.gmra.mrb[0].mxu0 %v1433
        %v1525 = vpop.f32.mrb[0].mxu0
        %v1526 = vadd.f32 0.0, %v1525
        %v1527 = vpop.f32.mrb[0].mxu0
        %1528 = vmatprep.mubr.f32.mxu0 0.0
        %1529 = vmatmul.mubr.f32.gmra.mrb[0].mxu0 %v1436
        %v1530 = vpop.f32.mrb[0].mxu0
        %v1531 = vadd.f32 0.0, %v1530
        %v1532 = vpop.f32.mrb[0].mxu0
        %1533 = vmatprep.mubr.f32.mxu0 0.0
        %1534 = vmatmul.mubr.f32.gmra.mrb[0].mxu0 %v1439
        %v1535 = vpop.f32.mrb[0].mxu0
        %v1536 = vadd.f32 0.0, %v1535
        %v1537 = vpop.f32.mrb[0].mxu0
        %1538 = vmatprep.mubr.f32.mxu0 0.0
        %1539 = vmatmul.mubr.f32.gmra.mrb[0].mxu0 %v1442
        %v1540 = vpop.f32.mrb[0].mxu0
        %v1541 = vadd.f32 0.0, %v1540
        %v1542 = vpop.f32.mrb[0].mxu0
        %1543 = vmatprep.mubr.f32.mxu0 0.0
        %1544 = vmatmul.mubr.f32.gmra.mrb[0].mxu0 %v1445
        %v1545 = vpop.f32.mrb[0].mxu0
        %v1546 = vadd.f32 0.0, %v1545
        %v1547 = vpop.f32.mrb[0].mxu0
        %1548 = vmatprep.mubr.f32.mxu0 0.0
        %1549 = vmatmul.mubr.f32.gmra.mrb[0].mxu0 %v1448
        %v1550 = vpop.f32.mrb[0].mxu0
        %v1551 = vadd.f32 0.0, %v1550
        %v1552 = vpop.f32.mrb[0].mxu0
        %1553 = vmatprep.mubr.f32.mxu0 0.0
        %1554 = vmatmul.mubr.f32.gmra.mrb[0].mxu0 %v1451
        %v1555 = vpop.f32.mrb[0].mxu0
        %v1556 = vadd.f32 0.0, %v1555
        %v1557 = vpop.f32.mrb[0].mxu0
        %1558 = vmatprep.mubr.f32.mxu0 0.0
        %1559 = vmatmul.mubr.f32.gmra.mrb[0].mxu0 %v1454
        %v1560 = vpop.f32.mrb[0].mxu0
        %v1561 = vadd.f32 0.0, %v1560
        %v1562 = vpop.f32.mrb[0].mxu0
        %1563 = vmatprep.mubr.f32.mxu0 0.0
        %1564 = vmatmul.mubr.f32.gmra.mrb[0].mxu0 %v1457
        %v1565 = vpop.f32.mrb[0].mxu0
        %v1566 = vadd.f32 0.0, %v1565
        %v1567 = vpop.f32.mrb[0].mxu0
        %1568 = vdwg.mxu0
        %1569 = vmatprep.subr.mxu0 0.0
        %1570 = vmatpush1.msra.mxu0 %v1526
        %1571 = vmatprep.subr.mxu0 0.0
        %1572 = vmatpush1.msra.mxu0 %v1531
        %1573 = vmatprep.subr.mxu0 0.0
        %1574 = vmatpush1.msra.mxu0 %v1536
        %1575 = vmatprep.subr.mxu0 0.0
        %1576 = vmatpush1.msra.mxu0 %v1541
        %1577 = vmatprep.subr.mxu0 0.0
        %1578 = vmatpush1.msra.mxu0 %v1546
        %1579 = vmatprep.subr.mxu0 0.0
        %1580 = vmatpush1.msra.mxu0 %v1551
        %1581 = vmatprep.subr.mxu0 0.0
        %1582 = vmatpush1.msra.mxu0 %v1556
        %1583 = vmatprep.subr.mxu0 0.0
        %1584 = vmatpush1.msra.mxu0 %v1561
        %1585 = vmatprep.subr.mxu0 0.0
        %1586 = vmatpush1.msra.mxu0 %v1566
        %1587 = vmatprep.subr.mxu0 0.0
        %1588 = vmatpush1.msra.mxu0 0.0
        %1589 = vmatprep.subr.mxu0 0.0
        %1590 = vmatpush1.msra.mxu0 0.0
        %1591 = vmatprep.subr.mxu0 0.0
        %1592 = vmatpush1.msra.mxu0 0.0
        %1593 = vmatprep.subr.mxu0 0.0
        %1594 = vmatpush1.msra.mxu0 0.0
        %1595 = vmatprep.subr.mxu0 0.0
        %1596 = vmatpush1.msra.mxu0 0.0
        %1597 = vmatprep.subr.mxu0 0.0
        %1598 = vmatpush1.msra.mxu0 0.0
        %1599 = vmatprep.subr.mxu0 0.0
        %1600 = vmatpush1.msra.mxu0 0.0
        %1601 = vmatprep.subr.mxu0 0.0
        %1602 = vmatpush1.msra.mxu0 0.0
        %1603 = vmatprep.subr.mxu0 0.0
        %1604 = vmatpush1.msra.mxu0 0.0
        %1605 = vmatprep.subr.mxu0 0.0
        %1606 = vmatpush1.msra.mxu0 0.0
        %1607 = vmatprep.subr.mxu0 0.0
        %1608 = vmatpush1.msra.mxu0 0.0
        %1609 = vmatprep.subr.mxu0 0.0
        %1610 = vmatpush1.msra.mxu0 0.0
        %1611 = vmatprep.subr.mxu0 0.0
        %1612 = vmatpush1.msra.mxu0 0.0
        %1613 = vmatprep.subr.mxu0 0.0
        %1614 = vmatpush1.msra.mxu0 0.0
        %1615 = vmatprep.subr.mxu0 0.0
        %1616 = vmatpush1.msra.mxu0 0.0
        %1617 = vmatprep.subr.mxu0 0.0
        %1618 = vmatpush1.msra.mxu0 0.0
        %1619 = vmatprep.subr.mxu0 0.0
        %1620 = vmatpush1.msra.mxu0 0.0
        %1621 = vmatprep.subr.mxu0 0.0
        %1622 = vmatpush1.msra.mxu0 0.0
        %1623 = vmatprep.subr.mxu0 0.0
        %1624 = vmatpush1.msra.mxu0 0.0
        %1625 = vmatprep.subr.mxu0 0.0
        %1626 = vmatpush1.msra.mxu0 0.0
        %1627 = vmatprep.subr.mxu0 0.0
        %1628 = vmatpush1.msra.mxu0 0.0
        %1629 = vmatprep.subr.mxu0 0.0
        %1630 = vmatpush1.msra.mxu0 0.0
        %1631 = vmatprep.subr.mxu0 0.0
        %1632 = vmatpush1.msra.mxu0 0.0
        %1633 = vmatprep.mubr.f32.mxu0 0.0
        %1634 = vmatmul.mubr.f32.gmra.mrb[0].mxu0 %v962
        %v1635 = vpop.f32.mrb[0].mxu0
        %v1636 = vadd.f32 0.0, %v1635
        %v1637 = vpop.f32.mrb[0].mxu0
        %1638 = vmatprep.mubr.f32.mxu0 0.0
        %1639 = vmatmul.mubr.f32.gmra.mrb[0].mxu0 %v965
        %v1640 = vpop.f32.mrb[0].mxu0
        %v1641 = vadd.f32 0.0, %v1640
        %v1642 = vpop.f32.mrb[0].mxu0
        %1643 = vmatprep.mubr.f32.mxu0 0.0
        %1644 = vmatmul.mubr.f32.gmra.mrb[0].mxu0 %v968
        %v1645 = vpop.f32.mrb[0].mxu0
        %v1646 = vadd.f32 0.0, %v1645
        %v1647 = vpop.f32.mrb[0].mxu0
        %1648 = vdwg.mxu0
        %v1649 = vmul.f32 %v1636, 0.25
        %v1650 = vmul.f32 %v1641, 0.25
        %v1651 = vmul.f32 %v1646, 0.25
        %v1653 = vsel %vm1308, %v1651, 0
        %1655 = vmatprep.subr.mxu0 0.0
        %1656 = vmatpush1.msra.mxu0 %v1649
        %1657 = vmatprep.subr.mxu0 0.0
        %1658 = vmatpush1.msra.mxu0 %v1650
        %1659 = vmatprep.subr.mxu0 0.0
        %1660 = vmatpush1.msra.mxu0 %v1653
        %1661 = vmatprep.subr.mxu0 0.0
        %1662 = vmatpush1.msra.mxu0 0.0
        %1663 = vmatprep.subr.mxu0 0.0
        %1664 = vmatpush1.msra.mxu0 0.0
        %1665 = vmatprep.subr.mxu0 0.0
        %1666 = vmatpush1.msra.mxu0 0.0
        %1667 = vmatprep.subr.mxu0 0.0
        %1668 = vmatpush1.msra.mxu0 0.0
        %1669 = vmatprep.subr.mxu0 0.0
        %1670 = vmatpush1.msra.mxu0 0.0
        %1671 = vmatprep.subr.mxu0 0.0
        %1672 = vmatpush1.msra.mxu0 0.0
        %1673 = vmatprep.subr.mxu0 0.0
        %1674 = vmatpush1.msra.mxu0 0.0
        %1675 = vmatprep.subr.mxu0 0.0
        %1676 = vmatpush1.msra.mxu0 0.0
        %1677 = vmatprep.subr.mxu0 0.0
        %1678 = vmatpush1.msra.mxu0 0.0
        %1679 = vmatprep.subr.mxu0 0.0
        %1680 = vmatpush1.msra.mxu0 0.0
        %1681 = vmatprep.subr.mxu0 0.0
        %1682 = vmatpush1.msra.mxu0 0.0
        %1683 = vmatprep.subr.mxu0 0.0
        %1684 = vmatpush1.msra.mxu0 0.0
        %1685 = vmatprep.subr.mxu0 0.0
        %1686 = vmatpush1.msra.mxu0 0.0
        %1687 = vmatprep.subr.mxu0 0.0
        %1688 = vmatpush1.msra.mxu0 0.0
        %1689 = vmatprep.subr.mxu0 0.0
        %1690 = vmatpush1.msra.mxu0 0.0
        %1691 = vmatprep.subr.mxu0 0.0
        %1692 = vmatpush1.msra.mxu0 0.0
        %1693 = vmatprep.subr.mxu0 0.0
        %1694 = vmatpush1.msra.mxu0 0.0
        %1695 = vmatprep.subr.mxu0 0.0
        %1696 = vmatpush1.msra.mxu0 0.0
        %1697 = vmatprep.subr.mxu0 0.0
        %1698 = vmatpush1.msra.mxu0 0.0
        %1699 = vmatprep.subr.mxu0 0.0
        %1700 = vmatpush1.msra.mxu0 0.0
        %1701 = vmatprep.subr.mxu0 0.0
        %1702 = vmatpush1.msra.mxu0 0.0
        %1703 = vmatprep.subr.mxu0 0.0
        %1704 = vmatpush1.msra.mxu0 0.0
        %1705 = vmatprep.subr.mxu0 0.0
        %1706 = vmatpush1.msra.mxu0 0.0
        %1707 = vmatprep.subr.mxu0 0.0
        %1708 = vmatpush1.msra.mxu0 0.0
        %1709 = vmatprep.subr.mxu0 0.0
        %1710 = vmatpush1.msra.mxu0 0.0
        %1711 = vmatprep.subr.mxu0 0.0
        %1712 = vmatpush1.msra.mxu0 0.0
        %1713 = vmatprep.subr.mxu0 0.0
        %1714 = vmatpush1.msra.mxu0 0.0
        %1715 = vmatprep.subr.mxu0 0.0
        %1716 = vmatpush1.msra.mxu0 0.0
        %1717 = vmatprep.subr.mxu0 0.0
        %1718 = vmatpush1.msra.mxu0 0.0
        %1719 = vmatprep.mubr.f32.mxu0 0.0
        %1720 = vmatmul.mubr.f32.gmra.mrb[0].mxu0 %v1282
        %v1721 = vpop.f32.mrb[0].mxu0
        %v1722 = vadd.f32 0.0, %v1721
        %v1723 = vpop.f32.mrb[0].mxu0
        %1724 = vmatprep.mubr.f32.mxu0 0.0
        %1725 = vmatmul.mubr.f32.gmra.mrb[0].mxu0 %v1285
        %v1726 = vpop.f32.mrb[0].mxu0
        %v1727 = vadd.f32 0.0, %v1726
        %v1728 = vpop.f32.mrb[0].mxu0
        %1729 = vmatprep.mubr.f32.mxu0 0.0
        %1730 = vmatmul.mubr.f32.gmra.mrb[0].mxu0 %v1288
        %v1731 = vpop.f32.mrb[0].mxu0
        %v1732 = vadd.f32 0.0, %v1731
        %v1733 = vpop.f32.mrb[0].mxu0
        %1734 = vmatprep.mubr.f32.mxu0 0.0
        %1735 = vmatmul.mubr.f32.gmra.mrb[0].mxu0 %v1291
        %v1736 = vpop.f32.mrb[0].mxu0
        %v1737 = vadd.f32 0.0, %v1736
        %v1738 = vpop.f32.mrb[0].mxu0
        %1739 = vmatprep.mubr.f32.mxu0 0.0
        %1740 = vmatmul.mubr.f32.gmra.mrb[0].mxu0 %v1294
        %v1741 = vpop.f32.mrb[0].mxu0
        %v1742 = vadd.f32 0.0, %v1741
        %v1743 = vpop.f32.mrb[0].mxu0
        %1744 = vmatprep.mubr.f32.mxu0 0.0
        %1745 = vmatmul.mubr.f32.gmra.mrb[0].mxu0 %v1297
        %v1746 = vpop.f32.mrb[0].mxu0
        %v1747 = vadd.f32 0.0, %v1746
        %v1748 = vpop.f32.mrb[0].mxu0
        %1749 = vmatprep.mubr.f32.mxu0 0.0
        %1750 = vmatmul.mubr.f32.gmra.mrb[0].mxu0 %v1300
        %v1751 = vpop.f32.mrb[0].mxu0
        %v1752 = vadd.f32 0.0, %v1751
        %v1753 = vpop.f32.mrb[0].mxu0
        %1754 = vmatprep.mubr.f32.mxu0 0.0
        %1755 = vmatmul.mubr.f32.gmra.mrb[0].mxu0 %v1303
        %v1756 = vpop.f32.mrb[0].mxu0
        %v1757 = vadd.f32 0.0, %v1756
        %v1758 = vpop.f32.mrb[0].mxu0
        %1759 = vmatprep.mubr.f32.mxu0 0.0
        %1760 = vmatmul.mubr.f32.gmra.mrb[0].mxu0 %v1306
        %v1761 = vpop.f32.mrb[0].mxu0
        %v1762 = vadd.f32 0.0, %v1761
        %v1763 = vpop.f32.mrb[0].mxu0
        %1764 = vdwg.mxu0
        %v1765 = vsub.f32 %v1526, %v1722
        %v1766 = vsub.f32 %v1531, %v1727
        %v1767 = vsub.f32 %v1536, %v1732
        %v1768 = vsub.f32 %v1541, %v1737
        %v1769 = vsub.f32 %v1546, %v1742
        %v1770 = vsub.f32 %v1551, %v1747
        %v1771 = vsub.f32 %v1556, %v1752
        %v1772 = vsub.f32 %v1561, %v1757
        %v1773 = vsub.f32 %v1566, %v1762
        %v1774 = vmul.f32 %v1765, 1.442695
        %v1775 = vpow.pop %v1774
        %v1776 = vmul.f32 %v1766, 1.442695
        %v1777 = vpow.pop %v1776
        %v1778 = vmul.f32 %v1767, 1.442695
        %v1779 = vpow.pop %v1778
        %v1780 = vmul.f32 %v1768, 1.442695
        %v1781 = vpow.pop %v1780
        %v1782 = vmul.f32 %v1769, 1.442695
        %v1783 = vpow.pop %v1782
        %v1784 = vmul.f32 %v1770, 1.442695
        %v1785 = vpow.pop %v1784
        %v1786 = vmul.f32 %v1771, 1.442695
        %v1787 = vpow.pop %v1786
        %v1788 = vmul.f32 %v1772, 1.442695
        %v1789 = vpow.pop %v1788
        %v1790 = vmul.f32 %v1773, 1.442695
        %v1791 = vpow.pop %v1790
        %1792 = vmatprep.subr.mxu0 0.0
        %1793 = vmatpush1.msra.mxu0 %v1775
        %1794 = vmatprep.subr.mxu0 0.0
        %1795 = vmatpush1.msra.mxu0 %v1777
        %1796 = vmatprep.subr.mxu0 0.0
        %1797 = vmatpush1.msra.mxu0 %v1779
        %1798 = vmatprep.subr.mxu0 0.0
        %1799 = vmatpush1.msra.mxu0 %v1781
        %1800 = vmatprep.subr.mxu0 0.0
        %1801 = vmatpush1.msra.mxu0 %v1783
        %1802 = vmatprep.subr.mxu0 0.0
        %1803 = vmatpush1.msra.mxu0 %v1785
        %1804 = vmatprep.subr.mxu0 0.0
        %1805 = vmatpush1.msra.mxu0 %v1787
        %1806 = vmatprep.subr.mxu0 0.0
        %1807 = vmatpush1.msra.mxu0 %v1789
        %1808 = vmatprep.subr.mxu0 0.0
        %1809 = vmatpush1.msra.mxu0 %v1791
        %1810 = vmatprep.subr.mxu0 0.0
        %1811 = vmatpush1.msra.mxu0 0.0
        %1812 = vmatprep.subr.mxu0 0.0
        %1813 = vmatpush1.msra.mxu0 0.0
        %1814 = vmatprep.subr.mxu0 0.0
        %1815 = vmatpush1.msra.mxu0 0.0
        %1816 = vmatprep.subr.mxu0 0.0
        %1817 = vmatpush1.msra.mxu0 0.0
        %1818 = vmatprep.subr.mxu0 0.0
        %1819 = vmatpush1.msra.mxu0 0.0
        %1820 = vmatprep.subr.mxu0 0.0
        %1821 = vmatpush1.msra.mxu0 0.0
        %1822 = vmatprep.subr.mxu0 0.0
        %1823 = vmatpush1.msra.mxu0 0.0
        %1824 = vmatprep.subr.mxu0 0.0
        %1825 = vmatpush1.msra.mxu0 0.0
        %1826 = vmatprep.subr.mxu0 0.0
        %1827 = vmatpush1.msra.mxu0 0.0
        %1828 = vmatprep.subr.mxu0 0.0
        %1829 = vmatpush1.msra.mxu0 0.0
        %1830 = vmatprep.subr.mxu0 0.0
        %1831 = vmatpush1.msra.mxu0 0.0
        %1832 = vmatprep.subr.mxu0 0.0
        %1833 = vmatpush1.msra.mxu0 0.0
        %1834 = vmatprep.subr.mxu0 0.0
        %1835 = vmatpush1.msra.mxu0 0.0
        %1836 = vmatprep.subr.mxu0 0.0
        %1837 = vmatpush1.msra.mxu0 0.0
        %1838 = vmatprep.subr.mxu0 0.0
        %1839 = vmatpush1.msra.mxu0 0.0
        %1840 = vmatprep.subr.mxu0 0.0
        %1841 = vmatpush1.msra.mxu0 0.0
        %1842 = vmatprep.subr.mxu0 0.0
        %1843 = vmatpush1.msra.mxu0 0.0
        %1844 = vmatprep.subr.mxu0 0.0
        %1845 = vmatpush1.msra.mxu0 0.0
        %1846 = vmatprep.subr.mxu0 0.0
        %1847 = vmatpush1.msra.mxu0 0.0
        %1848 = vmatprep.subr.mxu0 0.0
        %1849 = vmatpush1.msra.mxu0 0.0
        %1850 = vmatprep.subr.mxu0 0.0
        %1851 = vmatpush1.msra.mxu0 0.0
        %1852 = vmatprep.subr.mxu0 0.0
        %1853 = vmatpush1.msra.mxu0 0.0
        %1854 = vmatprep.subr.mxu0 0.0
        %1855 = vmatpush1.msra.mxu0 0.0
        %1856 = vmatprep.mubr.f32.mxu0 0.0
        %1857 = vmatmul.mubr.f32.gmra.mrb[0].mxu0 %v962
        %v1858 = vpop.f32.mrb[0].mxu0
        %v1859 = vadd.f32 0.0, %v1858
        %v1860 = vpop.f32.mrb[0].mxu0
        %1861 = vmatprep.mubr.f32.mxu0 0.0
        %1862 = vmatmul.mubr.f32.gmra.mrb[0].mxu0 %v965
        %v1863 = vpop.f32.mrb[0].mxu0
        %v1864 = vadd.f32 0.0, %v1863
        %v1865 = vpop.f32.mrb[0].mxu0
        %1866 = vmatprep.mubr.f32.mxu0 0.0
        %1867 = vmatmul.mubr.f32.gmra.mrb[0].mxu0 %v968
        %v1868 = vpop.f32.mrb[0].mxu0
        %v1869 = vadd.f32 0.0, %v1868
        %v1870 = vpop.f32.mrb[0].mxu0
        %1871 = vdwg.mxu0
        %v1872 = vrcp.pop %v1859
        %v1873 = vrcp.pop %v1864
        %v1874 = vrcp.pop %v1869
        %v1876 = vsel %vm1308, %v1874, 0
        %1878 = vmatprep.subr.mxu0 0.0
        %1879 = vmatpush1.msra.mxu0 %v1872
        %1880 = vmatprep.subr.mxu0 0.0
        %1881 = vmatpush1.msra.mxu0 %v1873
        %1882 = vmatprep.subr.mxu0 0.0
        %1883 = vmatpush1.msra.mxu0 %v1876
        %1884 = vmatprep.subr.mxu0 0.0
        %1885 = vmatpush1.msra.mxu0 0.0
        %1886 = vmatprep.subr.mxu0 0.0
        %1887 = vmatpush1.msra.mxu0 0.0
        %1888 = vmatprep.subr.mxu0 0.0
        %1889 = vmatpush1.msra.mxu0 0.0
        %1890 = vmatprep.subr.mxu0 0.0
        %1891 = vmatpush1.msra.mxu0 0.0
        %1892 = vmatprep.subr.mxu0 0.0
        %1893 = vmatpush1.msra.mxu0 0.0
        %1894 = vmatprep.subr.mxu0 0.0
        %1895 = vmatpush1.msra.mxu0 0.0
        %1896 = vmatprep.subr.mxu0 0.0
        %1897 = vmatpush1.msra.mxu0 0.0
        %1898 = vmatprep.subr.mxu0 0.0
        %1899 = vmatpush1.msra.mxu0 0.0
        %1900 = vmatprep.subr.mxu0 0.0
        %1901 = vmatpush1.msra.mxu0 0.0
        %1902 = vmatprep.subr.mxu0 0.0
        %1903 = vmatpush1.msra.mxu0 0.0
        %1904 = vmatprep.subr.mxu0 0.0
        %1905 = vmatpush1.msra.mxu0 0.0
        %1906 = vmatprep.subr.mxu0 0.0
        %1907 = vmatpush1.msra.mxu0 0.0
        %1908 = vmatprep.subr.mxu0 0.0
        %1909 = vmatpush1.msra.mxu0 0.0
        %1910 = vmatprep.subr.mxu0 0.0
        %1911 = vmatpush1.msra.mxu0 0.0
        %1912 = vmatprep.subr.mxu0 0.0
        %1913 = vmatpush1.msra.mxu0 0.0
        %1914 = vmatprep.subr.mxu0 0.0
        %1915 = vmatpush1.msra.mxu0 0.0
        %1916 = vmatprep.subr.mxu0 0.0
        %1917 = vmatpush1.msra.mxu0 0.0
        %1918 = vmatprep.subr.mxu0 0.0
        %1919 = vmatpush1.msra.mxu0 0.0
        %1920 = vmatprep.subr.mxu0 0.0
        %1921 = vmatpush1.msra.mxu0 0.0
        %1922 = vmatprep.subr.mxu0 0.0
        %1923 = vmatpush1.msra.mxu0 0.0
        %1924 = vmatprep.subr.mxu0 0.0
        %1925 = vmatpush1.msra.mxu0 0.0
        %1926 = vmatprep.subr.mxu0 0.0
        %1927 = vmatpush1.msra.mxu0 0.0
        %1928 = vmatprep.subr.mxu0 0.0
        %1929 = vmatpush1.msra.mxu0 0.0
        %1930 = vmatprep.subr.mxu0 0.0
        %1931 = vmatpush1.msra.mxu0 0.0
        %1932 = vmatprep.subr.mxu0 0.0
        %1933 = vmatpush1.msra.mxu0 0.0
        %1934 = vmatprep.subr.mxu0 0.0
        %1935 = vmatpush1.msra.mxu0 0.0
        %1936 = vmatprep.subr.mxu0 0.0
        %1937 = vmatpush1.msra.mxu0 0.0
        %1938 = vmatprep.subr.mxu0 0.0
        %1939 = vmatpush1.msra.mxu0 0.0
        %1940 = vmatprep.subr.mxu0 0.0
        %1941 = vmatpush1.msra.mxu0 0.0
        %1942 = vmatprep.mubr.f32.mxu0 0.0
        %1943 = vmatmul.mubr.f32.gmra.mrb[0].mxu0 %v1282
        %v1944 = vpop.f32.mrb[0].mxu0
        %v1945 = vadd.f32 0.0, %v1944
        %v1946 = vpop.f32.mrb[0].mxu0
        %1947 = vmatprep.mubr.f32.mxu0 0.0
        %1948 = vmatmul.mubr.f32.gmra.mrb[0].mxu0 %v1285
        %v1949 = vpop.f32.mrb[0].mxu0
        %v1950 = vadd.f32 0.0, %v1949
        %v1951 = vpop.f32.mrb[0].mxu0
        %1952 = vmatprep.mubr.f32.mxu0 0.0
        %1953 = vmatmul.mubr.f32.gmra.mrb[0].mxu0 %v1288
        %v1954 = vpop.f32.mrb[0].mxu0
        %v1955 = vadd.f32 0.0, %v1954
        %v1956 = vpop.f32.mrb[0].mxu0
        %1957 = vmatprep.mubr.f32.mxu0 0.0
        %1958 = vmatmul.mubr.f32.gmra.mrb[0].mxu0 %v1291
        %v1959 = vpop.f32.mrb[0].mxu0
        %v1960 = vadd.f32 0.0, %v1959
        %v1961 = vpop.f32.mrb[0].mxu0
        %1962 = vmatprep.mubr.f32.mxu0 0.0
        %1963 = vmatmul.mubr.f32.gmra.mrb[0].mxu0 %v1294
        %v1964 = vpop.f32.mrb[0].mxu0
        %v1965 = vadd.f32 0.0, %v1964
        %v1966 = vpop.f32.mrb[0].mxu0
        %1967 = vmatprep.mubr.f32.mxu0 0.0
        %1968 = vmatmul.mubr.f32.gmra.mrb[0].mxu0 %v1297
        %v1969 = vpop.f32.mrb[0].mxu0
        %v1970 = vadd.f32 0.0, %v1969
        %v1971 = vpop.f32.mrb[0].mxu0
        %1972 = vmatprep.mubr.f32.mxu0 0.0
        %1973 = vmatmul.mubr.f32.gmra.mrb[0].mxu0 %v1300
        %v1974 = vpop.f32.mrb[0].mxu0
        %v1975 = vadd.f32 0.0, %v1974
        %v1976 = vpop.f32.mrb[0].mxu0
        %1977 = vmatprep.mubr.f32.mxu0 0.0
        %1978 = vmatmul.mubr.f32.gmra.mrb[0].mxu0 %v1303
        %v1979 = vpop.f32.mrb[0].mxu0
        %v1980 = vadd.f32 0.0, %v1979
        %v1981 = vpop.f32.mrb[0].mxu0
        %1982 = vmatprep.mubr.f32.mxu0 0.0
        %1983 = vmatmul.mubr.f32.gmra.mrb[0].mxu0 %v1306
        %v1984 = vpop.f32.mrb[0].mxu0
        %v1985 = vadd.f32 0.0, %v1984
        %v1986 = vpop.f32.mrb[0].mxu0
        %1987 = vdwg.mxu0
        %v1988 = vmul.f32 %v1775, %v1945
        %v1989 = vmul.f32 %v1777, %v1950
        %v1990 = vmul.f32 %v1779, %v1955
        %v1991 = vmul.f32 %v1781, %v1960
        %v1992 = vmul.f32 %v1783, %v1965
        %v1993 = vmul.f32 %v1785, %v1970
        %v1994 = vmul.f32 %v1787, %v1975
        %v1995 = vmul.f32 %v1789, %v1980
        %v1996 = vmul.f32 %v1791, %v1985
        %vm1997 = vcmask 31744
        %v1999 = vsel %vm1997, %v1988, 0
        %v2002 = vsel %vm1997, %v1989, 0
        %v2005 = vsel %vm1997, %v1990, 0
        %v2008 = vsel %vm1997, %v1991, 0
        %v2011 = vsel %vm1997, %v1992, 0
        %v2014 = vsel %vm1997, %v1993, 0
        %v2017 = vsel %vm1997, %v1994, 0
        %v2020 = vsel %vm1997, %v1995, 0
        %v2023 = vsel %vm1997, %v1996, 0
        %vm2025 = vcmask 1043456
        %v2027 = vsel %vm2025, %v939, 0
        %2029 = vmatprep.subr.mxu0 0.0
        %2030 = vmatpush1.msra.mxu0 %v2027
        %2031 = vmatprep.subr.mxu0 0.0
        %2032 = vmatpush1.msra.mxu0 0.0
        %2033 = vmatprep.subr.mxu0 0.0
        %2034 = vmatpush1.msra.mxu0 0.0
        %2035 = vmatprep.subr.mxu0 0.0
        %2036 = vmatpush1.msra.mxu0 0.0
        %2037 = vmatprep.subr.mxu0 0.0
        %2038 = vmatpush1.msra.mxu0 0.0
        %2039 = vmatprep.subr.mxu0 0.0
        %2040 = vmatpush1.msra.mxu0 0.0
        %2041 = vmatprep.subr.mxu0 0.0
        %2042 = vmatpush1.msra.mxu0 0.0
        %2043 = vmatprep.subr.mxu0 0.0
        %2044 = vmatpush1.msra.mxu0 0.0
        %2045 = vmatprep.subr.mxu0 0.0
        %2046 = vmatpush1.msra.mxu0 0.0
        %2047 = vmatprep.subr.mxu0 0.0
        %2048 = vmatpush1.msra.mxu0 0.0
        %2049 = vmatprep.subr.mxu0 0.0
        %2050 = vmatpush1.msra.mxu0 0.0
        %2051 = vmatprep.subr.mxu0 0.0
        %2052 = vmatpush1.msra.mxu0 0.0
        %2053 = vmatprep.subr.mxu0 0.0
        %2054 = vmatpush1.msra.mxu0 0.0
        %2055 = vmatprep.subr.mxu0 0.0
        %2056 = vmatpush1.msra.mxu0 0.0
        %2057 = vmatprep.subr.mxu0 0.0
        %2058 = vmatpush1.msra.mxu0 0.0
        %2059 = vmatprep.subr.mxu0 0.0
        %2060 = vmatpush1.msra.mxu0 0.0
        %2061 = vmatprep.subr.mxu0 0.0
        %2062 = vmatpush1.msra.mxu0 0.0
        %2063 = vmatprep.subr.mxu0 0.0
        %2064 = vmatpush1.msra.mxu0 0.0
        %2065 = vmatprep.subr.mxu0 0.0
        %2066 = vmatpush1.msra.mxu0 0.0
        %2067 = vmatprep.subr.mxu0 0.0
        %2068 = vmatpush1.msra.mxu0 0.0
        %2069 = vmatprep.subr.mxu0 0.0
        %2070 = vmatpush1.msra.mxu0 0.0
        %2071 = vmatprep.subr.mxu0 0.0
        %2072 = vmatpush1.msra.mxu0 0.0
        %2073 = vmatprep.subr.mxu0 0.0
        %2074 = vmatpush1.msra.mxu0 0.0
        %2075 = vmatprep.subr.mxu0 0.0
        %2076 = vmatpush1.msra.mxu0 0.0
        %2077 = vmatprep.subr.mxu0 0.0
        %2078 = vmatpush1.msra.mxu0 0.0
        %2079 = vmatprep.subr.mxu0 0.0
        %2080 = vmatpush1.msra.mxu0 0.0
        %2081 = vmatprep.subr.mxu0 0.0
        %2082 = vmatpush1.msra.mxu0 0.0
        %2083 = vmatprep.subr.mxu0 0.0
        %2084 = vmatpush1.msra.mxu0 0.0
        %2085 = vmatprep.subr.mxu0 0.0
        %2086 = vmatpush1.msra.mxu0 0.0
        %2087 = vmatprep.subr.mxu0 0.0
        %2088 = vmatpush1.msra.mxu0 0.0
        %2089 = vmatprep.subr.mxu0 0.0
        %2090 = vmatpush1.msra.mxu0 0.0
        %2091 = vmatprep.subr.mxu0 0.0
        %2092 = vmatpush1.msra.mxu0 0.0
        %2093 = vmatprep.mubr.f32.mxu0 0.0
        %2094 = vmatmul.mubr.f32.gmra.mrb[0].mxu0 %v1999
        %v2095 = vpop.f32.mrb[0].mxu0
        %v2096 = vadd.f32 0.0, %v2095
        %v2097 = vpop.f32.mrb[0].mxu0
        %2098 = vmatprep.mubr.f32.mxu0 0.0
        %2099 = vmatmul.mubr.f32.gmra.mrb[0].mxu0 %v2002
        %v2100 = vpop.f32.mrb[0].mxu0
        %v2101 = vadd.f32 0.0, %v2100
        %v2102 = vpop.f32.mrb[0].mxu0
        %2103 = vmatprep.mubr.f32.mxu0 0.0
        %2104 = vmatmul.mubr.f32.gmra.mrb[0].mxu0 %v2005
        %v2105 = vpop.f32.mrb[0].mxu0
        %v2106 = vadd.f32 0.0, %v2105
        %v2107 = vpop.f32.mrb[0].mxu0
        %2108 = vmatprep.mubr.f32.mxu0 0.0
        %2109 = vmatmul.mubr.f32.gmra.mrb[0].mxu0 %v2008
        %v2110 = vpop.f32.mrb[0].mxu0
        %v2111 = vadd.f32 0.0, %v2110
        %v2112 = vpop.f32.mrb[0].mxu0
        %2113 = vmatprep.mubr.f32.mxu0 0.0
        %2114 = vmatmul.mubr.f32.gmra.mrb[0].mxu0 %v2011
        %v2115 = vpop.f32.mrb[0].mxu0
        %v2116 = vadd.f32 0.0, %v2115
        %v2117 = vpop.f32.mrb[0].mxu0
        %2118 = vmatprep.mubr.f32.mxu0 0.0
        %2119 = vmatmul.mubr.f32.gmra.mrb[0].mxu0 %v2014
        %v2120 = vpop.f32.mrb[0].mxu0
        %v2121 = vadd.f32 0.0, %v2120
        %v2122 = vpop.f32.mrb[0].mxu0
        %2123 = vmatprep.mubr.f32.mxu0 0.0
        %2124 = vmatmul.mubr.f32.gmra.mrb[0].mxu0 %v2017
        %v2125 = vpop.f32.mrb[0].mxu0
        %v2126 = vadd.f32 0.0, %v2125
        %v2127 = vpop.f32.mrb[0].mxu0
        %2128 = vmatprep.mubr.f32.mxu0 0.0
        %2129 = vmatmul.mubr.f32.gmra.mrb[0].mxu0 %v2020
        %v2130 = vpop.f32.mrb[0].mxu0
        %v2131 = vadd.f32 0.0, %v2130
        %v2132 = vpop.f32.mrb[0].mxu0
        %2133 = vmatprep.mubr.f32.mxu0 0.0
        %2134 = vmatmul.mubr.f32.gmra.mrb[0].mxu0 %v2023
        %v2135 = vpop.f32.mrb[0].mxu0
        %v2136 = vadd.f32 0.0, %v2135
        %v2137 = vpop.f32.mrb[0].mxu0
        %2138 = vdwg.mxu0
        %v2139 = vmul.f32 %v2096, %v928
        %v2140 = vmul.f32 %v2101, %v929
        %v2141 = vmul.f32 %v2106, %v930
        %v2142 = vmul.f32 %v2111, %v931
        %v2143 = vmul.f32 %v2116, %v932
        %v2144 = vmul.f32 %v2121, %v933
        %v2145 = vmul.f32 %v2126, %v934
        %v2146 = vmul.f32 %v2131, %v935
        %v2147 = vmul.f32 %v2136, %v936
        %2148 = vmatprep.subr.mxu0 0.0
        %2149 = vmatpush1.msra.mxu0 %v2139
        %2150 = vmatprep.subr.mxu0 0.0
        %2151 = vmatpush1.msra.mxu0 %v2140
        %2152 = vmatprep.subr.mxu0 0.0
        %2153 = vmatpush1.msra.mxu0 %v2141
        %2154 = vmatprep.subr.mxu0 0.0
        %2155 = vmatpush1.msra.mxu0 %v2142
        %2156 = vmatprep.subr.mxu0 0.0
        %2157 = vmatpush1.msra.mxu0 %v2143
        %2158 = vmatprep.subr.mxu0 0.0
        %2159 = vmatpush1.msra.mxu0 %v2144
        %2160 = vmatprep.subr.mxu0 0.0
        %2161 = vmatpush1.msra.mxu0 %v2145
        %2162 = vmatprep.subr.mxu0 0.0
        %2163 = vmatpush1.msra.mxu0 %v2146
        %2164 = vmatprep.subr.mxu0 0.0
        %2165 = vmatpush1.msra.mxu0 %v2147
        %2166 = vmatprep.subr.mxu0 0.0
        %2167 = vmatpush1.msra.mxu0 0.0
        %2168 = vmatprep.subr.mxu0 0.0
        %2169 = vmatpush1.msra.mxu0 0.0
        %2170 = vmatprep.subr.mxu0 0.0
        %2171 = vmatpush1.msra.mxu0 0.0
        %2172 = vmatprep.subr.mxu0 0.0
        %2173 = vmatpush1.msra.mxu0 0.0
        %2174 = vmatprep.subr.mxu0 0.0
        %2175 = vmatpush1.msra.mxu0 0.0
        %2176 = vmatprep.subr.mxu0 0.0
        %2177 = vmatpush1.msra.mxu0 0.0
        %2178 = vmatprep.subr.mxu0 0.0
        %2179 = vmatpush1.msra.mxu0 0.0
        %2180 = vmatprep.subr.mxu0 0.0
        %2181 = vmatpush1.msra.mxu0 0.0
        %2182 = vmatprep.subr.mxu0 0.0
        %2183 = vmatpush1.msra.mxu0 0.0
        %2184 = vmatprep.subr.mxu0 0.0
        %2185 = vmatpush1.msra.mxu0 0.0
        %2186 = vmatprep.subr.mxu0 0.0
        %2187 = vmatpush1.msra.mxu0 0.0
        %2188 = vmatprep.subr.mxu0 0.0
        %2189 = vmatpush1.msra.mxu0 0.0
        %2190 = vmatprep.subr.mxu0 0.0
        %2191 = vmatpush1.msra.mxu0 0.0
        %2192 = vmatprep.subr.mxu0 0.0
        %2193 = vmatpush1.msra.mxu0 0.0
        %2194 = vmatprep.subr.mxu0 0.0
        %2195 = vmatpush1.msra.mxu0 0.0
        %2196 = vmatprep.subr.mxu0 0.0
        %2197 = vmatpush1.msra.mxu0 0.0
        %2198 = vmatprep.subr.mxu0 0.0
        %2199 = vmatpush1.msra.mxu0 0.0
        %2200 = vmatprep.subr.mxu0 0.0
        %2201 = vmatpush1.msra.mxu0 0.0
        %2202 = vmatprep.subr.mxu0 0.0
        %2203 = vmatpush1.msra.mxu0 0.0
        %2204 = vmatprep.subr.mxu0 0.0
        %2205 = vmatpush1.msra.mxu0 0.0
        %2206 = vmatprep.subr.mxu0 0.0
        %2207 = vmatpush1.msra.mxu0 0.0
        %2208 = vmatprep.subr.mxu0 0.0
        %2209 = vmatpush1.msra.mxu0 0.0
        %2210 = vmatprep.subr.mxu0 0.0
        %2211 = vmatpush1.msra.mxu0 0.0
        %2212 = vmatprep.mubr.f32.mxu0 0.0
        %2213 = vmatmul.mubr.f32.gmra.mrb[0].mxu0 %v962
        %v2214 = vpop.f32.mrb[0].mxu0
        %v2215 = vadd.f32 0.0, %v2214
        %v2216 = vpop.f32.mrb[0].mxu0
        %2217 = vmatprep.mubr.f32.mxu0 0.0
        %2218 = vmatmul.mubr.f32.gmra.mrb[0].mxu0 %v965
        %v2219 = vpop.f32.mrb[0].mxu0
        %v2220 = vadd.f32 0.0, %v2219
        %v2221 = vpop.f32.mrb[0].mxu0
        %2222 = vmatprep.mubr.f32.mxu0 0.0
        %2223 = vmatmul.mubr.f32.gmra.mrb[0].mxu0 %v968
        %v2224 = vpop.f32.mrb[0].mxu0
        %v2225 = vadd.f32 0.0, %v2224
        %v2226 = vpop.f32.mrb[0].mxu0
        %2227 = vdwg.mxu0
        %v2228 = vld [vmem:[%s13] sm:$0xff]
        %v2229 = vld [vmem:[%s13 + $0x8] sm:$0xff]
        %v2230 = vld [vmem:[%s13 + $0x10] sm:$0xff]
        %v2231 = vld [vmem:[%s13 + $0x18] sm:$0xff]
        %v2232 = vld [vmem:[%s14] sm:$0xff]
        %v2233 = vld [vmem:[%s14 + $0x8] sm:$0xff]
        %v2234 = vld [vmem:[%s14 + $0x10] sm:$0xff]
        %v2235 = vld [vmem:[%s14 + $0x18] sm:$0xff]
        %v2236 = vld [vmem:[#allocation7] sm:$0x3f]
        %v2237 = vld [vmem:[#allocation9] sm:$0xff]
        %v2238 = vld [vmem:[#allocation9 + $0x8] sm:$0xff]
        %v2239 = vld [vmem:[#allocation9 + $0x10] sm:$0x3]
        %v2241 = vsel %vm1280, %v2236, 0
        %v2244 = vsel %vm1308, %v2225, 0
        %2246 = vmatprep.subr.mxu0 0.0
        %2247 = vmatpush1.msra.mxu0 %v2215
        %2248 = vmatprep.subr.mxu0 0.0
        %2249 = vmatpush1.msra.mxu0 %v2220
        %2250 = vmatprep.subr.mxu0 0.0
        %2251 = vmatpush1.msra.mxu0 %v2244
        %2252 = vmatprep.subr.mxu0 0.0
        %2253 = vmatpush1.msra.mxu0 0.0
        %2254 = vmatprep.subr.mxu0 0.0
        %2255 = vmatpush1.msra.mxu0 0.0
        %2256 = vmatprep.subr.mxu0 0.0
        %2257 = vmatpush1.msra.mxu0 0.0
        %2258 = vmatprep.subr.mxu0 0.0
        %2259 = vmatpush1.msra.mxu0 0.0
        %2260 = vmatprep.subr.mxu0 0.0
        %2261 = vmatpush1.msra.mxu0 0.0
        %2262 = vmatprep.subr.mxu0 0.0
        %2263 = vmatpush1.msra.mxu0 0.0
        %2264 = vmatprep.subr.mxu0 0.0
        %2265 = vmatpush1.msra.mxu0 0.0
        %2266 = vmatprep.subr.mxu0 0.0
        %2267 = vmatpush1.msra.mxu0 0.0
        %2268 = vmatprep.subr.mxu0 0.0
        %2269 = vmatpush1.msra.mxu0 0.0
        %2270 = vmatprep.subr.mxu0 0.0
        %2271 = vmatpush1.msra.mxu0 0.0
        %2272 = vmatprep.subr.mxu0 0.0
        %2273 = vmatpush1.msra.mxu0 0.0
        %2274 = vmatprep.subr.mxu0 0.0
        %2275 = vmatpush1.msra.mxu0 0.0
        %2276 = vmatprep.subr.mxu0 0.0
        %2277 = vmatpush1.msra.mxu0 0.0
        %2278 = vmatprep.subr.mxu0 0.0
        %2279 = vmatpush1.msra.mxu0 0.0
        %2280 = vmatprep.subr.mxu0 0.0
        %2281 = vmatpush1.msra.mxu0 0.0
        %2282 = vmatprep.subr.mxu0 0.0
        %2283 = vmatpush1.msra.mxu0 0.0
        %2284 = vmatprep.subr.mxu0 0.0
        %2285 = vmatpush1.msra.mxu0 0.0
        %2286 = vmatprep.subr.mxu0 0.0
        %2287 = vmatpush1.msra.mxu0 0.0
        %2288 = vmatprep.subr.mxu0 0.0
        %2289 = vmatpush1.msra.mxu0 0.0
        %2290 = vmatprep.subr.mxu0 0.0
        %2291 = vmatpush1.msra.mxu0 0.0
        %2292 = vmatprep.subr.mxu0 0.0
        %2293 = vmatpush1.msra.mxu0 0.0
        %2294 = vmatprep.subr.mxu0 0.0
        %2295 = vmatpush1.msra.mxu0 0.0
        %2296 = vmatprep.subr.mxu0 0.0
        %2297 = vmatpush1.msra.mxu0 0.0
        %2298 = vmatprep.subr.mxu0 0.0
        %2299 = vmatpush1.msra.mxu0 0.0
        %2300 = vmatprep.subr.mxu0 0.0
        %2301 = vmatpush1.msra.mxu0 0.0
        %2302 = vmatprep.subr.mxu0 0.0
        %2303 = vmatpush1.msra.mxu0 0.0
        %2304 = vmatprep.subr.mxu0 0.0
        %2305 = vmatpush1.msra.mxu0 0.0
        %2306 = vmatprep.subr.mxu0 0.0
        %2307 = vmatpush1.msra.mxu0 0.0
        %2308 = vmatprep.subr.mxu0 0.0
        %2309 = vmatpush1.msra.mxu0 0.0
        %2310 = vmatprep.mubr.f32.mxu0 0.0
        %2311 = vmatmul.mubr.f32.gmra.mrb[0].mxu0 %v2241
        %v2312 = vpop.f32.mrb[0].mxu0
        %v2313 = vadd.f32 0.0, %v2312
        %v2314 = vpop.f32.mrb[0].mxu0
        %2315 = vdwg.mxu0
        %v2316 = vmul.f32 %v2313, 0.33333334
        %v2318 = vsel %vm1053, %v2316, 0
        %2320 = vmatprep.subr.mxu0 0.0
        %2321 = vmatpush1.msra.mxu0 %v2228
        %2322 = vmatprep.subr.mxu0 0.0
        %2323 = vmatpush1.msra.mxu0 %v2229
        %2324 = vmatprep.subr.mxu0 0.0
        %2325 = vmatpush1.msra.mxu0 %v2230
        %2326 = vmatprep.subr.mxu0 0.0
        %2327 = vmatpush1.msra.mxu0 %v2231
        %2328 = vmatprep.subr.mxu0 0.0
        %2329 = vmatpush1.msra.mxu0 0.0
        %2330 = vmatprep.subr.mxu0 0.0
        %2331 = vmatpush1.msra.mxu0 0.0
        %2332 = vmatprep.subr.mxu0 0.0
        %2333 = vmatpush1.msra.mxu0 0.0
        %2334 = vmatprep.subr.mxu0 0.0
        %2335 = vmatpush1.msra.mxu0 0.0
        %2336 = vmatprep.subr.mxu0 0.0
        %2337 = vmatpush1.msra.mxu0 0.0
        %2338 = vmatprep.subr.mxu0 0.0
        %2339 = vmatpush1.msra.mxu0 0.0
        %2340 = vmatprep.subr.mxu0 0.0
        %2341 = vmatpush1.msra.mxu0 0.0
        %2342 = vmatprep.subr.mxu0 0.0
        %2343 = vmatpush1.msra.mxu0 0.0
        %2344 = vmatprep.subr.mxu0 0.0
        %2345 = vmatpush1.msra.mxu0 0.0
        %2346 = vmatprep.subr.mxu0 0.0
        %2347 = vmatpush1.msra.mxu0 0.0
        %2348 = vmatprep.subr.mxu0 0.0
        %2349 = vmatpush1.msra.mxu0 0.0
        %2350 = vmatprep.subr.mxu0 0.0
        %2351 = vmatpush1.msra.mxu0 0.0
        %2352 = vmatprep.subr.mxu0 0.0
        %2353 = vmatpush1.msra.mxu0 0.0
        %2354 = vmatprep.subr.mxu0 0.0
        %2355 = vmatpush1.msra.mxu0 0.0
        %2356 = vmatprep.subr.mxu0 0.0
        %2357 = vmatpush1.msra.mxu0 0.0
        %2358 = vmatprep.subr.mxu0 0.0
        %2359 = vmatpush1.msra.mxu0 0.0
        %2360 = vmatprep.subr.mxu0 0.0
        %2361 = vmatpush1.msra.mxu0 0.0
        %2362 = vmatprep.subr.mxu0 0.0
        %2363 = vmatpush1.msra.mxu0 0.0
        %2364 = vmatprep.subr.mxu0 0.0
        %2365 = vmatpush1.msra.mxu0 0.0
        %2366 = vmatprep.subr.mxu0 0.0
        %2367 = vmatpush1.msra.mxu0 0.0
        %2368 = vmatprep.subr.mxu0 0.0
        %2369 = vmatpush1.msra.mxu0 0.0
        %2370 = vmatprep.subr.mxu0 0.0
        %2371 = vmatpush1.msra.mxu0 0.0
        %2372 = vmatprep.subr.mxu0 0.0
        %2373 = vmatpush1.msra.mxu0 0.0
        %2374 = vmatprep.subr.mxu0 0.0
        %2375 = vmatpush1.msra.mxu0 0.0
        %2376 = vmatprep.subr.mxu0 0.0
        %2377 = vmatpush1.msra.mxu0 0.0
        %2378 = vmatprep.subr.mxu0 0.0
        %2379 = vmatpush1.msra.mxu0 0.0
        %2380 = vmatprep.subr.mxu0 0.0
        %2381 = vmatpush1.msra.mxu0 0.0
        %2382 = vmatprep.subr.mxu0 0.0
        %2383 = vmatpush1.msra.mxu0 0.0
        %2384 = vmatprep.mubr.f32.mxu0 0.0
        %2385 = vmatmul.mubr.f32.gmra.mrb[0].mxu0 %v2318
        %v2386 = vpop.f32.mrb[0].mxu0
        %v2387 = vadd.f32 0.0, %v2386
        %v2388 = vpop.f32.mrb[0].mxu0
        %2389 = vdwg.mxu0
        %v2391 = vsel %vm1053, %v2215, 0
        %v2394 = vsel %vm1053, %v2220, 0
        %v2396 = vsel %vm1053, %v2225, 0
        %2398 = vmatprep.subr.mxu0 0.0
        %2399 = vmatpush1.msra.mxu0 %v2232
        %2400 = vmatprep.subr.mxu0 0.0
        %2401 = vmatpush1.msra.mxu0 %v2233
        %2402 = vmatprep.subr.mxu0 0.0
        %2403 = vmatpush1.msra.mxu0 %v2234
        %2404 = vmatprep.subr.mxu0 0.0
        %2405 = vmatpush1.msra.mxu0 %v2235
        %2406 = vmatprep.subr.mxu0 0.0
        %2407 = vmatpush1.msra.mxu0 0.0
        %2408 = vmatprep.subr.mxu0 0.0
        %2409 = vmatpush1.msra.mxu0 0.0
        %2410 = vmatprep.subr.mxu0 0.0
        %2411 = vmatpush1.msra.mxu0 0.0
        %2412 = vmatprep.subr.mxu0 0.0
        %2413 = vmatpush1.msra.mxu0 0.0
        %2414 = vmatprep.subr.mxu0 0.0
        %2415 = vmatpush1.msra.mxu0 0.0
        %2416 = vmatprep.subr.mxu0 0.0
        %2417 = vmatpush1.msra.mxu0 0.0
        %2418 = vmatprep.subr.mxu0 0.0
        %2419 = vmatpush1.msra.mxu0 0.0
        %2420 = vmatprep.subr.mxu0 0.0
        %2421 = vmatpush1.msra.mxu0 0.0
        %2422 = vmatprep.subr.mxu0 0.0
        %2423 = vmatpush1.msra.mxu0 0.0
        %2424 = vmatprep.subr.mxu0 0.0
        %2425 = vmatpush1.msra.mxu0 0.0
        %2426 = vmatprep.subr.mxu0 0.0
        %2427 = vmatpush1.msra.mxu0 0.0
        %2428 = vmatprep.subr.mxu0 0.0
        %2429 = vmatpush1.msra.mxu0 0.0
        %2430 = vmatprep.subr.mxu0 0.0
        %2431 = vmatpush1.msra.mxu0 0.0
        %2432 = vmatprep.subr.mxu0 0.0
        %2433 = vmatpush1.msra.mxu0 0.0
        %2434 = vmatprep.subr.mxu0 0.0
        %2435 = vmatpush1.msra.mxu0 0.0
        %2436 = vmatprep.subr.mxu0 0.0
        %2437 = vmatpush1.msra.mxu0 0.0
        %2438 = vmatprep.subr.mxu0 0.0
        %2439 = vmatpush1.msra.mxu0 0.0
        %2440 = vmatprep.subr.mxu0 0.0
        %2441 = vmatpush1.msra.mxu0 0.0
        %2442 = vmatprep.subr.mxu0 0.0
        %2443 = vmatpush1.msra.mxu0 0.0
        %2444 = vmatprep.subr.mxu0 0.0
        %2445 = vmatpush1.msra.mxu0 0.0
        %2446 = vmatprep.subr.mxu0 0.0
        %2447 = vmatpush1.msra.mxu0 0.0
        %2448 = vmatprep.subr.mxu0 0.0
        %2449 = vmatpush1.msra.mxu0 0.0
        %2450 = vmatprep.subr.mxu0 0.0
        %2451 = vmatpush1.msra.mxu0 0.0
        %2452 = vmatprep.subr.mxu0 0.0
        %2453 = vmatpush1.msra.mxu0 0.0
        %2454 = vmatprep.subr.mxu0 0.0
        %2455 = vmatpush1.msra.mxu0 0.0
        %2456 = vmatprep.subr.mxu0 0.0
        %2457 = vmatpush1.msra.mxu0 0.0
        %2458 = vmatprep.subr.mxu0 0.0
        %2459 = vmatpush1.msra.mxu0 0.0
        %2460 = vmatprep.subr.mxu0 0.0
        %2461 = vmatpush1.msra.mxu0 0.0
        %2462 = vmatprep.mubr.f32.mxu0 0.0
        %2463 = vmatmul.mubr.f32.gmra.mrb[0].mxu0 %v2391
        %v2464 = vpop.f32.mrb[0].mxu0
        %v2465 = vadd.f32 0.0, %v2464
        %v2466 = vpop.f32.mrb[0].mxu0
        %2467 = vmatprep.mubr.f32.mxu0 0.0
        %2468 = vmatmul.mubr.f32.gmra.mrb[0].mxu0 %v2394
        %v2469 = vpop.f32.mrb[0].mxu0
        %v2470 = vadd.f32 0.0, %v2469
        %v2471 = vpop.f32.mrb[0].mxu0
        %2472 = vmatprep.mubr.f32.mxu0 0.0
        %2473 = vmatmul.mubr.f32.gmra.mrb[0].mxu0 %v2396
        %v2474 = vpop.f32.mrb[0].mxu0
        %v2475 = vadd.f32 0.0, %v2474
        %v2476 = vpop.f32.mrb[0].mxu0
        %2477 = vdwg.mxu0
        %vm2478 = vcmask 48128
        %v2480 = vsel %vm2478, %v2237, 0
        %v2483 = vsel %vm2478, %v2238, 0
        %v2486 = vsel %vm2478, %v2239, 0
        %vm2488 = vcmask 1045504
        %v2490 = vsel %vm2488, %v2387, 0
        %2492 = vmatprep.subr.mxu0 0.0
        %2493 = vmatpush1.msra.mxu0 %v2490
        %2494 = vmatprep.subr.mxu0 0.0
        %2495 = vmatpush1.msra.mxu0 0.0
        %2496 = vmatprep.subr.mxu0 0.0
        %2497 = vmatpush1.msra.mxu0 0.0
        %2498 = vmatprep.subr.mxu0 0.0
        %2499 = vmatpush1.msra.mxu0 0.0
        %2500 = vmatprep.subr.mxu0 0.0
        %2501 = vmatpush1.msra.mxu0 0.0
        %2502 = vmatprep.subr.mxu0 0.0
        %2503 = vmatpush1.msra.mxu0 0.0
        %2504 = vmatprep.subr.mxu0 0.0
        %2505 = vmatpush1.msra.mxu0 0.0
        %2506 = vmatprep.subr.mxu0 0.0
        %2507 = vmatpush1.msra.mxu0 0.0
        %2508 = vmatprep.subr.mxu0 0.0
        %2509 = vmatpush1.msra.mxu0 0.0
        %2510 = vmatprep.subr.mxu0 0.0
        %2511 = vmatpush1.msra.mxu0 0.0
        %2512 = vmatprep.subr.mxu0 0.0
        %2513 = vmatpush1.msra.mxu0 0.0
        %2514 = vmatprep.subr.mxu0 0.0
        %2515 = vmatpush1.msra.mxu0 0.0
        %2516 = vmatprep.subr.mxu0 0.0
        %2517 = vmatpush1.msra.mxu0 0.0
        %2518 = vmatprep.subr.mxu0 0.0
        %2519 = vmatpush1.msra.mxu0 0.0
        %2520 = vmatprep.subr.mxu0 0.0
        %2521 = vmatpush1.msra.mxu0 0.0
        %2522 = vmatprep.subr.mxu0 0.0
        %2523 = vmatpush1.msra.mxu0 0.0
        %2524 = vmatprep.subr.mxu0 0.0
        %2525 = vmatpush1.msra.mxu0 0.0
        %2526 = vmatprep.subr.mxu0 0.0
        %2527 = vmatpush1.msra.mxu0 0.0
        %2528 = vmatprep.subr.mxu0 0.0
        %2529 = vmatpush1.msra.mxu0 0.0
        %2530 = vmatprep.subr.mxu0 0.0
        %2531 = vmatpush1.msra.mxu0 0.0
        %2532 = vmatprep.subr.mxu0 0.0
        %2533 = vmatpush1.msra.mxu0 0.0
        %2534 = vmatprep.subr.mxu0 0.0
        %2535 = vmatpush1.msra.mxu0 0.0
        %2536 = vmatprep.subr.mxu0 0.0
        %2537 = vmatpush1.msra.mxu0 0.0
        %2538 = vmatprep.subr.mxu0 0.0
        %2539 = vmatpush1.msra.mxu0 0.0
        %2540 = vmatprep.subr.mxu0 0.0
        %2541 = vmatpush1.msra.mxu0 0.0
        %2542 = vmatprep.subr.mxu0 0.0
        %2543 = vmatpush1.msra.mxu0 0.0
        %2544 = vmatprep.subr.mxu0 0.0
        %2545 = vmatpush1.msra.mxu0 0.0
        %2546 = vmatprep.subr.mxu0 0.0
        %2547 = vmatpush1.msra.mxu0 0.0
        %2548 = vmatprep.subr.mxu0 0.0
        %2549 = vmatpush1.msra.mxu0 0.0
        %2550 = vmatprep.subr.mxu0 0.0
        %2551 = vmatpush1.msra.mxu0 0.0
        %2552 = vmatprep.subr.mxu0 0.0
        %2553 = vmatpush1.msra.mxu0 0.0
        %2554 = vmatprep.subr.mxu0 0.0
        %2555 = vmatpush1.msra.mxu0 0.0
        %2556 = vmatprep.mubr.f32.mxu0 0.0
        %2557 = vmatmul.mubr.f32.gmra.mrb[0].mxu0 %v2480
        %v2558 = vpop.f32.mrb[0].mxu0
        %v2559 = vadd.f32 0.0, %v2558
        %v2560 = vpop.f32.mrb[0].mxu0
        %2561 = vmatprep.mubr.f32.mxu0 0.0
        %2562 = vmatmul.mubr.f32.gmra.mrb[0].mxu0 %v2483
        %v2563 = vpop.f32.mrb[0].mxu0
        %v2564 = vadd.f32 0.0, %v2563
        %v2565 = vpop.f32.mrb[0].mxu0
        %2566 = vmatprep.mubr.f32.mxu0 0.0
        %2567 = vmatmul.mubr.f32.gmra.mrb[0].mxu0 %v2486
        %v2568 = vpop.f32.mrb[0].mxu0
        %v2569 = vadd.f32 0.0, %v2568
        %v2570 = vpop.f32.mrb[0].mxu0
        %2571 = vdwg.mxu0
        %v2572 = vmul.f32 %v2559, %v2465
        %v2573 = vmul.f32 %v2564, %v2470
        %v2574 = vmul.f32 %v2569, %v2475
        %v2576 = vsel %vm1431, %v2572, 0
        %v2579 = vsel %vm1431, %v2573, 0
        %v2582 = vsel %vm1431, %v2574, 0
        %2584 = vmatprep.subr.mxu0 0.0
        %2585 = vmatpush1.msra.mxu0 %v937
        %2586 = vmatprep.subr.mxu0 0.0
        %2587 = vmatpush1.msra.mxu0 %v938
        %2588 = vmatprep.subr.mxu0 0.0
        %2589 = vmatpush1.msra.mxu0 0.0
        %2590 = vmatprep.subr.mxu0 0.0
        %2591 = vmatpush1.msra.mxu0 0.0
        %2592 = vmatprep.subr.mxu0 0.0
        %2593 = vmatpush1.msra.mxu0 0.0
        %2594 = vmatprep.subr.mxu0 0.0
        %2595 = vmatpush1.msra.mxu0 0.0
        %2596 = vmatprep.subr.mxu0 0.0
        %2597 = vmatpush1.msra.mxu0 0.0
        %2598 = vmatprep.subr.mxu0 0.0
        %2599 = vmatpush1.msra.mxu0 0.0
        %2600 = vmatprep.subr.mxu0 0.0
        %2601 = vmatpush1.msra.mxu0 0.0
        %2602 = vmatprep.subr.mxu0 0.0
        %2603 = vmatpush1.msra.mxu0 0.0
        %2604 = vmatprep.subr.mxu0 0.0
        %2605 = vmatpush1.msra.mxu0 0.0
        %2606 = vmatprep.subr.mxu0 0.0
        %2607 = vmatpush1.msra.mxu0 0.0
        %2608 = vmatprep.subr.mxu0 0.0
        %2609 = vmatpush1.msra.mxu0 0.0
        %2610 = vmatprep.subr.mxu0 0.0
        %2611 = vmatpush1.msra.mxu0 0.0
        %2612 = vmatprep.subr.mxu0 0.0
        %2613 = vmatpush1.msra.mxu0 0.0
        %2614 = vmatprep.subr.mxu0 0.0
        %2615 = vmatpush1.msra.mxu0 0.0
        %2616 = vmatprep.subr.mxu0 0.0
        %2617 = vmatpush1.msra.mxu0 0.0
        %2618 = vmatprep.subr.mxu0 0.0
        %2619 = vmatpush1.msra.mxu0 0.0
        %2620 = vmatprep.subr.mxu0 0.0
        %2621 = vmatpush1.msra.mxu0 0.0
        %2622 = vmatprep.subr.mxu0 0.0
        %2623 = vmatpush1.msra.mxu0 0.0
        %2624 = vmatprep.subr.mxu0 0.0
        %2625 = vmatpush1.msra.mxu0 0.0
        %2626 = vmatprep.subr.mxu0 0.0
        %2627 = vmatpush1.msra.mxu0 0.0
        %2628 = vmatprep.subr.mxu0 0.0
        %2629 = vmatpush1.msra.mxu0 0.0
        %2630 = vmatprep.subr.mxu0 0.0
        %2631 = vmatpush1.msra.mxu0 0.0
        %2632 = vmatprep.subr.mxu0 0.0
        %2633 = vmatpush1.msra.mxu0 0.0
        %2634 = vmatprep.subr.mxu0 0.0
        %2635 = vmatpush1.msra.mxu0 0.0
        %2636 = vmatprep.subr.mxu0 0.0
        %2637 = vmatpush1.msra.mxu0 0.0
        %2638 = vmatprep.subr.mxu0 0.0
        %2639 = vmatpush1.msra.mxu0 0.0
        %2640 = vmatprep.subr.mxu0 0.0
        %2641 = vmatpush1.msra.mxu0 0.0
        %2642 = vmatprep.subr.mxu0 0.0
        %2643 = vmatpush1.msra.mxu0 0.0
        %2644 = vmatprep.subr.mxu0 0.0
        %2645 = vmatpush1.msra.mxu0 0.0
        %2646 = vmatprep.subr.mxu0 0.0
        %2647 = vmatpush1.msra.mxu0 0.0
        %2648 = vmatprep.mubr.f32.mxu0 0.0
        %2649 = vmatmul.mubr.f32.gmra.mrb[0].mxu0 %v2576
        %v2650 = vpop.f32.mrb[0].mxu0
        %v2651 = vadd.f32 0.0, %v2650
        %v2652 = vpop.f32.mrb[0].mxu0
        %2653 = vmatprep.mubr.f32.mxu0 0.0
        %2654 = vmatmul.mubr.f32.gmra.mrb[0].mxu0 %v2579
        %v2655 = vpop.f32.mrb[0].mxu0
        %v2656 = vadd.f32 0.0, %v2655
        %v2657 = vpop.f32.mrb[0].mxu0
        %2658 = vmatprep.mubr.f32.mxu0 0.0
        %2659 = vmatmul.mubr.f32.gmra.mrb[0].mxu0 %v2582
        %v2660 = vpop.f32.mrb[0].mxu0
        %v2661 = vadd.f32 0.0, %v2660
        %v2662 = vpop.f32.mrb[0].mxu0
        %2663 = vdwg.mxu0
        %v2665 = vsel %vm1308, %v2661, 0
        %2667 = vmatprep.subr.mxu0 0.0
        %2668 = vmatpush1.msra.mxu0 %v2651
        %2669 = vmatprep.subr.mxu0 0.0
        %2670 = vmatpush1.msra.mxu0 %v2656
        %2671 = vmatprep.subr.mxu0 0.0
        %2672 = vmatpush1.msra.mxu0 %v2665
        %2673 = vmatprep.subr.mxu0 0.0
        %2674 = vmatpush1.msra.mxu0 0.0
        %2675 = vmatprep.subr.mxu0 0.0
        %2676 = vmatpush1.msra.mxu0 0.0
        %2677 = vmatprep.subr.mxu0 0.0
        %2678 = vmatpush1.msra.mxu0 0.0
        %2679 = vmatprep.subr.mxu0 0.0
        %2680 = vmatpush1.msra.mxu0 0.0
        %2681 = vmatprep.subr.mxu0 0.0
        %2682 = vmatpush1.msra.mxu0 0.0
        %2683 = vmatprep.subr.mxu0 0.0
        %2684 = vmatpush1.msra.mxu0 0.0
        %2685 = vmatprep.subr.mxu0 0.0
        %2686 = vmatpush1.msra.mxu0 0.0
        %2687 = vmatprep.subr.mxu0 0.0
        %2688 = vmatpush1.msra.mxu0 0.0
        %2689 = vmatprep.subr.mxu0 0.0
        %2690 = vmatpush1.msra.mxu0 0.0
        %2691 = vmatprep.subr.mxu0 0.0
        %2692 = vmatpush1.msra.mxu0 0.0
        %2693 = vmatprep.subr.mxu0 0.0
        %2694 = vmatpush1.msra.mxu0 0.0
        %2695 = vmatprep.subr.mxu0 0.0
        %2696 = vmatpush1.msra.mxu0 0.0
        %2697 = vmatprep.subr.mxu0 0.0
        %2698 = vmatpush1.msra.mxu0 0.0
        %2699 = vmatprep.subr.mxu0 0.0
        %2700 = vmatpush1.msra.mxu0 0.0
        %2701 = vmatprep.subr.mxu0 0.0
        %2702 = vmatpush1.msra.mxu0 0.0
        %2703 = vmatprep.subr.mxu0 0.0
        %2704 = vmatpush1.msra.mxu0 0.0
        %2705 = vmatprep.subr.mxu0 0.0
        %2706 = vmatpush1.msra.mxu0 0.0
        %2707 = vmatprep.subr.mxu0 0.0
        %2708 = vmatpush1.msra.mxu0 0.0
        %2709 = vmatprep.subr.mxu0 0.0
        %2710 = vmatpush1.msra.mxu0 0.0
        %2711 = vmatprep.subr.mxu0 0.0
        %2712 = vmatpush1.msra.mxu0 0.0
        %2713 = vmatprep.subr.mxu0 0.0
        %2714 = vmatpush1.msra.mxu0 0.0
        %2715 = vmatprep.subr.mxu0 0.0
        %2716 = vmatpush1.msra.mxu0 0.0
        %2717 = vmatprep.subr.mxu0 0.0
        %2718 = vmatpush1.msra.mxu0 0.0
        %2719 = vmatprep.subr.mxu0 0.0
        %2720 = vmatpush1.msra.mxu0 0.0
        %2721 = vmatprep.subr.mxu0 0.0
        %2722 = vmatpush1.msra.mxu0 0.0
        %2723 = vmatprep.subr.mxu0 0.0
        %2724 = vmatpush1.msra.mxu0 0.0
        %2725 = vmatprep.subr.mxu0 0.0
        %2726 = vmatpush1.msra.mxu0 0.0
        %2727 = vmatprep.subr.mxu0 0.0
        %2728 = vmatpush1.msra.mxu0 0.0
        %2729 = vmatprep.subr.mxu0 0.0
        %2730 = vmatpush1.msra.mxu0 0.0
        %2731 = vmatprep.mubr.f32.mxu0 0.0
        %2732 = vmatmul.mubr.f32.gmra.mrb[0].mxu0 %v2241
        %v2733 = vpop.f32.mrb[0].mxu0
        %v2734 = vadd.f32 0.0, %v2733
        %v2735 = vpop.f32.mrb[0].mxu0
        %2736 = vdwg.mxu0
        %v2737 = vmul.f32 %v2734, 0.33333334
        %v2739 = vsel %vm2488, %v2737, 0
        %2741 = vmatprep.subr.mxu0 0.0
        %2742 = vmatpush1.msra.mxu0 %v2739
        %2743 = vmatprep.subr.mxu0 0.0
        %2744 = vmatpush1.msra.mxu0 0.0
        %2745 = vmatprep.subr.mxu0 0.0
        %2746 = vmatpush1.msra.mxu0 0.0
        %2747 = vmatprep.subr.mxu0 0.0
        %2748 = vmatpush1.msra.mxu0 0.0
        %2749 = vmatprep.subr.mxu0 0.0
        %2750 = vmatpush1.msra.mxu0 0.0
        %2751 = vmatprep.subr.mxu0 0.0
        %2752 = vmatpush1.msra.mxu0 0.0
        %2753 = vmatprep.subr.mxu0 0.0
        %2754 = vmatpush1.msra.mxu0 0.0
        %2755 = vmatprep.subr.mxu0 0.0
        %2756 = vmatpush1.msra.mxu0 0.0
        %2757 = vmatprep.subr.mxu0 0.0
        %2758 = vmatpush1.msra.mxu0 0.0
        %2759 = vmatprep.subr.mxu0 0.0
        %2760 = vmatpush1.msra.mxu0 0.0
        %2761 = vmatprep.subr.mxu0 0.0
        %2762 = vmatpush1.msra.mxu0 0.0
        %2763 = vmatprep.subr.mxu0 0.0
        %2764 = vmatpush1.msra.mxu0 0.0
        %2765 = vmatprep.subr.mxu0 0.0
        %2766 = vmatpush1.msra.mxu0 0.0
        %2767 = vmatprep.subr.mxu0 0.0
        %2768 = vmatpush1.msra.mxu0 0.0
        %2769 = vmatprep.subr.mxu0 0.0
        %2770 = vmatpush1.msra.mxu0 0.0
        %2771 = vmatprep.subr.mxu0 0.0
        %2772 = vmatpush1.msra.mxu0 0.0
        %2773 = vmatprep.subr.mxu0 0.0
        %2774 = vmatpush1.msra.mxu0 0.0
        %2775 = vmatprep.subr.mxu0 0.0
        %2776 = vmatpush1.msra.mxu0 0.0
        %2777 = vmatprep.subr.mxu0 0.0
        %2778 = vmatpush1.msra.mxu0 0.0
        %2779 = vmatprep.subr.mxu0 0.0
        %2780 = vmatpush1.msra.mxu0 0.0
        %2781 = vmatprep.subr.mxu0 0.0
        %2782 = vmatpush1.msra.mxu0 0.0
        %2783 = vmatprep.subr.mxu0 0.0
        %2784 = vmatpush1.msra.mxu0 0.0
        %2785 = vmatprep.subr.mxu0 0.0
        %2786 = vmatpush1.msra.mxu0 0.0
        %2787 = vmatprep.subr.mxu0 0.0
        %2788 = vmatpush1.msra.mxu0 0.0
        %2789 = vmatprep.subr.mxu0 0.0
        %2790 = vmatpush1.msra.mxu0 0.0
        %2791 = vmatprep.subr.mxu0 0.0
        %2792 = vmatpush1.msra.mxu0 0.0
        %2793 = vmatprep.subr.mxu0 0.0
        %2794 = vmatpush1.msra.mxu0 0.0
        %2795 = vmatprep.subr.mxu0 0.0
        %2796 = vmatpush1.msra.mxu0 0.0
        %2797 = vmatprep.subr.mxu0 0.0
        %2798 = vmatpush1.msra.mxu0 0.0
        %2799 = vmatprep.subr.mxu0 0.0
        %2800 = vmatpush1.msra.mxu0 0.0
        %2801 = vmatprep.subr.mxu0 0.0
        %2802 = vmatpush1.msra.mxu0 0.0
        %2803 = vmatprep.subr.mxu0 0.0
        %2804 = vmatpush1.msra.mxu0 0.0
        %2805 = vmatprep.mubr.f32.mxu0 0.0
        %2806 = vmatmul.mubr.f32.gmra.mrb[0].mxu0 %v2480
        %v2807 = vpop.f32.mrb[0].mxu0
        %v2808 = vadd.f32 0.0, %v2807
        %v2809 = vpop.f32.mrb[0].mxu0
        %2810 = vmatprep.mubr.f32.mxu0 0.0
        %2811 = vmatmul.mubr.f32.gmra.mrb[0].mxu0 %v2483
        %v2812 = vpop.f32.mrb[0].mxu0
        %v2813 = vadd.f32 0.0, %v2812
        %v2814 = vpop.f32.mrb[0].mxu0
        %2815 = vmatprep.mubr.f32.mxu0 0.0
        %2816 = vmatmul.mubr.f32.gmra.mrb[0].mxu0 %v2486
        %v2817 = vpop.f32.mrb[0].mxu0
        %v2818 = vadd.f32 0.0, %v2817
        %v2819 = vpop.f32.mrb[0].mxu0
        %2820 = vdwg.mxu0
        %v2821 = vsub.f32 %v2651, %v2808
        %v2822 = vsub.f32 %v2656, %v2813
        %v2823 = vsub.f32 %v2661, %v2818
        %v2824 = vmul.f32 %v2821, 1.442695
        %v2825 = vpow.pop %v2824
        %v2826 = vmul.f32 %v2822, 1.442695
        %v2827 = vpow.pop %v2826
        %v2828 = vmul.f32 %v2823, 1.442695
        %v2829 = vpow.pop %v2828
        %v2831 = vsel %vm1308, %v2829, 0
        %2833 = vmatprep.subr.mxu0 0.0
        %2834 = vmatpush1.msra.mxu0 %v2825
        %2835 = vmatprep.subr.mxu0 0.0
        %2836 = vmatpush1.msra.mxu0 %v2827
        %2837 = vmatprep.subr.mxu0 0.0
        %2838 = vmatpush1.msra.mxu0 %v2831
        %2839 = vmatprep.subr.mxu0 0.0
        %2840 = vmatpush1.msra.mxu0 0.0
        %2841 = vmatprep.subr.mxu0 0.0
        %2842 = vmatpush1.msra.mxu0 0.0
        %2843 = vmatprep.subr.mxu0 0.0
        %2844 = vmatpush1.msra.mxu0 0.0
        %2845 = vmatprep.subr.mxu0 0.0
        %2846 = vmatpush1.msra.mxu0 0.0
        %2847 = vmatprep.subr.mxu0 0.0
        %2848 = vmatpush1.msra.mxu0 0.0
        %2849 = vmatprep.subr.mxu0 0.0
        %2850 = vmatpush1.msra.mxu0 0.0
        %2851 = vmatprep.subr.mxu0 0.0
        %2852 = vmatpush1.msra.mxu0 0.0
        %2853 = vmatprep.subr.mxu0 0.0
        %2854 = vmatpush1.msra.mxu0 0.0
        %2855 = vmatprep.subr.mxu0 0.0
        %2856 = vmatpush1.msra.mxu0 0.0
        %2857 = vmatprep.subr.mxu0 0.0
        %2858 = vmatpush1.msra.mxu0 0.0
        %2859 = vmatprep.subr.mxu0 0.0
        %2860 = vmatpush1.msra.mxu0 0.0
        %2861 = vmatprep.subr.mxu0 0.0
        %2862 = vmatpush1.msra.mxu0 0.0
        %2863 = vmatprep.subr.mxu0 0.0
        %2864 = vmatpush1.msra.mxu0 0.0
        %2865 = vmatprep.subr.mxu0 0.0
        %2866 = vmatpush1.msra.mxu0 0.0
        %2867 = vmatprep.subr.mxu0 0.0
        %2868 = vmatpush1.msra.mxu0 0.0
        %2869 = vmatprep.subr.mxu0 0.0
        %2870 = vmatpush1.msra.mxu0 0.0
        %2871 = vmatprep.subr.mxu0 0.0
        %2872 = vmatpush1.msra.mxu0 0.0
        %2873 = vmatprep.subr.mxu0 0.0
        %2874 = vmatpush1.msra.mxu0 0.0
        %2875 = vmatprep.subr.mxu0 0.0
        %2876 = vmatpush1.msra.mxu0 0.0
        %2877 = vmatprep.subr.mxu0 0.0
        %2878 = vmatpush1.msra.mxu0 0.0
        %2879 = vmatprep.subr.mxu0 0.0
        %2880 = vmatpush1.msra.mxu0 0.0
        %2881 = vmatprep.subr.mxu0 0.0
        %2882 = vmatpush1.msra.mxu0 0.0
        %2883 = vmatprep.subr.mxu0 0.0
        %2884 = vmatpush1.msra.mxu0 0.0
        %2885 = vmatprep.subr.mxu0 0.0
        %2886 = vmatpush1.msra.mxu0 0.0
        %2887 = vmatprep.subr.mxu0 0.0
        %2888 = vmatpush1.msra.mxu0 0.0
        %2889 = vmatprep.subr.mxu0 0.0
        %2890 = vmatpush1.msra.mxu0 0.0
        %2891 = vmatprep.subr.mxu0 0.0
        %2892 = vmatpush1.msra.mxu0 0.0
        %2893 = vmatprep.subr.mxu0 0.0
        %2894 = vmatpush1.msra.mxu0 0.0
        %2895 = vmatprep.subr.mxu0 0.0
        %2896 = vmatpush1.msra.mxu0 0.0
        %2897 = vmatprep.mubr.f32.mxu0 0.0
        %2898 = vmatmul.mubr.f32.gmra.mrb[0].mxu0 %v2241
        %v2899 = vpop.f32.mrb[0].mxu0
        %v2900 = vadd.f32 0.0, %v2899
        %v2901 = vpop.f32.mrb[0].mxu0
        %2902 = vdwg.mxu0
        %v2903 = vrcp.pop %v2900
        %v2905 = vsel %vm2488, %v2903, 0
        %2907 = vmatprep.subr.mxu0 0.0
        %2908 = vmatpush1.msra.mxu0 %v2905
        %2909 = vmatprep.subr.mxu0 0.0
        %2910 = vmatpush1.msra.mxu0 0.0
        %2911 = vmatprep.subr.mxu0 0.0
        %2912 = vmatpush1.msra.mxu0 0.0
        %2913 = vmatprep.subr.mxu0 0.0
        %2914 = vmatpush1.msra.mxu0 0.0
        %2915 = vmatprep.subr.mxu0 0.0
        %2916 = vmatpush1.msra.mxu0 0.0
        %2917 = vmatprep.subr.mxu0 0.0
        %2918 = vmatpush1.msra.mxu0 0.0
        %2919 = vmatprep.subr.mxu0 0.0
        %2920 = vmatpush1.msra.mxu0 0.0
        %2921 = vmatprep.subr.mxu0 0.0
        %2922 = vmatpush1.msra.mxu0 0.0
        %2923 = vmatprep.subr.mxu0 0.0
        %2924 = vmatpush1.msra.mxu0 0.0
        %2925 = vmatprep.subr.mxu0 0.0
        %2926 = vmatpush1.msra.mxu0 0.0
        %2927 = vmatprep.subr.mxu0 0.0
        %2928 = vmatpush1.msra.mxu0 0.0
        %2929 = vmatprep.subr.mxu0 0.0
        %2930 = vmatpush1.msra.mxu0 0.0
        %2931 = vmatprep.subr.mxu0 0.0
        %2932 = vmatpush1.msra.mxu0 0.0
        %2933 = vmatprep.subr.mxu0 0.0
        %2934 = vmatpush1.msra.mxu0 0.0
        %2935 = vmatprep.subr.mxu0 0.0
        %2936 = vmatpush1.msra.mxu0 0.0
        %2937 = vmatprep.subr.mxu0 0.0
        %2938 = vmatpush1.msra.mxu0 0.0
        %2939 = vmatprep.subr.mxu0 0.0
        %2940 = vmatpush1.msra.mxu0 0.0
        %2941 = vmatprep.subr.mxu0 0.0
        %2942 = vmatpush1.msra.mxu0 0.0
        %2943 = vmatprep.subr.mxu0 0.0
        %2944 = vmatpush1.msra.mxu0 0.0
        %2945 = vmatprep.subr.mxu0 0.0
        %2946 = vmatpush1.msra.mxu0 0.0
        %2947 = vmatprep.subr.mxu0 0.0
        %2948 = vmatpush1.msra.mxu0 0.0
        %2949 = vmatprep.subr.mxu0 0.0
        %2950 = vmatpush1.msra.mxu0 0.0
        %2951 = vmatprep.subr.mxu0 0.0
        %2952 = vmatpush1.msra.mxu0 0.0
        %2953 = vmatprep.subr.mxu0 0.0
        %2954 = vmatpush1.msra.mxu0 0.0
        %2955 = vmatprep.subr.mxu0 0.0
        %2956 = vmatpush1.msra.mxu0 0.0
        %2957 = vmatprep.subr.mxu0 0.0
        %2958 = vmatpush1.msra.mxu0 0.0
        %2959 = vmatprep.subr.mxu0 0.0
        %2960 = vmatpush1.msra.mxu0 0.0
        %2961 = vmatprep.subr.mxu0 0.0
        %2962 = vmatpush1.msra.mxu0 0.0
        %2963 = vmatprep.subr.mxu0 0.0
        %2964 = vmatpush1.msra.mxu0 0.0
        %2965 = vmatprep.subr.mxu0 0.0
        %2966 = vmatpush1.msra.mxu0 0.0
        %2967 = vmatprep.subr.mxu0 0.0
        %2968 = vmatpush1.msra.mxu0 0.0
        %2969 = vmatprep.subr.mxu0 0.0
        %2970 = vmatpush1.msra.mxu0 0.0
        %2971 = vmatprep.mubr.f32.mxu0 0.0
        %2972 = vmatmul.mubr.f32.gmra.mrb[0].mxu0 %v2480
        %v2973 = vpop.f32.mrb[0].mxu0
        %v2974 = vadd.f32 0.0, %v2973
        %v2975 = vpop.f32.mrb[0].mxu0
        %2976 = vmatprep.mubr.f32.mxu0 0.0
        %2977 = vmatmul.mubr.f32.gmra.mrb[0].mxu0 %v2483
        %v2978 = vpop.f32.mrb[0].mxu0
        %v2979 = vadd.f32 0.0, %v2978
        %v2980 = vpop.f32.mrb[0].mxu0
        %2981 = vmatprep.mubr.f32.mxu0 0.0
        %2982 = vmatmul.mubr.f32.gmra.mrb[0].mxu0 %v2486
        %v2983 = vpop.f32.mrb[0].mxu0
        %v2984 = vadd.f32 0.0, %v2983
        %v2985 = vpop.f32.mrb[0].mxu0
        %2986 = vdwg.mxu0
        %v2987 = vmul.f32 %v2825, %v2974
        %v2988 = vmul.f32 %v2827, %v2979
        %v2989 = vmul.f32 %v2829, %v2984
        %v2991 = vsel %vm1997, %v2987, 0
        %v2994 = vsel %vm1997, %v2988, 0
        %v2997 = vsel %vm1997, %v2989, 0
        %2999 = vmatprep.subr.mxu0 0.0
        %3000 = vmatpush1.msra.mxu0 %v2027
        %3001 = vmatprep.subr.mxu0 0.0
        %3002 = vmatpush1.msra.mxu0 0.0
        %3003 = vmatprep.subr.mxu0 0.0
        %3004 = vmatpush1.msra.mxu0 0.0
        %3005 = vmatprep.subr.mxu0 0.0
        %3006 = vmatpush1.msra.mxu0 0.0
        %3007 = vmatprep.subr.mxu0 0.0
        %3008 = vmatpush1.msra.mxu0 0.0
        %3009 = vmatprep.subr.mxu0 0.0
        %3010 = vmatpush1.msra.mxu0 0.0
        %3011 = vmatprep.subr.mxu0 0.0
        %3012 = vmatpush1.msra.mxu0 0.0
        %3013 = vmatprep.subr.mxu0 0.0
        %3014 = vmatpush1.msra.mxu0 0.0
        %3015 = vmatprep.subr.mxu0 0.0
        %3016 = vmatpush1.msra.mxu0 0.0
        %3017 = vmatprep.subr.mxu0 0.0
        %3018 = vmatpush1.msra.mxu0 0.0
        %3019 = vmatprep.subr.mxu0 0.0
        %3020 = vmatpush1.msra.mxu0 0.0
        %3021 = vmatprep.subr.mxu0 0.0
        %3022 = vmatpush1.msra.mxu0 0.0
        %3023 = vmatprep.subr.mxu0 0.0
        %3024 = vmatpush1.msra.mxu0 0.0
        %3025 = vmatprep.subr.mxu0 0.0
        %3026 = vmatpush1.msra.mxu0 0.0
        %3027 = vmatprep.subr.mxu0 0.0
        %3028 = vmatpush1.msra.mxu0 0.0
        %3029 = vmatprep.subr.mxu0 0.0
        %3030 = vmatpush1.msra.mxu0 0.0
        %3031 = vmatprep.subr.mxu0 0.0
        %3032 = vmatpush1.msra.mxu0 0.0
        %3033 = vmatprep.subr.mxu0 0.0
        %3034 = vmatpush1.msra.mxu0 0.0
        %3035 = vmatprep.subr.mxu0 0.0
        %3036 = vmatpush1.msra.mxu0 0.0
        %3037 = vmatprep.subr.mxu0 0.0
        %3038 = vmatpush1.msra.mxu0 0.0
        %3039 = vmatprep.subr.mxu0 0.0
        %3040 = vmatpush1.msra.mxu0 0.0
        %3041 = vmatprep.subr.mxu0 0.0
        %3042 = vmatpush1.msra.mxu0 0.0
        %3043 = vmatprep.subr.mxu0 0.0
        %3044 = vmatpush1.msra.mxu0 0.0
        %3045 = vmatprep.subr.mxu0 0.0
        %3046 = vmatpush1.msra.mxu0 0.0
        %3047 = vmatprep.subr.mxu0 0.0
        %3048 = vmatpush1.msra.mxu0 0.0
        %3049 = vmatprep.subr.mxu0 0.0
        %3050 = vmatpush1.msra.mxu0 0.0
        %3051 = vmatprep.subr.mxu0 0.0
        %3052 = vmatpush1.msra.mxu0 0.0
        %3053 = vmatprep.subr.mxu0 0.0
        %3054 = vmatpush1.msra.mxu0 0.0
        %3055 = vmatprep.subr.mxu0 0.0
        %3056 = vmatpush1.msra.mxu0 0.0
        %3057 = vmatprep.subr.mxu0 0.0
        %3058 = vmatpush1.msra.mxu0 0.0
        %3059 = vmatprep.subr.mxu0 0.0
        %3060 = vmatpush1.msra.mxu0 0.0
        %3061 = vmatprep.subr.mxu0 0.0
        %3062 = vmatpush1.msra.mxu0 0.0
        %3063 = vmatprep.mubr.f32.mxu0 0.0
        %3064 = vmatmul.mubr.f32.gmra.mrb[0].mxu0 %v2991
        %v3065 = vpop.f32.mrb[0].mxu0
        %v3066 = vadd.f32 0.0, %v3065
        %v3067 = vpop.f32.mrb[0].mxu0
        %3068 = vmatprep.mubr.f32.mxu0 0.0
        %3069 = vmatmul.mubr.f32.gmra.mrb[0].mxu0 %v2994
        %v3070 = vpop.f32.mrb[0].mxu0
        %v3071 = vadd.f32 0.0, %v3070
        %v3072 = vpop.f32.mrb[0].mxu0
        %3073 = vmatprep.mubr.f32.mxu0 0.0
        %3074 = vmatmul.mubr.f32.gmra.mrb[0].mxu0 %v2997
        %v3075 = vpop.f32.mrb[0].mxu0
        %v3076 = vadd.f32 0.0, %v3075
        %v3077 = vpop.f32.mrb[0].mxu0
        %3078 = vdwg.mxu0
        %v3079 = vmul.f32 %v3066, %v2215
        %v3080 = vmul.f32 %v3071, %v2220
        %v3081 = vmul.f32 %v3076, %v2225
        %v3083 = vsel %vm1308, %v3081, 0
        %3085 = vmatprep.subr.mxu0 0.0
        %3086 = vmatpush1.msra.mxu0 %v3079
        %3087 = vmatprep.subr.mxu0 0.0
        %3088 = vmatpush1.msra.mxu0 %v3080
        %3089 = vmatprep.subr.mxu0 0.0
        %3090 = vmatpush1.msra.mxu0 %v3083
        %3091 = vmatprep.subr.mxu0 0.0
        %3092 = vmatpush1.msra.mxu0 0.0
        %3093 = vmatprep.subr.mxu0 0.0
        %3094 = vmatpush1.msra.mxu0 0.0
        %3095 = vmatprep.subr.mxu0 0.0
        %3096 = vmatpush1.msra.mxu0 0.0
        %3097 = vmatprep.subr.mxu0 0.0
        %3098 = vmatpush1.msra.mxu0 0.0
        %3099 = vmatprep.subr.mxu0 0.0
        %3100 = vmatpush1.msra.mxu0 0.0
        %3101 = vmatprep.subr.mxu0 0.0
        %3102 = vmatpush1.msra.mxu0 0.0
        %3103 = vmatprep.subr.mxu0 0.0
        %3104 = vmatpush1.msra.mxu0 0.0
        %3105 = vmatprep.subr.mxu0 0.0
        %3106 = vmatpush1.msra.mxu0 0.0
        %3107 = vmatprep.subr.mxu0 0.0
        %3108 = vmatpush1.msra.mxu0 0.0
        %3109 = vmatprep.subr.mxu0 0.0
        %3110 = vmatpush1.msra.mxu0 0.0
        %3111 = vmatprep.subr.mxu0 0.0
        %3112 = vmatpush1.msra.mxu0 0.0
        %3113 = vmatprep.subr.mxu0 0.0
        %3114 = vmatpush1.msra.mxu0 0.0
        %3115 = vmatprep.subr.mxu0 0.0
        %3116 = vmatpush1.msra.mxu0 0.0
        %3117 = vmatprep.subr.mxu0 0.0
        %3118 = vmatpush1.msra.mxu0 0.0
        %3119 = vmatprep.subr.mxu0 0.0
        %3120 = vmatpush1.msra.mxu0 0.0
        %3121 = vmatprep.subr.mxu0 0.0
        %3122 = vmatpush1.msra.mxu0 0.0
        %3123 = vmatprep.subr.mxu0 0.0
        %3124 = vmatpush1.msra.mxu0 0.0
        %3125 = vmatprep.subr.mxu0 0.0
        %3126 = vmatpush1.msra.mxu0 0.0
        %3127 = vmatprep.subr.mxu0 0.0
        %3128 = vmatpush1.msra.mxu0 0.0
        %3129 = vmatprep.subr.mxu0 0.0
        %3130 = vmatpush1.msra.mxu0 0.0
        %3131 = vmatprep.subr.mxu0 0.0
        %3132 = vmatpush1.msra.mxu0 0.0
        %3133 = vmatprep.subr.mxu0 0.0
        %3134 = vmatpush1.msra.mxu0 0.0
        %3135 = vmatprep.subr.mxu0 0.0
        %3136 = vmatpush1.msra.mxu0 0.0
        %3137 = vmatprep.subr.mxu0 0.0
        %3138 = vmatpush1.msra.mxu0 0.0
        %3139 = vmatprep.subr.mxu0 0.0
        %3140 = vmatpush1.msra.mxu0 0.0
        %3141 = vmatprep.subr.mxu0 0.0
        %3142 = vmatpush1.msra.mxu0 0.0
        %3143 = vmatprep.subr.mxu0 0.0
        %3144 = vmatpush1.msra.mxu0 0.0
        %3145 = vmatprep.subr.mxu0 0.0
        %3146 = vmatpush1.msra.mxu0 0.0
        %3147 = vmatprep.subr.mxu0 0.0
        %3148 = vmatpush1.msra.mxu0 0.0
        %3149 = vmatprep.mubr.f32.mxu0 0.0
        %3150 = vmatmul.mubr.f32.gmra.mrb[0].mxu0 %v2241
        %v3151 = vpop.f32.mrb[0].mxu0
        %v3152 = vadd.f32 0.0, %v3151
        %v3153 = vpop.f32.mrb[0].mxu0
        %3154 = vdwg.mxu0
        %v3155 = vld [vmem:[%s923] sm:$0xff]
        %v3156 = vld [vmem:[%s923 + $0x8] sm:$0xff]
        %v3157 = vld [vmem:[%s923 + $0x10] sm:$0xff]
        %v3158 = vld [vmem:[%s923 + $0x18] sm:$0xff]
        %v3159 = vld [vmem:[%s923 + $0x20] sm:$0xf]
        %v3160 = vld [vmem:[%s15] sm:$0xff]
        %v3161 = vld [vmem:[%s15 + $0x8] sm:$0xff]
        %v3162 = vld [vmem:[%s15 + $0x10] sm:$0xff]
        %v3163 = vld [vmem:[%s15 + $0x18] sm:$0xff]
        %v3164 = vld [vmem:[%s16] sm:$0xff]
        %v3165 = vld [vmem:[%s16 + $0x8] sm:$0xff]
        %v3166 = vld [vmem:[%s16 + $0x10] sm:$0xff]
        %v3167 = vld [vmem:[%s16 + $0x18] sm:$0xff]
        %v3168 = vld [vmem:[#allocation13] sm:$0xff]
        %v3169 = vld [vmem:[#allocation13 + $0x8] sm:$0xff]
        %v3170 = vld [vmem:[#allocation13 + $0x10] sm:$0xff]
        %v3171 = vld [vmem:[#allocation13 + $0x18] sm:$0xff]
        %v3172 = vld [vmem:[#allocation15] sm:$0xff]
        %v3173 = vld [vmem:[#allocation15 + $0x8] sm:$0xff]
        %v3174 = vld [vmem:[#allocation15 + $0x10] sm:$0xff]
        %v3175 = vld [vmem:[#allocation15 + $0x18] sm:$0xff]
        %v3176 = vld [vmem:[#allocation16] sm:$0x7]
        %v3177 = vld [vmem:[%s8] sm:$0xff]
        %v3178 = vld [vmem:[%s8 + $0x8] sm:$0xff]
        %v3179 = vld [vmem:[%s8 + $0x10] sm:$0xff]
        %v3180 = vld [vmem:[%s8 + $0x18] sm:$0xff]
        %v3181 = vld [vmem:[%s8 + $0x20] sm:$0xf]
        %v3182 = vld [vmem:[%s9] sm:$0xff]
        %v3183 = vld [vmem:[%s9 + $0x8] sm:$0xff]
        %v3184 = vld [vmem:[%s9 + $0x10] sm:$0xff]
        %v3185 = vld [vmem:[%s9 + $0x18] sm:$0xff]
        %v3186 = vld [vmem:[%s9 + $0x20] sm:$0xf]
        %v3187 = vld [vmem:[%s10] sm:$0x3f]
        %v3189 = vsel %vm1053, %v3152, 0
        %3191 = vmatprep.subr.mxu0 0.0
        %3192 = vmatpush1.msra.mxu0 %v3160
        %3193 = vmatprep.subr.mxu0 0.0
        %3194 = vmatpush1.msra.mxu0 %v3161
        %3195 = vmatprep.subr.mxu0 0.0
        %3196 = vmatpush1.msra.mxu0 %v3162
        %3197 = vmatprep.subr.mxu0 0.0
        %3198 = vmatpush1.msra.mxu0 %v3163
        %3199 = vmatprep.subr.mxu0 0.0
        %3200 = vmatpush1.msra.mxu0 0.0
        %3201 = vmatprep.subr.mxu0 0.0
        %3202 = vmatpush1.msra.mxu0 0.0
        %3203 = vmatprep.subr.mxu0 0.0
        %3204 = vmatpush1.msra.mxu0 0.0
        %3205 = vmatprep.subr.mxu0 0.0
        %3206 = vmatpush1.msra.mxu0 0.0
        %3207 = vmatprep.subr.mxu0 0.0
        %3208 = vmatpush1.msra.mxu0 0.0
        %3209 = vmatprep.subr.mxu0 0.0
        %3210 = vmatpush1.msra.mxu0 0.0
        %3211 = vmatprep.subr.mxu0 0.0
        %3212 = vmatpush1.msra.mxu0 0.0
        %3213 = vmatprep.subr.mxu0 0.0
        %3214 = vmatpush1.msra.mxu0 0.0
        %3215 = vmatprep.subr.mxu0 0.0
        %3216 = vmatpush1.msra.mxu0 0.0
        %3217 = vmatprep.subr.mxu0 0.0
        %3218 = vmatpush1.msra.mxu0 0.0
        %3219 = vmatprep.subr.mxu0 0.0
        %3220 = vmatpush1.msra.mxu0 0.0
        %3221 = vmatprep.subr.mxu0 0.0
        %3222 = vmatpush1.msra.mxu0 0.0
        %3223 = vmatprep.subr.mxu0 0.0
        %3224 = vmatpush1.msra.mxu0 0.0
        %3225 = vmatprep.subr.mxu0 0.0
        %3226 = vmatpush1.msra.mxu0 0.0
        %3227 = vmatprep.subr.mxu0 0.0
        %3228 = vmatpush1.msra.mxu0 0.0
        %3229 = vmatprep.subr.mxu0 0.0
        %3230 = vmatpush1.msra.mxu0 0.0
        %3231 = vmatprep.subr.mxu0 0.0
        %3232 = vmatpush1.msra.mxu0 0.0
        %3233 = vmatprep.subr.mxu0 0.0
        %3234 = vmatpush1.msra.mxu0 0.0
        %3235 = vmatprep.subr.mxu0 0.0
        %3236 = vmatpush1.msra.mxu0 0.0
        %3237 = vmatprep.subr.mxu0 0.0
        %3238 = vmatpush1.msra.mxu0 0.0
        %3239 = vmatprep.subr.mxu0 0.0
        %3240 = vmatpush1.msra.mxu0 0.0
        %3241 = vmatprep.subr.mxu0 0.0
        %3242 = vmatpush1.msra.mxu0 0.0
        %3243 = vmatprep.subr.mxu0 0.0
        %3244 = vmatpush1.msra.mxu0 0.0
        %3245 = vmatprep.subr.mxu0 0.0
        %3246 = vmatpush1.msra.mxu0 0.0
        %3247 = vmatprep.subr.mxu0 0.0
        %3248 = vmatpush1.msra.mxu0 0.0
        %3249 = vmatprep.subr.mxu0 0.0
        %3250 = vmatpush1.msra.mxu0 0.0
        %3251 = vmatprep.subr.mxu0 0.0
        %3252 = vmatpush1.msra.mxu0 0.0
        %3253 = vmatprep.subr.mxu0 0.0
        %3254 = vmatpush1.msra.mxu0 0.0
        %3255 = vmatprep.mubr.f32.mxu0 0.0
        %3256 = vmatmul.mubr.f32.gmra.mrb[0].mxu0 %v3189
        %v3257 = vpop.f32.mrb[0].mxu0
        %v3258 = vadd.f32 0.0, %v3257
        %v3259 = vpop.f32.mrb[0].mxu0
        %3260 = vdwg.mxu0
        %3261 = vmatprep.subr.mxu0 0.0
        %3262 = vmatpush1.msra.mxu0 %v3164
        %3263 = vmatprep.subr.mxu0 0.0
        %3264 = vmatpush1.msra.mxu0 %v3165
        %3265 = vmatprep.subr.mxu0 0.0
        %3266 = vmatpush1.msra.mxu0 %v3166
        %3267 = vmatprep.subr.mxu0 0.0
        %3268 = vmatpush1.msra.mxu0 %v3167
        %3269 = vmatprep.subr.mxu0 0.0
        %3270 = vmatpush1.msra.mxu0 0.0
        %3271 = vmatprep.subr.mxu0 0.0
        %3272 = vmatpush1.msra.mxu0 0.0
        %3273 = vmatprep.subr.mxu0 0.0
        %3274 = vmatpush1.msra.mxu0 0.0
        %3275 = vmatprep.subr.mxu0 0.0
        %3276 = vmatpush1.msra.mxu0 0.0
        %3277 = vmatprep.subr.mxu0 0.0
        %3278 = vmatpush1.msra.mxu0 0.0
        %3279 = vmatprep.subr.mxu0 0.0
        %3280 = vmatpush1.msra.mxu0 0.0
        %3281 = vmatprep.subr.mxu0 0.0
        %3282 = vmatpush1.msra.mxu0 0.0
        %3283 = vmatprep.subr.mxu0 0.0
        %3284 = vmatpush1.msra.mxu0 0.0
        %3285 = vmatprep.subr.mxu0 0.0
        %3286 = vmatpush1.msra.mxu0 0.0
        %3287 = vmatprep.subr.mxu0 0.0
        %3288 = vmatpush1.msra.mxu0 0.0
        %3289 = vmatprep.subr.mxu0 0.0
        %3290 = vmatpush1.msra.mxu0 0.0
        %3291 = vmatprep.subr.mxu0 0.0
        %3292 = vmatpush1.msra.mxu0 0.0
        %3293 = vmatprep.subr.mxu0 0.0
        %3294 = vmatpush1.msra.mxu0 0.0
        %3295 = vmatprep.subr.mxu0 0.0
        %3296 = vmatpush1.msra.mxu0 0.0
        %3297 = vmatprep.subr.mxu0 0.0
        %3298 = vmatpush1.msra.mxu0 0.0
        %3299 = vmatprep.subr.mxu0 0.0
        %3300 = vmatpush1.msra.mxu0 0.0
        %3301 = vmatprep.subr.mxu0 0.0
        %3302 = vmatpush1.msra.mxu0 0.0
        %3303 = vmatprep.subr.mxu0 0.0
        %3304 = vmatpush1.msra.mxu0 0.0
        %3305 = vmatprep.subr.mxu0 0.0
        %3306 = vmatpush1.msra.mxu0 0.0
        %3307 = vmatprep.subr.mxu0 0.0
        %3308 = vmatpush1.msra.mxu0 0.0
        %3309 = vmatprep.subr.mxu0 0.0
        %3310 = vmatpush1.msra.mxu0 0.0
        %3311 = vmatprep.subr.mxu0 0.0
        %3312 = vmatpush1.msra.mxu0 0.0
        %3313 = vmatprep.subr.mxu0 0.0
        %3314 = vmatpush1.msra.mxu0 0.0
        %3315 = vmatprep.subr.mxu0 0.0
        %3316 = vmatpush1.msra.mxu0 0.0
        %3317 = vmatprep.subr.mxu0 0.0
        %3318 = vmatpush1.msra.mxu0 0.0
        %3319 = vmatprep.subr.mxu0 0.0
        %3320 = vmatpush1.msra.mxu0 0.0
        %3321 = vmatprep.subr.mxu0 0.0
        %3322 = vmatpush1.msra.mxu0 0.0
        %3323 = vmatprep.subr.mxu0 0.0
        %3324 = vmatpush1.msra.mxu0 0.0
        %3325 = vmatprep.mubr.f32.mxu0 0.0
        %3326 = vmatmul.mubr.f32.gmra.mrb[0].mxu0 %v3189
        %v3327 = vpop.f32.mrb[0].mxu0
        %v3328 = vadd.f32 0.0, %v3327
        %v3329 = vpop.f32.mrb[0].mxu0
        %3330 = vdwg.mxu0
        %3331 = vmatprep.subr.mxu0 0.0
        %3332 = vmatpush1.msra.mxu0 %v3168
        %3333 = vmatprep.subr.mxu0 0.0
        %3334 = vmatpush1.msra.mxu0 %v3169
        %3335 = vmatprep.subr.mxu0 0.0
        %3336 = vmatpush1.msra.mxu0 %v3170
        %3337 = vmatprep.subr.mxu0 0.0
        %3338 = vmatpush1.msra.mxu0 %v3171
        %3339 = vmatprep.subr.mxu0 0.0
        %3340 = vmatpush1.msra.mxu0 0.0
        %3341 = vmatprep.subr.mxu0 0.0
        %3342 = vmatpush1.msra.mxu0 0.0
        %3343 = vmatprep.subr.mxu0 0.0
        %3344 = vmatpush1.msra.mxu0 0.0
        %3345 = vmatprep.subr.mxu0 0.0
        %3346 = vmatpush1.msra.mxu0 0.0
        %3347 = vmatprep.subr.mxu0 0.0
        %3348 = vmatpush1.msra.mxu0 0.0
        %3349 = vmatprep.subr.mxu0 0.0
        %3350 = vmatpush1.msra.mxu0 0.0
        %3351 = vmatprep.subr.mxu0 0.0
        %3352 = vmatpush1.msra.mxu0 0.0
        %3353 = vmatprep.subr.mxu0 0.0
        %3354 = vmatpush1.msra.mxu0 0.0
        %3355 = vmatprep.subr.mxu0 0.0
        %3356 = vmatpush1.msra.mxu0 0.0
        %3357 = vmatprep.subr.mxu0 0.0
        %3358 = vmatpush1.msra.mxu0 0.0
        %3359 = vmatprep.subr.mxu0 0.0
        %3360 = vmatpush1.msra.mxu0 0.0
        %3361 = vmatprep.subr.mxu0 0.0
        %3362 = vmatpush1.msra.mxu0 0.0
        %3363 = vmatprep.subr.mxu0 0.0
        %3364 = vmatpush1.msra.mxu0 0.0
        %3365 = vmatprep.subr.mxu0 0.0
        %3366 = vmatpush1.msra.mxu0 0.0
        %3367 = vmatprep.subr.mxu0 0.0
        %3368 = vmatpush1.msra.mxu0 0.0
        %3369 = vmatprep.subr.mxu0 0.0
        %3370 = vmatpush1.msra.mxu0 0.0
        %3371 = vmatprep.subr.mxu0 0.0
        %3372 = vmatpush1.msra.mxu0 0.0
        %3373 = vmatprep.subr.mxu0 0.0
        %3374 = vmatpush1.msra.mxu0 0.0
        %3375 = vmatprep.subr.mxu0 0.0
        %3376 = vmatpush1.msra.mxu0 0.0
        %3377 = vmatprep.subr.mxu0 0.0
        %3378 = vmatpush1.msra.mxu0 0.0
        %3379 = vmatprep.subr.mxu0 0.0
        %3380 = vmatpush1.msra.mxu0 0.0
        %3381 = vmatprep.subr.mxu0 0.0
        %3382 = vmatpush1.msra.mxu0 0.0
        %3383 = vmatprep.subr.mxu0 0.0
        %3384 = vmatpush1.msra.mxu0 0.0
        %3385 = vmatprep.subr.mxu0 0.0
        %3386 = vmatpush1.msra.mxu0 0.0
        %3387 = vmatprep.subr.mxu0 0.0
        %3388 = vmatpush1.msra.mxu0 0.0
        %3389 = vmatprep.subr.mxu0 0.0
        %3390 = vmatpush1.msra.mxu0 0.0
        %3391 = vmatprep.subr.mxu0 0.0
        %3392 = vmatpush1.msra.mxu0 0.0
        %3393 = vmatprep.subr.mxu0 0.0
        %3394 = vmatpush1.msra.mxu0 0.0
        %3395 = vmatprep.mubr.f32.mxu0 0.0
        %3396 = vmatmul.mubr.f32.gmra.mrb[0].mxu0 %v3189
        %v3397 = vpop.f32.mrb[0].mxu0
        %v3398 = vadd.f32 0.0, %v3397
        %v3399 = vpop.f32.mrb[0].mxu0
        %3400 = vdwg.mxu0
        %v3402 = vsel %vm2478, %v3177, 0
        %v3405 = vsel %vm2478, %v3178, 0
        %v3408 = vsel %vm2478, %v3179, 0
        %v3411 = vsel %vm2478, %v3180, 0
        %v3414 = vsel %vm2478, %v3181, 0
        %v3417 = vsel %vm2488, %v3258, 0
        %3419 = vmatprep.subr.mxu0 0.0
        %3420 = vmatpush1.msra.mxu0 %v3417
        %3421 = vmatprep.subr.mxu0 0.0
        %3422 = vmatpush1.msra.mxu0 0.0
        %3423 = vmatprep.subr.mxu0 0.0
        %3424 = vmatpush1.msra.mxu0 0.0
        %3425 = vmatprep.subr.mxu0 0.0
        %3426 = vmatpush1.msra.mxu0 0.0
        %3427 = vmatprep.subr.mxu0 0.0
        %3428 = vmatpush1.msra.mxu0 0.0
        %3429 = vmatprep.subr.mxu0 0.0
        %3430 = vmatpush1.msra.mxu0 0.0
        %3431 = vmatprep.subr.mxu0 0.0
        %3432 = vmatpush1.msra.mxu0 0.0
        %3433 = vmatprep.subr.mxu0 0.0
        %3434 = vmatpush1.msra.mxu0 0.0
        %3435 = vmatprep.subr.mxu0 0.0
        %3436 = vmatpush1.msra.mxu0 0.0
        %3437 = vmatprep.subr.mxu0 0.0
        %3438 = vmatpush1.msra.mxu0 0.0
        %3439 = vmatprep.subr.mxu0 0.0
        %3440 = vmatpush1.msra.mxu0 0.0
        %3441 = vmatprep.subr.mxu0 0.0
        %3442 = vmatpush1.msra.mxu0 0.0
        %3443 = vmatprep.subr.mxu0 0.0
        %3444 = vmatpush1.msra.mxu0 0.0
        %3445 = vmatprep.subr.mxu0 0.0
        %3446 = vmatpush1.msra.mxu0 0.0
        %3447 = vmatprep.subr.mxu0 0.0
        %3448 = vmatpush1.msra.mxu0 0.0
        %3449 = vmatprep.subr.mxu0 0.0
        %3450 = vmatpush1.msra.mxu0 0.0
        %3451 = vmatprep.subr.mxu0 0.0
        %3452 = vmatpush1.msra.mxu0 0.0
        %3453 = vmatprep.subr.mxu0 0.0
        %3454 = vmatpush1.msra.mxu0 0.0
        %3455 = vmatprep.subr.mxu0 0.0
        %3456 = vmatpush1.msra.mxu0 0.0
        %3457 = vmatprep.subr.mxu0 0.0
        %3458 = vmatpush1.msra.mxu0 0.0
        %3459 = vmatprep.subr.mxu0 0.0
        %3460 = vmatpush1.msra.mxu0 0.0
        %3461 = vmatprep.subr.mxu0 0.0
        %3462 = vmatpush1.msra.mxu0 0.0
        %3463 = vmatprep.subr.mxu0 0.0
        %3464 = vmatpush1.msra.mxu0 0.0
        %3465 = vmatprep.subr.mxu0 0.0
        %3466 = vmatpush1.msra.mxu0 0.0
        %3467 = vmatprep.subr.mxu0 0.0
        %3468 = vmatpush1.msra.mxu0 0.0
        %3469 = vmatprep.subr.mxu0 0.0
        %3470 = vmatpush1.msra.mxu0 0.0
        %3471 = vmatprep.subr.mxu0 0.0
        %3472 = vmatpush1.msra.mxu0 0.0
        %3473 = vmatprep.subr.mxu0 0.0
        %3474 = vmatpush1.msra.mxu0 0.0
        %3475 = vmatprep.subr.mxu0 0.0
        %3476 = vmatpush1.msra.mxu0 0.0
        %3477 = vmatprep.subr.mxu0 0.0
        %3478 = vmatpush1.msra.mxu0 0.0
        %3479 = vmatprep.subr.mxu0 0.0
        %3480 = vmatpush1.msra.mxu0 0.0
        %3481 = vmatprep.subr.mxu0 0.0
        %3482 = vmatpush1.msra.mxu0 0.0
        %3483 = vmatprep.mubr.f32.mxu0 0.0
        %3484 = vmatmul.mubr.f32.gmra.mrb[0].mxu0 %v3402
        %v3485 = vpop.f32.mrb[0].mxu0
        %v3486 = vadd.f32 0.0, %v3485
        %v3487 = vpop.f32.mrb[0].mxu0
        %3488 = vmatprep.mubr.f32.mxu0 0.0
        %3489 = vmatmul.mubr.f32.gmra.mrb[0].mxu0 %v3405
        %v3490 = vpop.f32.mrb[0].mxu0
        %v3491 = vadd.f32 0.0, %v3490
        %v3492 = vpop.f32.mrb[0].mxu0
        %3493 = vmatprep.mubr.f32.mxu0 0.0
        %3494 = vmatmul.mubr.f32.gmra.mrb[0].mxu0 %v3408
        %v3495 = vpop.f32.mrb[0].mxu0
        %v3496 = vadd.f32 0.0, %v3495
        %v3497 = vpop.f32.mrb[0].mxu0
        %3498 = vmatprep.mubr.f32.mxu0 0.0
        %3499 = vmatmul.mubr.f32.gmra.mrb[0].mxu0 %v3411
        %v3500 = vpop.f32.mrb[0].mxu0
        %v3501 = vadd.f32 0.0, %v3500
        %v3502 = vpop.f32.mrb[0].mxu0
        %3503 = vmatprep.mubr.f32.mxu0 0.0
        %3504 = vmatmul.mubr.f32.gmra.mrb[0].mxu0 %v3414
        %v3505 = vpop.f32.mrb[0].mxu0
        %v3506 = vadd.f32 0.0, %v3505
        %v3507 = vpop.f32.mrb[0].mxu0
        %3508 = vdwg.mxu0
        %v3510 = vsel %vm2478, %v3182, 0
        %v3513 = vsel %vm2478, %v3183, 0
        %v3516 = vsel %vm2478, %v3184, 0
        %v3519 = vsel %vm2478, %v3185, 0
        %v3522 = vsel %vm2478, %v3186, 0
        %v3525 = vsel %vm2488, %v3328, 0
        %3527 = vmatprep.subr.mxu0 0.0
        %3528 = vmatpush1.msra.mxu0 %v3525
        %3529 = vmatprep.subr.mxu0 0.0
        %3530 = vmatpush1.msra.mxu0 0.0
        %3531 = vmatprep.subr.mxu0 0.0
        %3532 = vmatpush1.msra.mxu0 0.0
        %3533 = vmatprep.subr.mxu0 0.0
        %3534 = vmatpush1.msra.mxu0 0.0
        %3535 = vmatprep.subr.mxu0 0.0
        %3536 = vmatpush1.msra.mxu0 0.0
        %3537 = vmatprep.subr.mxu0 0.0
        %3538 = vmatpush1.msra.mxu0 0.0
        %3539 = vmatprep.subr.mxu0 0.0
        %3540 = vmatpush1.msra.mxu0 0.0
        %3541 = vmatprep.subr.mxu0 0.0
        %3542 = vmatpush1.msra.mxu0 0.0
        %3543 = vmatprep.subr.mxu0 0.0
        %3544 = vmatpush1.msra.mxu0 0.0
        %3545 = vmatprep.subr.mxu0 0.0
        %3546 = vmatpush1.msra.mxu0 0.0
        %3547 = vmatprep.subr.mxu0 0.0
        %3548 = vmatpush1.msra.mxu0 0.0
        %3549 = vmatprep.subr.mxu0 0.0
        %3550 = vmatpush1.msra.mxu0 0.0
        %3551 = vmatprep.subr.mxu0 0.0
        %3552 = vmatpush1.msra.mxu0 0.0
        %3553 = vmatprep.subr.mxu0 0.0
        %3554 = vmatpush1.msra.mxu0 0.0
        %3555 = vmatprep.subr.mxu0 0.0
        %3556 = vmatpush1.msra.mxu0 0.0
        %3557 = vmatprep.subr.mxu0 0.0
        %3558 = vmatpush1.msra.mxu0 0.0
        %3559 = vmatprep.subr.mxu0 0.0
        %3560 = vmatpush1.msra.mxu0 0.0
        %3561 = vmatprep.subr.mxu0 0.0
        %3562 = vmatpush1.msra.mxu0 0.0
        %3563 = vmatprep.subr.mxu0 0.0
        %3564 = vmatpush1.msra.mxu0 0.0
        %3565 = vmatprep.subr.mxu0 0.0
        %3566 = vmatpush1.msra.mxu0 0.0
        %3567 = vmatprep.subr.mxu0 0.0
        %3568 = vmatpush1.msra.mxu0 0.0
        %3569 = vmatprep.subr.mxu0 0.0
        %3570 = vmatpush1.msra.mxu0 0.0
        %3571 = vmatprep.subr.mxu0 0.0
        %3572 = vmatpush1.msra.mxu0 0.0
        %3573 = vmatprep.subr.mxu0 0.0
        %3574 = vmatpush1.msra.mxu0 0.0
        %3575 = vmatprep.subr.mxu0 0.0
        %3576 = vmatpush1.msra.mxu0 0.0
        %3577 = vmatprep.subr.mxu0 0.0
        %3578 = vmatpush1.msra.mxu0 0.0
        %3579 = vmatprep.subr.mxu0 0.0
        %3580 = vmatpush1.msra.mxu0 0.0
        %3581 = vmatprep.subr.mxu0 0.0
        %3582 = vmatpush1.msra.mxu0 0.0
        %3583 = vmatprep.subr.mxu0 0.0
        %3584 = vmatpush1.msra.mxu0 0.0
        %3585 = vmatprep.subr.mxu0 0.0
        %3586 = vmatpush1.msra.mxu0 0.0
        %3587 = vmatprep.subr.mxu0 0.0
        %3588 = vmatpush1.msra.mxu0 0.0
        %3589 = vmatprep.subr.mxu0 0.0
        %3590 = vmatpush1.msra.mxu0 0.0
        %3591 = vmatprep.mubr.f32.mxu0 0.0
        %3592 = vmatmul.mubr.f32.gmra.mrb[0].mxu0 %v3510
        %v3593 = vpop.f32.mrb[0].mxu0
        %v3594 = vadd.f32 0.0, %v3593
        %v3595 = vpop.f32.mrb[0].mxu0
        %3596 = vmatprep.mubr.f32.mxu0 0.0
        %3597 = vmatmul.mubr.f32.gmra.mrb[0].mxu0 %v3513
        %v3598 = vpop.f32.mrb[0].mxu0
        %v3599 = vadd.f32 0.0, %v3598
        %v3600 = vpop.f32.mrb[0].mxu0
        %3601 = vmatprep.mubr.f32.mxu0 0.0
        %3602 = vmatmul.mubr.f32.gmra.mrb[0].mxu0 %v3516
        %v3603 = vpop.f32.mrb[0].mxu0
        %v3604 = vadd.f32 0.0, %v3603
        %v3605 = vpop.f32.mrb[0].mxu0
        %3606 = vmatprep.mubr.f32.mxu0 0.0
        %3607 = vmatmul.mubr.f32.gmra.mrb[0].mxu0 %v3519
        %v3608 = vpop.f32.mrb[0].mxu0
        %v3609 = vadd.f32 0.0, %v3608
        %v3610 = vpop.f32.mrb[0].mxu0
        %3611 = vmatprep.mubr.f32.mxu0 0.0
        %3612 = vmatmul.mubr.f32.gmra.mrb[0].mxu0 %v3522
        %v3613 = vpop.f32.mrb[0].mxu0
        %v3614 = vadd.f32 0.0, %v3613
        %v3615 = vpop.f32.mrb[0].mxu0
        %3616 = vdwg.mxu0
        %vm3617 = vcmask 23552
        %v3619 = vsel %vm3617, %v3155, 0
        %v3622 = vsel %vm3617, %v3156, 0
        %v3625 = vsel %vm3617, %v3157, 0
        %v3628 = vsel %vm3617, %v3158, 0
        %v3631 = vsel %vm3617, %v3159, 0
        %vm3633 = vcmask 1042432
        %v3635 = vsel %vm3633, %v3176, 0
        %3637 = vmatprep.subr.mxu0 0.0
        %3638 = vmatpush1.msra.mxu0 %v3635
        %3639 = vmatprep.subr.mxu0 0.0
        %3640 = vmatpush1.msra.mxu0 0.0
        %3641 = vmatprep.subr.mxu0 0.0
        %3642 = vmatpush1.msra.mxu0 0.0
        %3643 = vmatprep.subr.mxu0 0.0
        %3644 = vmatpush1.msra.mxu0 0.0
        %3645 = vmatprep.subr.mxu0 0.0
        %3646 = vmatpush1.msra.mxu0 0.0
        %3647 = vmatprep.subr.mxu0 0.0
        %3648 = vmatpush1.msra.mxu0 0.0
        %3649 = vmatprep.subr.mxu0 0.0
        %3650 = vmatpush1.msra.mxu0 0.0
        %3651 = vmatprep.subr.mxu0 0.0
        %3652 = vmatpush1.msra.mxu0 0.0
        %3653 = vmatprep.subr.mxu0 0.0
        %3654 = vmatpush1.msra.mxu0 0.0
        %3655 = vmatprep.subr.mxu0 0.0
        %3656 = vmatpush1.msra.mxu0 0.0
        %3657 = vmatprep.subr.mxu0 0.0
        %3658 = vmatpush1.msra.mxu0 0.0
        %3659 = vmatprep.subr.mxu0 0.0
        %3660 = vmatpush1.msra.mxu0 0.0
        %3661 = vmatprep.subr.mxu0 0.0
        %3662 = vmatpush1.msra.mxu0 0.0
        %3663 = vmatprep.subr.mxu0 0.0
        %3664 = vmatpush1.msra.mxu0 0.0
        %3665 = vmatprep.subr.mxu0 0.0
        %3666 = vmatpush1.msra.mxu0 0.0
        %3667 = vmatprep.subr.mxu0 0.0
        %3668 = vmatpush1.msra.mxu0 0.0
        %3669 = vmatprep.subr.mxu0 0.0
        %3670 = vmatpush1.msra.mxu0 0.0
        %3671 = vmatprep.subr.mxu0 0.0
        %3672 = vmatpush1.msra.mxu0 0.0
        %3673 = vmatprep.subr.mxu0 0.0
        %3674 = vmatpush1.msra.mxu0 0.0
        %3675 = vmatprep.subr.mxu0 0.0
        %3676 = vmatpush1.msra.mxu0 0.0
        %3677 = vmatprep.subr.mxu0 0.0
        %3678 = vmatpush1.msra.mxu0 0.0
        %3679 = vmatprep.subr.mxu0 0.0
        %3680 = vmatpush1.msra.mxu0 0.0
        %3681 = vmatprep.subr.mxu0 0.0
        %3682 = vmatpush1.msra.mxu0 0.0
        %3683 = vmatprep.subr.mxu0 0.0
        %3684 = vmatpush1.msra.mxu0 0.0
        %3685 = vmatprep.subr.mxu0 0.0
        %3686 = vmatpush1.msra.mxu0 0.0
        %3687 = vmatprep.subr.mxu0 0.0
        %3688 = vmatpush1.msra.mxu0 0.0
        %3689 = vmatprep.subr.mxu0 0.0
        %3690 = vmatpush1.msra.mxu0 0.0
        %3691 = vmatprep.subr.mxu0 0.0
        %3692 = vmatpush1.msra.mxu0 0.0
        %3693 = vmatprep.subr.mxu0 0.0
        %3694 = vmatpush1.msra.mxu0 0.0
        %3695 = vmatprep.subr.mxu0 0.0
        %3696 = vmatpush1.msra.mxu0 0.0
        %3697 = vmatprep.subr.mxu0 0.0
        %3698 = vmatpush1.msra.mxu0 0.0
        %3699 = vmatprep.subr.mxu0 0.0
        %3700 = vmatpush1.msra.mxu0 0.0
        %3701 = vmatprep.mubr.f32.mxu0 0.0
        %3702 = vmatmul.mubr.f32.gmra.mrb[0].mxu0 %v3619
        %v3703 = vpop.f32.mrb[0].mxu0
        %v3704 = vadd.f32 0.0, %v3703
        %v3705 = vpop.f32.mrb[0].mxu0
        %3706 = vmatprep.mubr.f32.mxu0 0.0
        %3707 = vmatmul.mubr.f32.gmra.mrb[0].mxu0 %v3622
        %v3708 = vpop.f32.mrb[0].mxu0
        %v3709 = vadd.f32 0.0, %v3708
        %v3710 = vpop.f32.mrb[0].mxu0
        %3711 = vmatprep.mubr.f32.mxu0 0.0
        %3712 = vmatmul.mubr.f32.gmra.mrb[0].mxu0 %v3625
        %v3713 = vpop.f32.mrb[0].mxu0
        %v3714 = vadd.f32 0.0, %v3713
        %v3715 = vpop.f32.mrb[0].mxu0
        %3716 = vmatprep.mubr.f32.mxu0 0.0
        %3717 = vmatmul.mubr.f32.gmra.mrb[0].mxu0 %v3628
        %v3718 = vpop.f32.mrb[0].mxu0
        %v3719 = vadd.f32 0.0, %v3718
        %v3720 = vpop.f32.mrb[0].mxu0
        %3721 = vmatprep.mubr.f32.mxu0 0.0
        %3722 = vmatmul.mubr.f32.gmra.mrb[0].mxu0 %v3631
        %v3723 = vpop.f32.mrb[0].mxu0
        %v3724 = vadd.f32 0.0, %v3723
        %v3725 = vpop.f32.mrb[0].mxu0
        %3726 = vdwg.mxu0
        %v3727 = vmul.f32 %v3486, %v3594
        %v3728 = vmul.f32 %v3491, %v3599
        %v3729 = vmul.f32 %v3496, %v3604
        %v3730 = vmul.f32 %v3501, %v3609
        %v3731 = vmul.f32 %v3506, %v3614
        %v3733 = vsel %vm1431, %v3727, 0
        %v3736 = vsel %vm1431, %v3728, 0
        %v3739 = vsel %vm1431, %v3729, 0
        %v3742 = vsel %vm1431, %v3730, 0
        %v3745 = vsel %vm1431, %v3731, 0
        %3747 = vmatprep.subr.mxu0 0.0
        %3748 = vmatpush1.msra.mxu0 %v937
        %3749 = vmatprep.subr.mxu0 0.0
        %3750 = vmatpush1.msra.mxu0 %v938
        %3751 = vmatprep.subr.mxu0 0.0
        %3752 = vmatpush1.msra.mxu0 0.0
        %3753 = vmatprep.subr.mxu0 0.0
        %3754 = vmatpush1.msra.mxu0 0.0
        %3755 = vmatprep.subr.mxu0 0.0
        %3756 = vmatpush1.msra.mxu0 0.0
        %3757 = vmatprep.subr.mxu0 0.0
        %3758 = vmatpush1.msra.mxu0 0.0
        %3759 = vmatprep.subr.mxu0 0.0
        %3760 = vmatpush1.msra.mxu0 0.0
        %3761 = vmatprep.subr.mxu0 0.0
        %3762 = vmatpush1.msra.mxu0 0.0
        %3763 = vmatprep.subr.mxu0 0.0
        %3764 = vmatpush1.msra.mxu0 0.0
        %3765 = vmatprep.subr.mxu0 0.0
        %3766 = vmatpush1.msra.mxu0 0.0
        %3767 = vmatprep.subr.mxu0 0.0
        %3768 = vmatpush1.msra.mxu0 0.0
        %3769 = vmatprep.subr.mxu0 0.0
        %3770 = vmatpush1.msra.mxu0 0.0
        %3771 = vmatprep.subr.mxu0 0.0
        %3772 = vmatpush1.msra.mxu0 0.0
        %3773 = vmatprep.subr.mxu0 0.0
        %3774 = vmatpush1.msra.mxu0 0.0
        %3775 = vmatprep.subr.mxu0 0.0
        %3776 = vmatpush1.msra.mxu0 0.0
        %3777 = vmatprep.subr.mxu0 0.0
        %3778 = vmatpush1.msra.mxu0 0.0
        %3779 = vmatprep.subr.mxu0 0.0
        %3780 = vmatpush1.msra.mxu0 0.0
        %3781 = vmatprep.subr.mxu0 0.0
        %3782 = vmatpush1.msra.mxu0 0.0
        %3783 = vmatprep.subr.mxu0 0.0
        %3784 = vmatpush1.msra.mxu0 0.0
        %3785 = vmatprep.subr.mxu0 0.0
        %3786 = vmatpush1.msra.mxu0 0.0
        %3787 = vmatprep.subr.mxu0 0.0
        %3788 = vmatpush1.msra.mxu0 0.0
        %3789 = vmatprep.subr.mxu0 0.0
        %3790 = vmatpush1.msra.mxu0 0.0
        %3791 = vmatprep.subr.mxu0 0.0
        %3792 = vmatpush1.msra.mxu0 0.0
        %3793 = vmatprep.subr.mxu0 0.0
        %3794 = vmatpush1.msra.mxu0 0.0
        %3795 = vmatprep.subr.mxu0 0.0
        %3796 = vmatpush1.msra.mxu0 0.0
        %3797 = vmatprep.subr.mxu0 0.0
        %3798 = vmatpush1.msra.mxu0 0.0
        %3799 = vmatprep.subr.mxu0 0.0
        %3800 = vmatpush1.msra.mxu0 0.0
        %3801 = vmatprep.subr.mxu0 0.0
        %3802 = vmatpush1.msra.mxu0 0.0
        %3803 = vmatprep.subr.mxu0 0.0
        %3804 = vmatpush1.msra.mxu0 0.0
        %3805 = vmatprep.subr.mxu0 0.0
        %3806 = vmatpush1.msra.mxu0 0.0
        %3807 = vmatprep.subr.mxu0 0.0
        %3808 = vmatpush1.msra.mxu0 0.0
        %3809 = vmatprep.subr.mxu0 0.0
        %3810 = vmatpush1.msra.mxu0 0.0
        %3811 = vmatprep.mubr.f32.mxu0 0.0
        %3812 = vmatmul.mubr.f32.gmra.mrb[0].mxu0 %v3733
        %v3813 = vpop.f32.mrb[0].mxu0
        %v3814 = vadd.f32 %v3704, %v3813
        %v3815 = vpop.f32.mrb[0].mxu0
        %3816 = vmatprep.mubr.f32.mxu0 0.0
        %3817 = vmatmul.mubr.f32.gmra.mrb[0].mxu0 %v3736
        %v3818 = vpop.f32.mrb[0].mxu0
        %v3819 = vadd.f32 %v3709, %v3818
        %v3820 = vpop.f32.mrb[0].mxu0
        %3821 = vmatprep.mubr.f32.mxu0 0.0
        %3822 = vmatmul.mubr.f32.gmra.mrb[0].mxu0 %v3739
        %v3823 = vpop.f32.mrb[0].mxu0
        %v3824 = vadd.f32 %v3714, %v3823
        %v3825 = vpop.f32.mrb[0].mxu0
        %3826 = vmatprep.mubr.f32.mxu0 0.0
        %3827 = vmatmul.mubr.f32.gmra.mrb[0].mxu0 %v3742
        %v3828 = vpop.f32.mrb[0].mxu0
        %v3829 = vadd.f32 %v3719, %v3828
        %v3830 = vpop.f32.mrb[0].mxu0
        %3831 = vmatprep.mubr.f32.mxu0 0.0
        %3832 = vmatmul.mubr.f32.gmra.mrb[0].mxu0 %v3745
        %v3833 = vpop.f32.mrb[0].mxu0
        %v3834 = vadd.f32 %v3724, %v3833
        %v3835 = vpop.f32.mrb[0].mxu0
        %3836 = vdwg.mxu0
        %vm3837 = vcmask 293888
        %v3839 = vsel %vm3837, %v3187, 0
        %v3842 = vsel %vm2025, %v3834, 0
        %3844 = vmatprep.subr.mxu0 0.0
        %3845 = vmatpush1.msra.mxu0 %v3814
        %3846 = vmatprep.subr.mxu0 0.0
        %3847 = vmatpush1.msra.mxu0 %v3819
        %3848 = vmatprep.subr.mxu0 0.0
        %3849 = vmatpush1.msra.mxu0 %v3824
        %3850 = vmatprep.subr.mxu0 0.0
        %3851 = vmatpush1.msra.mxu0 %v3829
        %3852 = vmatprep.subr.mxu0 0.0
        %3853 = vmatpush1.msra.mxu0 %v3842
        %3854 = vmatprep.subr.mxu0 0.0
        %3855 = vmatpush1.msra.mxu0 0.0
        %3856 = vmatprep.subr.mxu0 0.0
        %3857 = vmatpush1.msra.mxu0 0.0
        %3858 = vmatprep.subr.mxu0 0.0
        %3859 = vmatpush1.msra.mxu0 0.0
        %3860 = vmatprep.subr.mxu0 0.0
        %3861 = vmatpush1.msra.mxu0 0.0
        %3862 = vmatprep.subr.mxu0 0.0
        %3863 = vmatpush1.msra.mxu0 0.0
        %3864 = vmatprep.subr.mxu0 0.0
        %3865 = vmatpush1.msra.mxu0 0.0
        %3866 = vmatprep.subr.mxu0 0.0
        %3867 = vmatpush1.msra.mxu0 0.0
        %3868 = vmatprep.subr.mxu0 0.0
        %3869 = vmatpush1.msra.mxu0 0.0
        %3870 = vmatprep.subr.mxu0 0.0
        %3871 = vmatpush1.msra.mxu0 0.0
        %3872 = vmatprep.subr.mxu0 0.0
        %3873 = vmatpush1.msra.mxu0 0.0
        %3874 = vmatprep.subr.mxu0 0.0
        %3875 = vmatpush1.msra.mxu0 0.0
        %3876 = vmatprep.subr.mxu0 0.0
        %3877 = vmatpush1.msra.mxu0 0.0
        %3878 = vmatprep.subr.mxu0 0.0
        %3879 = vmatpush1.msra.mxu0 0.0
        %3880 = vmatprep.subr.mxu0 0.0
        %3881 = vmatpush1.msra.mxu0 0.0
        %3882 = vmatprep.subr.mxu0 0.0
        %3883 = vmatpush1.msra.mxu0 0.0
        %3884 = vmatprep.subr.mxu0 0.0
        %3885 = vmatpush1.msra.mxu0 0.0
        %3886 = vmatprep.subr.mxu0 0.0
        %3887 = vmatpush1.msra.mxu0 0.0
        %3888 = vmatprep.subr.mxu0 0.0
        %3889 = vmatpush1.msra.mxu0 0.0
        %3890 = vmatprep.subr.mxu0 0.0
        %3891 = vmatpush1.msra.mxu0 0.0
        %3892 = vmatprep.subr.mxu0 0.0
        %3893 = vmatpush1.msra.mxu0 0.0
        %3894 = vmatprep.subr.mxu0 0.0
        %3895 = vmatpush1.msra.mxu0 0.0
        %3896 = vmatprep.subr.mxu0 0.0
        %3897 = vmatpush1.msra.mxu0 0.0
        %3898 = vmatprep.subr.mxu0 0.0
        %3899 = vmatpush1.msra.mxu0 0.0
        %3900 = vmatprep.subr.mxu0 0.0
        %3901 = vmatpush1.msra.mxu0 0.0
        %3902 = vmatprep.subr.mxu0 0.0
        %3903 = vmatpush1.msra.mxu0 0.0
        %3904 = vmatprep.subr.mxu0 0.0
        %3905 = vmatpush1.msra.mxu0 0.0
        %3906 = vmatprep.subr.mxu0 0.0
        %3907 = vmatpush1.msra.mxu0 0.0
        %3908 = vmatprep.mubr.f32.mxu0 0.0
        %3909 = vmatmul.mubr.f32.gmra.mrb[0].mxu0 %v3839
        %v3910 = vpop.f32.mrb[0].mxu0
        %v3911 = vadd.f32 0.0, %v3910
        %v3912 = vpop.f32.mrb[0].mxu0
        %3913 = vdwg.mxu0
        %v3914 = vmul.f32 %v3911, 0.16666667
        %v3916 = vsel %vm2488, %v3914, 0
        %3918 = vmatprep.subr.mxu0 0.0
        %3919 = vmatpush1.msra.mxu0 %v3916
        %3920 = vmatprep.subr.mxu0 0.0
        %3921 = vmatpush1.msra.mxu0 0.0
        %3922 = vmatprep.subr.mxu0 0.0
        %3923 = vmatpush1.msra.mxu0 0.0
        %3924 = vmatprep.subr.mxu0 0.0
        %3925 = vmatpush1.msra.mxu0 0.0
        %3926 = vmatprep.subr.mxu0 0.0
        %3927 = vmatpush1.msra.mxu0 0.0
        %3928 = vmatprep.subr.mxu0 0.0
        %3929 = vmatpush1.msra.mxu0 0.0
        %3930 = vmatprep.subr.mxu0 0.0
        %3931 = vmatpush1.msra.mxu0 0.0
        %3932 = vmatprep.subr.mxu0 0.0
        %3933 = vmatpush1.msra.mxu0 0.0
        %3934 = vmatprep.subr.mxu0 0.0
        %3935 = vmatpush1.msra.mxu0 0.0
        %3936 = vmatprep.subr.mxu0 0.0
        %3937 = vmatpush1.msra.mxu0 0.0
        %3938 = vmatprep.subr.mxu0 0.0
        %3939 = vmatpush1.msra.mxu0 0.0
        %3940 = vmatprep.subr.mxu0 0.0
        %3941 = vmatpush1.msra.mxu0 0.0
        %3942 = vmatprep.subr.mxu0 0.0
        %3943 = vmatpush1.msra.mxu0 0.0
        %3944 = vmatprep.subr.mxu0 0.0
        %3945 = vmatpush1.msra.mxu0 0.0
        %3946 = vmatprep.subr.mxu0 0.0
        %3947 = vmatpush1.msra.mxu0 0.0
        %3948 = vmatprep.subr.mxu0 0.0
        %3949 = vmatpush1.msra.mxu0 0.0
        %3950 = vmatprep.subr.mxu0 0.0
        %3951 = vmatpush1.msra.mxu0 0.0
        %3952 = vmatprep.subr.mxu0 0.0
        %3953 = vmatpush1.msra.mxu0 0.0
        %3954 = vmatprep.subr.mxu0 0.0
        %3955 = vmatpush1.msra.mxu0 0.0
        %3956 = vmatprep.subr.mxu0 0.0
        %3957 = vmatpush1.msra.mxu0 0.0
        %3958 = vmatprep.subr.mxu0 0.0
        %3959 = vmatpush1.msra.mxu0 0.0
        %3960 = vmatprep.subr.mxu0 0.0
        %3961 = vmatpush1.msra.mxu0 0.0
        %3962 = vmatprep.subr.mxu0 0.0
        %3963 = vmatpush1.msra.mxu0 0.0
        %3964 = vmatprep.subr.mxu0 0.0
        %3965 = vmatpush1.msra.mxu0 0.0
        %3966 = vmatprep.subr.mxu0 0.0
        %3967 = vmatpush1.msra.mxu0 0.0
        %3968 = vmatprep.subr.mxu0 0.0
        %3969 = vmatpush1.msra.mxu0 0.0
        %3970 = vmatprep.subr.mxu0 0.0
        %3971 = vmatpush1.msra.mxu0 0.0
        %3972 = vmatprep.subr.mxu0 0.0
        %3973 = vmatpush1.msra.mxu0 0.0
        %3974 = vmatprep.subr.mxu0 0.0
        %3975 = vmatpush1.msra.mxu0 0.0
        %3976 = vmatprep.subr.mxu0 0.0
        %3977 = vmatpush1.msra.mxu0 0.0
        %3978 = vmatprep.subr.mxu0 0.0
        %3979 = vmatpush1.msra.mxu0 0.0
        %3980 = vmatprep.subr.mxu0 0.0
        %3981 = vmatpush1.msra.mxu0 0.0
        %3982 = vmatprep.mubr.f32.mxu0 0.0
        %3983 = vmatmul.mubr.f32.gmra.mrb[0].mxu0 %v3402
        %v3984 = vpop.f32.mrb[0].mxu0
        %v3985 = vadd.f32 0.0, %v3984
        %v3986 = vpop.f32.mrb[0].mxu0
        %3987 = vmatprep.mubr.f32.mxu0 0.0
        %3988 = vmatmul.mubr.f32.gmra.mrb[0].mxu0 %v3405
        %v3989 = vpop.f32.mrb[0].mxu0
        %v3990 = vadd.f32 0.0, %v3989
        %v3991 = vpop.f32.mrb[0].mxu0
        %3992 = vmatprep.mubr.f32.mxu0 0.0
        %3993 = vmatmul.mubr.f32.gmra.mrb[0].mxu0 %v3408
        %v3994 = vpop.f32.mrb[0].mxu0
        %v3995 = vadd.f32 0.0, %v3994
        %v3996 = vpop.f32.mrb[0].mxu0
        %3997 = vmatprep.mubr.f32.mxu0 0.0
        %3998 = vmatmul.mubr.f32.gmra.mrb[0].mxu0 %v3411
        %v3999 = vpop.f32.mrb[0].mxu0
        %v4000 = vadd.f32 0.0, %v3999
        %v4001 = vpop.f32.mrb[0].mxu0
        %4002 = vmatprep.mubr.f32.mxu0 0.0
        %4003 = vmatmul.mubr.f32.gmra.mrb[0].mxu0 %v3414
        %v4004 = vpop.f32.mrb[0].mxu0
        %v4005 = vadd.f32 0.0, %v4004
        %v4006 = vpop.f32.mrb[0].mxu0
        %4007 = vdwg.mxu0
        %v4008 = vsub.f32 %v3814, %v3985
        %v4009 = vsub.f32 %v3819, %v3990
        %v4010 = vsub.f32 %v3824, %v3995
        %v4011 = vsub.f32 %v3829, %v4000
        %v4012 = vsub.f32 %v3834, %v4005
        %v4013 = vmul.f32 %v4008, 1.442695
        %v4014 = vpow.pop %v4013
        %v4015 = vmul.f32 %v4009, 1.442695
        %v4016 = vpow.pop %v4015
        %v4017 = vmul.f32 %v4010, 1.442695
        %v4018 = vpow.pop %v4017
        %v4019 = vmul.f32 %v4011, 1.442695
        %v4020 = vpow.pop %v4019
        %v4021 = vmul.f32 %v4012, 1.442695
        %v4022 = vpow.pop %v4021
        %v4024 = vsel %vm2025, %v4022, 0
        %4026 = vmatprep.subr.mxu0 0.0
        %4027 = vmatpush1.msra.mxu0 %v4014
        %4028 = vmatprep.subr.mxu0 0.0
        %4029 = vmatpush1.msra.mxu0 %v4016
        %4030 = vmatprep.subr.mxu0 0.0
        %4031 = vmatpush1.msra.mxu0 %v4018
        %4032 = vmatprep.subr.mxu0 0.0
        %4033 = vmatpush1.msra.mxu0 %v4020
        %4034 = vmatprep.subr.mxu0 0.0
        %4035 = vmatpush1.msra.mxu0 %v4024
        %4036 = vmatprep.subr.mxu0 0.0
        %4037 = vmatpush1.msra.mxu0 0.0
        %4038 = vmatprep.subr.mxu0 0.0
        %4039 = vmatpush1.msra.mxu0 0.0
        %4040 = vmatprep.subr.mxu0 0.0
        %4041 = vmatpush1.msra.mxu0 0.0
        %4042 = vmatprep.subr.mxu0 0.0
        %4043 = vmatpush1.msra.mxu0 0.0
        %4044 = vmatprep.subr.mxu0 0.0
        %4045 = vmatpush1.msra.mxu0 0.0
        %4046 = vmatprep.subr.mxu0 0.0
        %4047 = vmatpush1.msra.mxu0 0.0
        %4048 = vmatprep.subr.mxu0 0.0
        %4049 = vmatpush1.msra.mxu0 0.0
        %4050 = vmatprep.subr.mxu0 0.0
        %4051 = vmatpush1.msra.mxu0 0.0
        %4052 = vmatprep.subr.mxu0 0.0
        %4053 = vmatpush1.msra.mxu0 0.0
        %4054 = vmatprep.subr.mxu0 0.0
        %4055 = vmatpush1.msra.mxu0 0.0
        %4056 = vmatprep.subr.mxu0 0.0
        %4057 = vmatpush1.msra.mxu0 0.0
        %4058 = vmatprep.subr.mxu0 0.0
        %4059 = vmatpush1.msra.mxu0 0.0
        %4060 = vmatprep.subr.mxu0 0.0
        %4061 = vmatpush1.msra.mxu0 0.0
        %4062 = vmatprep.subr.mxu0 0.0
        %4063 = vmatpush1.msra.mxu0 0.0
        %4064 = vmatprep.subr.mxu0 0.0
        %4065 = vmatpush1.msra.mxu0 0.0
        %4066 = vmatprep.subr.mxu0 0.0
        %4067 = vmatpush1.msra.mxu0 0.0
        %4068 = vmatprep.subr.mxu0 0.0
        %4069 = vmatpush1.msra.mxu0 0.0
        %4070 = vmatprep.subr.mxu0 0.0
        %4071 = vmatpush1.msra.mxu0 0.0
        %4072 = vmatprep.subr.mxu0 0.0
        %4073 = vmatpush1.msra.mxu0 0.0
        %4074 = vmatprep.subr.mxu0 0.0
        %4075 = vmatpush1.msra.mxu0 0.0
        %4076 = vmatprep.subr.mxu0 0.0
        %4077 = vmatpush1.msra.mxu0 0.0
        %4078 = vmatprep.subr.mxu0 0.0
        %4079 = vmatpush1.msra.mxu0 0.0
        %4080 = vmatprep.subr.mxu0 0.0
        %4081 = vmatpush1.msra.mxu0 0.0
        %4082 = vmatprep.subr.mxu0 0.0
        %4083 = vmatpush1.msra.mxu0 0.0
        %4084 = vmatprep.subr.mxu0 0.0
        %4085 = vmatpush1.msra.mxu0 0.0
        %4086 = vmatprep.subr.mxu0 0.0
        %4087 = vmatpush1.msra.mxu0 0.0
        %4088 = vmatprep.subr.mxu0 0.0
        %4089 = vmatpush1.msra.mxu0 0.0
        %4090 = vmatprep.mubr.f32.mxu0 0.0
        %4091 = vmatmul.mubr.f32.gmra.mrb[0].mxu0 %v3839
        %v4092 = vpop.f32.mrb[0].mxu0
        %v4093 = vadd.f32 0.0, %v4092
        %v4094 = vpop.f32.mrb[0].mxu0
        %4095 = vdwg.mxu0
        %v4096 = vrcp.pop %v4093
        %v4098 = vsel %vm2488, %v4096, 0
        %4100 = vmatprep.subr.mxu0 0.0
        %4101 = vmatpush1.msra.mxu0 %v4098
        %4102 = vmatprep.subr.mxu0 0.0
        %4103 = vmatpush1.msra.mxu0 0.0
        %4104 = vmatprep.subr.mxu0 0.0
        %4105 = vmatpush1.msra.mxu0 0.0
        %4106 = vmatprep.subr.mxu0 0.0
        %4107 = vmatpush1.msra.mxu0 0.0
        %4108 = vmatprep.subr.mxu0 0.0
        %4109 = vmatpush1.msra.mxu0 0.0
        %4110 = vmatprep.subr.mxu0 0.0
        %4111 = vmatpush1.msra.mxu0 0.0
        %4112 = vmatprep.subr.mxu0 0.0
        %4113 = vmatpush1.msra.mxu0 0.0
        %4114 = vmatprep.subr.mxu0 0.0
        %4115 = vmatpush1.msra.mxu0 0.0
        %4116 = vmatprep.subr.mxu0 0.0
        %4117 = vmatpush1.msra.mxu0 0.0
        %4118 = vmatprep.subr.mxu0 0.0
        %4119 = vmatpush1.msra.mxu0 0.0
        %4120 = vmatprep.subr.mxu0 0.0
        %4121 = vmatpush1.msra.mxu0 0.0
        %4122 = vmatprep.subr.mxu0 0.0
        %4123 = vmatpush1.msra.mxu0 0.0
        %4124 = vmatprep.subr.mxu0 0.0
        %4125 = vmatpush1.msra.mxu0 0.0
        %4126 = vmatprep.subr.mxu0 0.0
        %4127 = vmatpush1.msra.mxu0 0.0
        %4128 = vmatprep.subr.mxu0 0.0
        %4129 = vmatpush1.msra.mxu0 0.0
        %4130 = vmatprep.subr.mxu0 0.0
        %4131 = vmatpush1.msra.mxu0 0.0
        %4132 = vmatprep.subr.mxu0 0.0
        %4133 = vmatpush1.msra.mxu0 0.0
        %4134 = vmatprep.subr.mxu0 0.0
        %4135 = vmatpush1.msra.mxu0 0.0
        %4136 = vmatprep.subr.mxu0 0.0
        %4137 = vmatpush1.msra.mxu0 0.0
        %4138 = vmatprep.subr.mxu0 0.0
        %4139 = vmatpush1.msra.mxu0 0.0
        %4140 = vmatprep.subr.mxu0 0.0
        %4141 = vmatpush1.msra.mxu0 0.0
        %4142 = vmatprep.subr.mxu0 0.0
        %4143 = vmatpush1.msra.mxu0 0.0
        %4144 = vmatprep.subr.mxu0 0.0
        %4145 = vmatpush1.msra.mxu0 0.0
        %4146 = vmatprep.subr.mxu0 0.0
        %4147 = vmatpush1.msra.mxu0 0.0
        %4148 = vmatprep.subr.mxu0 0.0
        %4149 = vmatpush1.msra.mxu0 0.0
        %4150 = vmatprep.subr.mxu0 0.0
        %4151 = vmatpush1.msra.mxu0 0.0
        %4152 = vmatprep.subr.mxu0 0.0
        %4153 = vmatpush1.msra.mxu0 0.0
        %4154 = vmatprep.subr.mxu0 0.0
        %4155 = vmatpush1.msra.mxu0 0.0
        %4156 = vmatprep.subr.mxu0 0.0
        %4157 = vmatpush1.msra.mxu0 0.0
        %4158 = vmatprep.subr.mxu0 0.0
        %4159 = vmatpush1.msra.mxu0 0.0
        %4160 = vmatprep.subr.mxu0 0.0
        %4161 = vmatpush1.msra.mxu0 0.0
        %4162 = vmatprep.subr.mxu0 0.0
        %4163 = vmatpush1.msra.mxu0 0.0
        %4164 = vmatprep.mubr.f32.mxu0 0.0
        %4165 = vmatmul.mubr.f32.gmra.mrb[0].mxu0 %v3402
        %v4166 = vpop.f32.mrb[0].mxu0
        %v4167 = vadd.f32 0.0, %v4166
        %v4168 = vpop.f32.mrb[0].mxu0
        %4169 = vmatprep.mubr.f32.mxu0 0.0
        %4170 = vmatmul.mubr.f32.gmra.mrb[0].mxu0 %v3405
        %v4171 = vpop.f32.mrb[0].mxu0
        %v4172 = vadd.f32 0.0, %v4171
        %v4173 = vpop.f32.mrb[0].mxu0
        %4174 = vmatprep.mubr.f32.mxu0 0.0
        %4175 = vmatmul.mubr.f32.gmra.mrb[0].mxu0 %v3408
        %v4176 = vpop.f32.mrb[0].mxu0
        %v4177 = vadd.f32 0.0, %v4176
        %v4178 = vpop.f32.mrb[0].mxu0
        %4179 = vmatprep.mubr.f32.mxu0 0.0
        %4180 = vmatmul.mubr.f32.gmra.mrb[0].mxu0 %v3411
        %v4181 = vpop.f32.mrb[0].mxu0
        %v4182 = vadd.f32 0.0, %v4181
        %v4183 = vpop.f32.mrb[0].mxu0
        %4184 = vmatprep.mubr.f32.mxu0 0.0
        %4185 = vmatmul.mubr.f32.gmra.mrb[0].mxu0 %v3414
        %v4186 = vpop.f32.mrb[0].mxu0
        %v4187 = vadd.f32 0.0, %v4186
        %v4188 = vpop.f32.mrb[0].mxu0
        %4189 = vdwg.mxu0
        %v4190 = vmul.f32 %v4014, %v4167
        %v4191 = vmul.f32 %v4016, %v4172
        %v4192 = vmul.f32 %v4018, %v4177
        %v4193 = vmul.f32 %v4020, %v4182
        %v4194 = vmul.f32 %v4022, %v4187
        %v4196 = vsel %vm1997, %v4190, 0
        %v4199 = vsel %vm1997, %v4191, 0
        %v4202 = vsel %vm1997, %v4192, 0
        %v4205 = vsel %vm1997, %v4193, 0
        %v4208 = vsel %vm1997, %v4194, 0
        %4210 = vmatprep.subr.mxu0 0.0
        %4211 = vmatpush1.msra.mxu0 %v2027
        %4212 = vmatprep.subr.mxu0 0.0
        %4213 = vmatpush1.msra.mxu0 0.0
        %4214 = vmatprep.subr.mxu0 0.0
        %4215 = vmatpush1.msra.mxu0 0.0
        %4216 = vmatprep.subr.mxu0 0.0
        %4217 = vmatpush1.msra.mxu0 0.0
        %4218 = vmatprep.subr.mxu0 0.0
        %4219 = vmatpush1.msra.mxu0 0.0
        %4220 = vmatprep.subr.mxu0 0.0
        %4221 = vmatpush1.msra.mxu0 0.0
        %4222 = vmatprep.subr.mxu0 0.0
        %4223 = vmatpush1.msra.mxu0 0.0
        %4224 = vmatprep.subr.mxu0 0.0
        %4225 = vmatpush1.msra.mxu0 0.0
        %4226 = vmatprep.subr.mxu0 0.0
        %4227 = vmatpush1.msra.mxu0 0.0
        %4228 = vmatprep.subr.mxu0 0.0
        %4229 = vmatpush1.msra.mxu0 0.0
        %4230 = vmatprep.subr.mxu0 0.0
        %4231 = vmatpush1.msra.mxu0 0.0
        %4232 = vmatprep.subr.mxu0 0.0
        %4233 = vmatpush1.msra.mxu0 0.0
        %4234 = vmatprep.subr.mxu0 0.0
        %4235 = vmatpush1.msra.mxu0 0.0
        %4236 = vmatprep.subr.mxu0 0.0
        %4237 = vmatpush1.msra.mxu0 0.0
        %4238 = vmatprep.subr.mxu0 0.0
        %4239 = vmatpush1.msra.mxu0 0.0
        %4240 = vmatprep.subr.mxu0 0.0
        %4241 = vmatpush1.msra.mxu0 0.0
        %4242 = vmatprep.subr.mxu0 0.0
        %4243 = vmatpush1.msra.mxu0 0.0
        %4244 = vmatprep.subr.mxu0 0.0
        %4245 = vmatpush1.msra.mxu0 0.0
        %4246 = vmatprep.subr.mxu0 0.0
        %4247 = vmatpush1.msra.mxu0 0.0
        %4248 = vmatprep.subr.mxu0 0.0
        %4249 = vmatpush1.msra.mxu0 0.0
        %4250 = vmatprep.subr.mxu0 0.0
        %4251 = vmatpush1.msra.mxu0 0.0
        %4252 = vmatprep.subr.mxu0 0.0
        %4253 = vmatpush1.msra.mxu0 0.0
        %4254 = vmatprep.subr.mxu0 0.0
        %4255 = vmatpush1.msra.mxu0 0.0
        %4256 = vmatprep.subr.mxu0 0.0
        %4257 = vmatpush1.msra.mxu0 0.0
        %4258 = vmatprep.subr.mxu0 0.0
        %4259 = vmatpush1.msra.mxu0 0.0
        %4260 = vmatprep.subr.mxu0 0.0
        %4261 = vmatpush1.msra.mxu0 0.0
        %4262 = vmatprep.subr.mxu0 0.0
        %4263 = vmatpush1.msra.mxu0 0.0
        %4264 = vmatprep.subr.mxu0 0.0
        %4265 = vmatpush1.msra.mxu0 0.0
        %4266 = vmatprep.subr.mxu0 0.0
        %4267 = vmatpush1.msra.mxu0 0.0
        %4268 = vmatprep.subr.mxu0 0.0
        %4269 = vmatpush1.msra.mxu0 0.0
        %4270 = vmatprep.subr.mxu0 0.0
        %4271 = vmatpush1.msra.mxu0 0.0
        %4272 = vmatprep.subr.mxu0 0.0
        %4273 = vmatpush1.msra.mxu0 0.0
        %4274 = vmatprep.mubr.f32.mxu0 0.0
        %4275 = vmatmul.mubr.f32.gmra.mrb[0].mxu0 %v4196
        %v4276 = vpop.f32.mrb[0].mxu0
        %v4277 = vadd.f32 0.0, %v4276
        %v4278 = vpop.f32.mrb[0].mxu0
        %4279 = vmatprep.mubr.f32.mxu0 0.0
        %4280 = vmatmul.mubr.f32.gmra.mrb[0].mxu0 %v4199
        %v4281 = vpop.f32.mrb[0].mxu0
        %v4282 = vadd.f32 0.0, %v4281
        %v4283 = vpop.f32.mrb[0].mxu0
        %4284 = vmatprep.mubr.f32.mxu0 0.0
        %4285 = vmatmul.mubr.f32.gmra.mrb[0].mxu0 %v4202
        %v4286 = vpop.f32.mrb[0].mxu0
        %v4287 = vadd.f32 0.0, %v4286
        %v4288 = vpop.f32.mrb[0].mxu0
        %4289 = vmatprep.mubr.f32.mxu0 0.0
        %4290 = vmatmul.mubr.f32.gmra.mrb[0].mxu0 %v4205
        %v4291 = vpop.f32.mrb[0].mxu0
        %v4292 = vadd.f32 0.0, %v4291
        %v4293 = vpop.f32.mrb[0].mxu0
        %4294 = vmatprep.mubr.f32.mxu0 0.0
        %4295 = vmatmul.mubr.f32.gmra.mrb[0].mxu0 %v4208
        %v4296 = vpop.f32.mrb[0].mxu0
        %v4297 = vadd.f32 0.0, %v4296
        %v4298 = vpop.f32.mrb[0].mxu0
        %4299 = vdwg.mxu0
        %v4301 = vsel %vm2488, %v3398, 0
        %4303 = vmatprep.subr.mxu0 0.0
        %4304 = vmatpush1.msra.mxu0 %v4301
        %4305 = vmatprep.subr.mxu0 0.0
        %4306 = vmatpush1.msra.mxu0 0.0
        %4307 = vmatprep.subr.mxu0 0.0
        %4308 = vmatpush1.msra.mxu0 0.0
        %4309 = vmatprep.subr.mxu0 0.0
        %4310 = vmatpush1.msra.mxu0 0.0
        %4311 = vmatprep.subr.mxu0 0.0
        %4312 = vmatpush1.msra.mxu0 0.0
        %4313 = vmatprep.subr.mxu0 0.0
        %4314 = vmatpush1.msra.mxu0 0.0
        %4315 = vmatprep.subr.mxu0 0.0
        %4316 = vmatpush1.msra.mxu0 0.0
        %4317 = vmatprep.subr.mxu0 0.0
        %4318 = vmatpush1.msra.mxu0 0.0
        %4319 = vmatprep.subr.mxu0 0.0
        %4320 = vmatpush1.msra.mxu0 0.0
        %4321 = vmatprep.subr.mxu0 0.0
        %4322 = vmatpush1.msra.mxu0 0.0
        %4323 = vmatprep.subr.mxu0 0.0
        %4324 = vmatpush1.msra.mxu0 0.0
        %4325 = vmatprep.subr.mxu0 0.0
        %4326 = vmatpush1.msra.mxu0 0.0
        %4327 = vmatprep.subr.mxu0 0.0
        %4328 = vmatpush1.msra.mxu0 0.0
        %4329 = vmatprep.subr.mxu0 0.0
        %4330 = vmatpush1.msra.mxu0 0.0
        %4331 = vmatprep.subr.mxu0 0.0
        %4332 = vmatpush1.msra.mxu0 0.0
        %4333 = vmatprep.subr.mxu0 0.0
        %4334 = vmatpush1.msra.mxu0 0.0
        %4335 = vmatprep.subr.mxu0 0.0
        %4336 = vmatpush1.msra.mxu0 0.0
        %4337 = vmatprep.subr.mxu0 0.0
        %4338 = vmatpush1.msra.mxu0 0.0
        %4339 = vmatprep.subr.mxu0 0.0
        %4340 = vmatpush1.msra.mxu0 0.0
        %4341 = vmatprep.subr.mxu0 0.0
        %4342 = vmatpush1.msra.mxu0 0.0
        %4343 = vmatprep.subr.mxu0 0.0
        %4344 = vmatpush1.msra.mxu0 0.0
        %4345 = vmatprep.subr.mxu0 0.0
        %4346 = vmatpush1.msra.mxu0 0.0
        %4347 = vmatprep.subr.mxu0 0.0
        %4348 = vmatpush1.msra.mxu0 0.0
        %4349 = vmatprep.subr.mxu0 0.0
        %4350 = vmatpush1.msra.mxu0 0.0
        %4351 = vmatprep.subr.mxu0 0.0
        %4352 = vmatpush1.msra.mxu0 0.0
        %4353 = vmatprep.subr.mxu0 0.0
        %4354 = vmatpush1.msra.mxu0 0.0
        %4355 = vmatprep.subr.mxu0 0.0
        %4356 = vmatpush1.msra.mxu0 0.0
        %4357 = vmatprep.subr.mxu0 0.0
        %4358 = vmatpush1.msra.mxu0 0.0
        %4359 = vmatprep.subr.mxu0 0.0
        %4360 = vmatpush1.msra.mxu0 0.0
        %4361 = vmatprep.subr.mxu0 0.0
        %4362 = vmatpush1.msra.mxu0 0.0
        %4363 = vmatprep.subr.mxu0 0.0
        %4364 = vmatpush1.msra.mxu0 0.0
        %4365 = vmatprep.subr.mxu0 0.0
        %4366 = vmatpush1.msra.mxu0 0.0
        %4367 = vmatprep.mubr.f32.mxu0 0.0
        %4368 = vmatmul.mubr.f32.gmra.mrb[0].mxu0 %v3510
        %v4369 = vpop.f32.mrb[0].mxu0
        %v4370 = vadd.f32 0.0, %v4369
        %v4371 = vpop.f32.mrb[0].mxu0
        %4372 = vmatprep.mubr.f32.mxu0 0.0
        %4373 = vmatmul.mubr.f32.gmra.mrb[0].mxu0 %v3513
        %v4374 = vpop.f32.mrb[0].mxu0
        %v4375 = vadd.f32 0.0, %v4374
        %v4376 = vpop.f32.mrb[0].mxu0
        %4377 = vmatprep.mubr.f32.mxu0 0.0
        %4378 = vmatmul.mubr.f32.gmra.mrb[0].mxu0 %v3516
        %v4379 = vpop.f32.mrb[0].mxu0
        %v4380 = vadd.f32 0.0, %v4379
        %v4381 = vpop.f32.mrb[0].mxu0
        %4382 = vmatprep.mubr.f32.mxu0 0.0
        %4383 = vmatmul.mubr.f32.gmra.mrb[0].mxu0 %v3519
        %v4384 = vpop.f32.mrb[0].mxu0
        %v4385 = vadd.f32 0.0, %v4384
        %v4386 = vpop.f32.mrb[0].mxu0
        %4387 = vmatprep.mubr.f32.mxu0 0.0
        %4388 = vmatmul.mubr.f32.gmra.mrb[0].mxu0 %v3522
        %v4389 = vpop.f32.mrb[0].mxu0
        %v4390 = vadd.f32 0.0, %v4389
        %v4391 = vpop.f32.mrb[0].mxu0
        %4392 = vdwg.mxu0
        %v4393 = vmul.f32 %v4277, %v4370
        %v4394 = vmul.f32 %v4282, %v4375
        %v4395 = vmul.f32 %v4287, %v4380
        %v4396 = vmul.f32 %v4292, %v4385
        %v4397 = vmul.f32 %v4297, %v4390
        %v4399 = vsel %vm2025, %v4397, 0
        %4401 = vmatprep.subr.mxu0 0.0
        %4402 = vmatpush1.msra.mxu0 %v4393
        %4403 = vmatprep.subr.mxu0 0.0
        %4404 = vmatpush1.msra.mxu0 %v4394
        %4405 = vmatprep.subr.mxu0 0.0
        %4406 = vmatpush1.msra.mxu0 %v4395
        %4407 = vmatprep.subr.mxu0 0.0
        %4408 = vmatpush1.msra.mxu0 %v4396
        %4409 = vmatprep.subr.mxu0 0.0
        %4410 = vmatpush1.msra.mxu0 %v4399
        %4411 = vmatprep.subr.mxu0 0.0
        %4412 = vmatpush1.msra.mxu0 0.0
        %4413 = vmatprep.subr.mxu0 0.0
        %4414 = vmatpush1.msra.mxu0 0.0
        %4415 = vmatprep.subr.mxu0 0.0
        %4416 = vmatpush1.msra.mxu0 0.0
        %4417 = vmatprep.subr.mxu0 0.0
        %4418 = vmatpush1.msra.mxu0 0.0
        %4419 = vmatprep.subr.mxu0 0.0
        %4420 = vmatpush1.msra.mxu0 0.0
        %4421 = vmatprep.subr.mxu0 0.0
        %4422 = vmatpush1.msra.mxu0 0.0
        %4423 = vmatprep.subr.mxu0 0.0
        %4424 = vmatpush1.msra.mxu0 0.0
        %4425 = vmatprep.subr.mxu0 0.0
        %4426 = vmatpush1.msra.mxu0 0.0
        %4427 = vmatprep.subr.mxu0 0.0
        %4428 = vmatpush1.msra.mxu0 0.0
        %4429 = vmatprep.subr.mxu0 0.0
        %4430 = vmatpush1.msra.mxu0 0.0
        %4431 = vmatprep.subr.mxu0 0.0
        %4432 = vmatpush1.msra.mxu0 0.0
        %4433 = vmatprep.subr.mxu0 0.0
        %4434 = vmatpush1.msra.mxu0 0.0
        %4435 = vmatprep.subr.mxu0 0.0
        %4436 = vmatpush1.msra.mxu0 0.0
        %4437 = vmatprep.subr.mxu0 0.0
        %4438 = vmatpush1.msra.mxu0 0.0
        %4439 = vmatprep.subr.mxu0 0.0
        %4440 = vmatpush1.msra.mxu0 0.0
        %4441 = vmatprep.subr.mxu0 0.0
        %4442 = vmatpush1.msra.mxu0 0.0
        %4443 = vmatprep.subr.mxu0 0.0
        %4444 = vmatpush1.msra.mxu0 0.0
        %4445 = vmatprep.subr.mxu0 0.0
        %4446 = vmatpush1.msra.mxu0 0.0
        %4447 = vmatprep.subr.mxu0 0.0
        %4448 = vmatpush1.msra.mxu0 0.0
        %4449 = vmatprep.subr.mxu0 0.0
        %4450 = vmatpush1.msra.mxu0 0.0
        %4451 = vmatprep.subr.mxu0 0.0
        %4452 = vmatpush1.msra.mxu0 0.0
        %4453 = vmatprep.subr.mxu0 0.0
        %4454 = vmatpush1.msra.mxu0 0.0
        %4455 = vmatprep.subr.mxu0 0.0
        %4456 = vmatpush1.msra.mxu0 0.0
        %4457 = vmatprep.subr.mxu0 0.0
        %4458 = vmatpush1.msra.mxu0 0.0
        %4459 = vmatprep.subr.mxu0 0.0
        %4460 = vmatpush1.msra.mxu0 0.0
        %4461 = vmatprep.subr.mxu0 0.0
        %4462 = vmatpush1.msra.mxu0 0.0
        %4463 = vmatprep.subr.mxu0 0.0
        %4464 = vmatpush1.msra.mxu0 0.0
        %4465 = vmatprep.mubr.f32.mxu0 0.0
        %4466 = vmatmul.mubr.f32.gmra.mrb[0].mxu0 %v3839
        %v4467 = vpop.f32.mrb[0].mxu0
        %v4468 = vadd.f32 0.0, %v4467
        %v4469 = vpop.f32.mrb[0].mxu0
        %4470 = vdwg.mxu0
        %v4472 = vsel %vm1053, %v4468, 0
        %4474 = vmatprep.subr.mxu0 0.0
        %4475 = vmatpush1.msra.mxu0 %v3172
        %4476 = vmatprep.subr.mxu0 0.0
        %4477 = vmatpush1.msra.mxu0 %v3173
        %4478 = vmatprep.subr.mxu0 0.0
        %4479 = vmatpush1.msra.mxu0 %v3174
        %4480 = vmatprep.subr.mxu0 0.0
        %4481 = vmatpush1.msra.mxu0 %v3175
        %4482 = vmatprep.subr.mxu0 0.0
        %4483 = vmatpush1.msra.mxu0 0.0
        %4484 = vmatprep.subr.mxu0 0.0
        %4485 = vmatpush1.msra.mxu0 0.0
        %4486 = vmatprep.subr.mxu0 0.0
        %4487 = vmatpush1.msra.mxu0 0.0
        %4488 = vmatprep.subr.mxu0 0.0
        %4489 = vmatpush1.msra.mxu0 0.0
        %4490 = vmatprep.subr.mxu0 0.0
        %4491 = vmatpush1.msra.mxu0 0.0
        %4492 = vmatprep.subr.mxu0 0.0
        %4493 = vmatpush1.msra.mxu0 0.0
        %4494 = vmatprep.subr.mxu0 0.0
        %4495 = vmatpush1.msra.mxu0 0.0
        %4496 = vmatprep.subr.mxu0 0.0
        %4497 = vmatpush1.msra.mxu0 0.0
        %4498 = vmatprep.subr.mxu0 0.0
        %4499 = vmatpush1.msra.mxu0 0.0
        %4500 = vmatprep.subr.mxu0 0.0
        %4501 = vmatpush1.msra.mxu0 0.0
        %4502 = vmatprep.subr.mxu0 0.0
        %4503 = vmatpush1.msra.mxu0 0.0
        %4504 = vmatprep.subr.mxu0 0.0
        %4505 = vmatpush1.msra.mxu0 0.0
        %4506 = vmatprep.subr.mxu0 0.0
        %4507 = vmatpush1.msra.mxu0 0.0
        %4508 = vmatprep.subr.mxu0 0.0
        %4509 = vmatpush1.msra.mxu0 0.0
        %4510 = vmatprep.subr.mxu0 0.0
        %4511 = vmatpush1.msra.mxu0 0.0
        %4512 = vmatprep.subr.mxu0 0.0
        %4513 = vmatpush1.msra.mxu0 0.0
        %4514 = vmatprep.subr.mxu0 0.0
        %4515 = vmatpush1.msra.mxu0 0.0
        %4516 = vmatprep.subr.mxu0 0.0
        %4517 = vmatpush1.msra.mxu0 0.0
        %4518 = vmatprep.subr.mxu0 0.0
        %4519 = vmatpush1.msra.mxu0 0.0
        %4520 = vmatprep.subr.mxu0 0.0
        %4521 = vmatpush1.msra.mxu0 0.0
        %4522 = vmatprep.subr.mxu0 0.0
        %4523 = vmatpush1.msra.mxu0 0.0
        %4524 = vmatprep.subr.mxu0 0.0
        %4525 = vmatpush1.msra.mxu0 0.0
        %4526 = vmatprep.subr.mxu0 0.0
        %4527 = vmatpush1.msra.mxu0 0.0
        %4528 = vmatprep.subr.mxu0 0.0
        %4529 = vmatpush1.msra.mxu0 0.0
        %4530 = vmatprep.subr.mxu0 0.0
        %4531 = vmatpush1.msra.mxu0 0.0
        %4532 = vmatprep.subr.mxu0 0.0
        %4533 = vmatpush1.msra.mxu0 0.0
        %4534 = vmatprep.subr.mxu0 0.0
        %4535 = vmatpush1.msra.mxu0 0.0
        %4536 = vmatprep.subr.mxu0 0.0
        %4537 = vmatpush1.msra.mxu0 0.0
        %4538 = vmatprep.mubr.f32.mxu0 0.0
        %4539 = vmatmul.mubr.f32.gmra.mrb[0].mxu0 %v4472
        %v4540 = vpop.f32.mrb[0].mxu0
        %v4541 = vadd.f32 %v3152, %v4540
        %v4542 = vpop.f32.mrb[0].mxu0
        %4543 = vdwg.mxu0
        %v4544 = vld [vmem:[#allocation18] sm:$0xff]
        %v4545 = vld [vmem:[#allocation18 + $0x8] sm:$0xff]
        %v4546 = vld [vmem:[#allocation18 + $0x10] sm:$0xff]
        %v4547 = vld [vmem:[#allocation18 + $0x18] sm:$0xff]
        %v4548 = vld [vmem:[#allocation18 + $0x20] sm:$0xff]
        %v4549 = vld [vmem:[#allocation18 + $0x28] sm:$0xff]
        %v4550 = vld [vmem:[#allocation18 + $0x30] sm:$0xff]
        %v4551 = vld [vmem:[#allocation18 + $0x38] sm:$0xff]
        %v4552 = vld [vmem:[#allocation18 + $0x40] sm:$0xff]
        %v4553 = vld [vmem:[#allocation18 + $0x48] sm:$0xff]
        %v4554 = vld [vmem:[#allocation18 + $0x50] sm:$0xff]
        %v4555 = vld [vmem:[#allocation18 + $0x58] sm:$0xff]
        %v4556 = vld [vmem:[#allocation18 + $0x60] sm:$0xff]
        %v4557 = vld [vmem:[#allocation18 + $0x68] sm:$0xff]
        %v4558 = vld [vmem:[#allocation18 + $0x70] sm:$0xff]
        %v4559 = vld [vmem:[#allocation18 + $0x78] sm:$0xff]
        %v4560 = vld [vmem:[#allocation19] sm:$0xf]
        %v4562 = vlaneseq
        %v4563 = vshrl.u32 %v4562, 7
        %v4564 = vsub.s32 0, %v4563
        %v4565 = vrot.slane %v4560, %v4564
        %v4566 = vlaneseq
        %v4567 = vshrl.u32 %v4566, 7
        %v4568 = vsub.s32 1, %v4567
        %v4569 = vrot.slane %v4560, %v4568
        %v4570 = vlaneseq
        %v4571 = vshrl.u32 %v4570, 7
        %v4572 = vsub.s32 2, %v4571
        %v4573 = vrot.slane %v4560, %v4572
        %v4574 = vlaneseq
        %v4575 = vshrl.u32 %v4574, 7
        %v4576 = vsub.s32 3, %v4575
        %v4577 = vrot.slane %v4560, %v4576
        %v4583 = vsel %vm1053, %v4541, 0
        %4585 = vmatprep.subr.mxu0 %v4545
        %4586 = vmatpush1.msra.mxu0 %v4544
        %4587 = vmatprep.subr.mxu0 %v4549
        %4588 = vmatpush1.msra.mxu0 %v4548
        %4589 = vmatprep.subr.mxu0 %v4553
        %4590 = vmatpush1.msra.mxu0 %v4552
        %4591 = vmatprep.subr.mxu0 %v4557
        %4592 = vmatpush1.msra.mxu0 %v4556
        %4593 = vmatprep.subr.mxu0 0.0
        %4594 = vmatpush1.msra.mxu0 0.0
        %4595 = vmatprep.subr.mxu0 0.0
        %4596 = vmatpush1.msra.mxu0 0.0
        %4597 = vmatprep.subr.mxu0 0.0
        %4598 = vmatpush1.msra.mxu0 0.0
        %4599 = vmatprep.subr.mxu0 0.0
        %4600 = vmatpush1.msra.mxu0 0.0
        %4601 = vmatprep.subr.mxu0 0.0
        %4602 = vmatpush1.msra.mxu0 0.0
        %4603 = vmatprep.subr.mxu0 0.0
        %4604 = vmatpush1.msra.mxu0 0.0
        %4605 = vmatprep.subr.mxu0 0.0
        %4606 = vmatpush1.msra.mxu0 0.0
        %4607 = vmatprep.subr.mxu0 0.0
        %4608 = vmatpush1.msra.mxu0 0.0
        %4609 = vmatprep.subr.mxu0 0.0
        %4610 = vmatpush1.msra.mxu0 0.0
        %4611 = vmatprep.subr.mxu0 0.0
        %4612 = vmatpush1.msra.mxu0 0.0
        %4613 = vmatprep.subr.mxu0 0.0
        %4614 = vmatpush1.msra.mxu0 0.0
        %4615 = vmatprep.subr.mxu0 0.0
        %4616 = vmatpush1.msra.mxu0 0.0
        %4617 = vmatprep.subr.mxu0 0.0
        %4618 = vmatpush1.msra.mxu0 0.0
        %4619 = vmatprep.subr.mxu0 0.0
        %4620 = vmatpush1.msra.mxu0 0.0
        %4621 = vmatprep.subr.mxu0 0.0
        %4622 = vmatpush1.msra.mxu0 0.0
        %4623 = vmatprep.subr.mxu0 0.0
        %4624 = vmatpush1.msra.mxu0 0.0
        %4625 = vmatprep.subr.mxu0 0.0
        %4626 = vmatpush1.msra.mxu0 0.0
        %4627 = vmatprep.subr.mxu0 0.0
        %4628 = vmatpush1.msra.mxu0 0.0
        %4629 = vmatprep.subr.mxu0 0.0
        %4630 = vmatpush1.msra.mxu0 0.0
        %4631 = vmatprep.subr.mxu0 0.0
        %4632 = vmatpush1.msra.mxu0 0.0
        %4633 = vmatprep.subr.mxu0 0.0
        %4634 = vmatpush1.msra.mxu0 0.0
        %4635 = vmatprep.subr.mxu0 0.0
        %4636 = vmatpush1.msra.mxu0 0.0
        %4637 = vmatprep.subr.mxu0 0.0
        %4638 = vmatpush1.msra.mxu0 0.0
        %4639 = vmatprep.subr.mxu0 0.0
        %4640 = vmatpush1.msra.mxu0 0.0
        %4641 = vmatprep.subr.mxu0 0.0
        %4642 = vmatpush1.msra.mxu0 0.0
        %4643 = vmatprep.subr.mxu0 0.0
        %4644 = vmatpush1.msra.mxu0 0.0
        %4645 = vmatprep.subr.mxu0 0.0
        %4646 = vmatpush1.msra.mxu0 0.0
        %4647 = vmatprep.subr.mxu0 0.0
        %4648 = vmatpush1.msra.mxu0 0.0
        %4649 = vmatprep.mubr.f32.mxu0 0.0
        %4650 = vmatmul.mubr.f32.gmra.mrb[0].mxu0 %v4583
        %v4651 = vpop.f32.mrb[0].mxu0
        %v4652 = vadd.f32 %v4565, %v4651
        %v4653 = vpop.f32.mrb[0].mxu0
        %v4654 = vadd.f32 %v4569, %v4653
        %4655 = vdwg.mxu0
        %4656 = vmatprep.subr.mxu0 %v4547
        %4657 = vmatpush1.msra.mxu0 %v4546
        %4658 = vmatprep.subr.mxu0 %v4551
        %4659 = vmatpush1.msra.mxu0 %v4550
        %4660 = vmatprep.subr.mxu0 %v4555
        %4661 = vmatpush1.msra.mxu0 %v4554
        %4662 = vmatprep.subr.mxu0 %v4559
        %4663 = vmatpush1.msra.mxu0 %v4558
        %4664 = vmatprep.subr.mxu0 0.0
        %4665 = vmatpush1.msra.mxu0 0.0
        %4666 = vmatprep.subr.mxu0 0.0
        %4667 = vmatpush1.msra.mxu0 0.0
        %4668 = vmatprep.subr.mxu0 0.0
        %4669 = vmatpush1.msra.mxu0 0.0
        %4670 = vmatprep.subr.mxu0 0.0
        %4671 = vmatpush1.msra.mxu0 0.0
        %4672 = vmatprep.subr.mxu0 0.0
        %4673 = vmatpush1.msra.mxu0 0.0
        %4674 = vmatprep.subr.mxu0 0.0
        %4675 = vmatpush1.msra.mxu0 0.0
        %4676 = vmatprep.subr.mxu0 0.0
        %4677 = vmatpush1.msra.mxu0 0.0
        %4678 = vmatprep.subr.mxu0 0.0
        %4679 = vmatpush1.msra.mxu0 0.0
        %4680 = vmatprep.subr.mxu0 0.0
        %4681 = vmatpush1.msra.mxu0 0.0
        %4682 = vmatprep.subr.mxu0 0.0
        %4683 = vmatpush1.msra.mxu0 0.0
        %4684 = vmatprep.subr.mxu0 0.0
        %4685 = vmatpush1.msra.mxu0 0.0
        %4686 = vmatprep.subr.mxu0 0.0
        %4687 = vmatpush1.msra.mxu0 0.0
        %4688 = vmatprep.subr.mxu0 0.0
        %4689 = vmatpush1.msra.mxu0 0.0
        %4690 = vmatprep.subr.mxu0 0.0
        %4691 = vmatpush1.msra.mxu0 0.0
        %4692 = vmatprep.subr.mxu0 0.0
        %4693 = vmatpush1.msra.mxu0 0.0
        %4694 = vmatprep.subr.mxu0 0.0
        %4695 = vmatpush1.msra.mxu0 0.0
        %4696 = vmatprep.subr.mxu0 0.0
        %4697 = vmatpush1.msra.mxu0 0.0
        %4698 = vmatprep.subr.mxu0 0.0
        %4699 = vmatpush1.msra.mxu0 0.0
        %4700 = vmatprep.subr.mxu0 0.0
        %4701 = vmatpush1.msra.mxu0 0.0
        %4702 = vmatprep.subr.mxu0 0.0
        %4703 = vmatpush1.msra.mxu0 0.0
        %4704 = vmatprep.subr.mxu0 0.0
        %4705 = vmatpush1.msra.mxu0 0.0
        %4706 = vmatprep.subr.mxu0 0.0
        %4707 = vmatpush1.msra.mxu0 0.0
        %4708 = vmatprep.subr.mxu0 0.0
        %4709 = vmatpush1.msra.mxu0 0.0
        %4710 = vmatprep.subr.mxu0 0.0
        %4711 = vmatpush1.msra.mxu0 0.0
        %4712 = vmatprep.subr.mxu0 0.0
        %4713 = vmatpush1.msra.mxu0 0.0
        %4714 = vmatprep.subr.mxu0 0.0
        %4715 = vmatpush1.msra.mxu0 0.0
        %4716 = vmatprep.subr.mxu0 0.0
        %4717 = vmatpush1.msra.mxu0 0.0
        %4718 = vmatprep.subr.mxu0 0.0
        %4719 = vmatpush1.msra.mxu0 0.0
        %4720 = vmatprep.mubr.f32.mxu0 0.0
        %4721 = vmatmul.mubr.f32.gmra.mrb[0].mxu0 %v4583
        %v4722 = vpop.f32.mrb[0].mxu0
        %v4723 = vadd.f32 %v4573, %v4722
        %v4724 = vpop.f32.mrb[0].mxu0
        %v4725 = vadd.f32 %v4577, %v4724
        %4726 = vdwg.mxu0
        %v4727 = vmax.f32 %v4652, 0.0
        %v4728 = vmax.f32 %v4654, 0.0
        %v4729 = vmax.f32 %v4723, 0.0
        %v4730 = vmax.f32 %v4725, 0.0
        %v4731 = vld [vmem:[%s22] sm:$0xff]
        %v4732 = vld [vmem:[%s22 + $0x8] sm:$0xff]
        %v4733 = vld [vmem:[%s22 + $0x10] sm:$0xff]
        %v4734 = vld [vmem:[%s22 + $0x18] sm:$0xff]
        %v4735 = vld [vmem:[%s22 + $0x20] sm:$0xff]
        %v4736 = vld [vmem:[%s22 + $0x28] sm:$0xff]
        %v4737 = vld [vmem:[%s22 + $0x30] sm:$0xff]
        %v4738 = vld [vmem:[%s22 + $0x38] sm:$0xff]
        %v4739 = vld [vmem:[%s22 + $0x40] sm:$0xff]
        %v4740 = vld [vmem:[%s22 + $0x48] sm:$0xff]
        %v4741 = vld [vmem:[%s22 + $0x50] sm:$0xff]
        %v4742 = vld [vmem:[%s22 + $0x58] sm:$0xff]
        %v4743 = vld [vmem:[%s22 + $0x60] sm:$0xff]
        %v4744 = vld [vmem:[%s22 + $0x68] sm:$0xff]
        %v4745 = vld [vmem:[%s22 + $0x70] sm:$0xff]
        %v4746 = vld [vmem:[%s22 + $0x78] sm:$0xff]
        %v4747 = vld [vmem:[%s22 + $0x80] sm:$0xff]
        %v4748 = vld [vmem:[%s22 + $0x88] sm:$0xff]
        %v4749 = vld [vmem:[%s22 + $0x90] sm:$0xff]
        %v4750 = vld [vmem:[%s22 + $0x98] sm:$0xff]
        %v4751 = vld [vmem:[%s22 + $0xa0] sm:$0xff]
        %v4752 = vld [vmem:[%s22 + $0xa8] sm:$0xff]
        %v4753 = vld [vmem:[%s22 + $0xb0] sm:$0xff]
        %v4754 = vld [vmem:[%s22 + $0xb8] sm:$0xff]
        %v4755 = vld [vmem:[%s22 + $0xc0] sm:$0xff]
        %v4756 = vld [vmem:[%s22 + $0xc8] sm:$0xff]
        %v4757 = vld [vmem:[%s22 + $0xd0] sm:$0xff]
        %v4758 = vld [vmem:[%s22 + $0xd8] sm:$0xff]
        %v4759 = vld [vmem:[%s22 + $0xe0] sm:$0xff]
        %v4760 = vld [vmem:[%s22 + $0xe8] sm:$0xff]
        %v4761 = vld [vmem:[%s22 + $0xf0] sm:$0xff]
        %v4762 = vld [vmem:[%s22 + $0xf8] sm:$0xff]
        %v4763 = vld [vmem:[%s22 + $0x100] sm:$0xff]
        %v4764 = vld [vmem:[%s22 + $0x108] sm:$0xff]
        %v4765 = vld [vmem:[%s22 + $0x110] sm:$0xff]
        %v4766 = vld [vmem:[%s22 + $0x118] sm:$0xff]
        %v4767 = vld [vmem:[%s22 + $0x120] sm:$0xff]
        %v4768 = vld [vmem:[%s22 + $0x128] sm:$0xff]
        %v4769 = vld [vmem:[%s22 + $0x130] sm:$0xff]
        %v4770 = vld [vmem:[%s22 + $0x138] sm:$0xff]
        %v4771 = vld [vmem:[%s22 + $0x140] sm:$0xff]
        %v4772 = vld [vmem:[%s22 + $0x148] sm:$0xff]
        %v4773 = vld [vmem:[%s22 + $0x150] sm:$0xff]
        %v4774 = vld [vmem:[%s22 + $0x158] sm:$0xff]
        %v4775 = vld [vmem:[%s22 + $0x160] sm:$0xff]
        %v4776 = vld [vmem:[%s22 + $0x168] sm:$0xff]
        %v4777 = vld [vmem:[%s22 + $0x170] sm:$0xff]
        %v4778 = vld [vmem:[%s22 + $0x178] sm:$0xff]
        %v4779 = vld [vmem:[%s22 + $0x180] sm:$0xff]
        %v4780 = vld [vmem:[%s22 + $0x188] sm:$0xff]
        %v4781 = vld [vmem:[%s22 + $0x190] sm:$0xff]
        %v4782 = vld [vmem:[%s22 + $0x198] sm:$0xff]
        %v4783 = vld [vmem:[%s22 + $0x1a0] sm:$0xff]
        %v4784 = vld [vmem:[%s22 + $0x1a8] sm:$0xff]
        %v4785 = vld [vmem:[%s22 + $0x1b0] sm:$0xff]
        %v4786 = vld [vmem:[%s22 + $0x1b8] sm:$0xff]
        %v4787 = vld [vmem:[%s22 + $0x1c0] sm:$0xff]
        %v4788 = vld [vmem:[%s22 + $0x1c8] sm:$0xff]
        %v4789 = vld [vmem:[%s22 + $0x1d0] sm:$0xff]
        %v4790 = vld [vmem:[%s22 + $0x1d8] sm:$0xff]
        %v4791 = vld [vmem:[%s22 + $0x1e0] sm:$0xff]
        %v4792 = vld [vmem:[%s22 + $0x1e8] sm:$0xff]
        %v4793 = vld [vmem:[%s22 + $0x1f0] sm:$0xff]
        %v4794 = vld [vmem:[%s22 + $0x1f8] sm:$0xff]
        %v4795 = vld [vmem:[%s23] sm:$0x1]
        %v4797 = vlaneseq
        %v4798 = vshrl.u32 %v4797, 7
        %v4799 = vsub.s32 0, %v4798
        %v4800 = vrot.slane %v4795, %v4799
        %4802 = vmatprep.subr.mxu0 0.0
        %4803 = vmatpush1.msra.mxu0 %v4731
        %4804 = vmatprep.subr.mxu0 0.0
        %4805 = vmatpush1.msra.mxu0 %v4732
        %4806 = vmatprep.subr.mxu0 0.0
        %4807 = vmatpush1.msra.mxu0 %v4733
        %4808 = vmatprep.subr.mxu0 0.0
        %4809 = vmatpush1.msra.mxu0 %v4734
        %4810 = vmatprep.subr.mxu0 0.0
        %4811 = vmatpush1.msra.mxu0 %v4735
        %4812 = vmatprep.subr.mxu0 0.0
        %4813 = vmatpush1.msra.mxu0 %v4736
        %4814 = vmatprep.subr.mxu0 0.0
        %4815 = vmatpush1.msra.mxu0 %v4737
        %4816 = vmatprep.subr.mxu0 0.0
        %4817 = vmatpush1.msra.mxu0 %v4738
        %4818 = vmatprep.subr.mxu0 0.0
        %4819 = vmatpush1.msra.mxu0 %v4739
        %4820 = vmatprep.subr.mxu0 0.0
        %4821 = vmatpush1.msra.mxu0 %v4740
        %4822 = vmatprep.subr.mxu0 0.0
        %4823 = vmatpush1.msra.mxu0 %v4741
        %4824 = vmatprep.subr.mxu0 0.0
        %4825 = vmatpush1.msra.mxu0 %v4742
        %4826 = vmatprep.subr.mxu0 0.0
        %4827 = vmatpush1.msra.mxu0 %v4743
        %4828 = vmatprep.subr.mxu0 0.0
        %4829 = vmatpush1.msra.mxu0 %v4744
        %4830 = vmatprep.subr.mxu0 0.0
        %4831 = vmatpush1.msra.mxu0 %v4745
        %4832 = vmatprep.subr.mxu0 0.0
        %4833 = vmatpush1.msra.mxu0 %v4746
        %4834 = vmatprep.subr.mxu0 0.0
        %4835 = vmatpush1.msra.mxu0 %v4747
        %4836 = vmatprep.subr.mxu0 0.0
        %4837 = vmatpush1.msra.mxu0 %v4748
        %4838 = vmatprep.subr.mxu0 0.0
        %4839 = vmatpush1.msra.mxu0 %v4749
        %4840 = vmatprep.subr.mxu0 0.0
        %4841 = vmatpush1.msra.mxu0 %v4750
        %4842 = vmatprep.subr.mxu0 0.0
        %4843 = vmatpush1.msra.mxu0 %v4751
        %4844 = vmatprep.subr.mxu0 0.0
        %4845 = vmatpush1.msra.mxu0 %v4752
        %4846 = vmatprep.subr.mxu0 0.0
        %4847 = vmatpush1.msra.mxu0 %v4753
        %4848 = vmatprep.subr.mxu0 0.0
        %4849 = vmatpush1.msra.mxu0 %v4754
        %4850 = vmatprep.subr.mxu0 0.0
        %4851 = vmatpush1.msra.mxu0 %v4755
        %4852 = vmatprep.subr.mxu0 0.0
        %4853 = vmatpush1.msra.mxu0 %v4756
        %4854 = vmatprep.subr.mxu0 0.0
        %4855 = vmatpush1.msra.mxu0 %v4757
        %4856 = vmatprep.subr.mxu0 0.0
        %4857 = vmatpush1.msra.mxu0 %v4758
        %4858 = vmatprep.subr.mxu0 0.0
        %4859 = vmatpush1.msra.mxu0 %v4759
        %4860 = vmatprep.subr.mxu0 0.0
        %4861 = vmatpush1.msra.mxu0 %v4760
        %4862 = vmatprep.subr.mxu0 0.0
        %4863 = vmatpush1.msra.mxu0 %v4761
        %4864 = vmatprep.subr.mxu0 0.0
        %4865 = vmatpush1.msra.mxu0 %v4762
        %4866 = vmatprep.mubr.f32.mxu0 %v4728
        %4867 = vmatmul.mubr.f32.gmra.mrb[0].mxu0 %v4727
        %v4868 = vpop.f32.mrb[0].mxu0
        %v4869 = vadd.f32 %v4800, %v4868
        %v4870 = vpop.f32.mrb[0].mxu0
        %4871 = vdwg.mxu0
        %4872 = vmatprep.subr.mxu0 0.0
        %4873 = vmatpush1.msra.mxu0 %v4763
        %4874 = vmatprep.subr.mxu0 0.0
        %4875 = vmatpush1.msra.mxu0 %v4764
        %4876 = vmatprep.subr.mxu0 0.0
        %4877 = vmatpush1.msra.mxu0 %v4765
        %4878 = vmatprep.subr.mxu0 0.0
        %4879 = vmatpush1.msra.mxu0 %v4766
        %4880 = vmatprep.subr.mxu0 0.0
        %4881 = vmatpush1.msra.mxu0 %v4767
        %4882 = vmatprep.subr.mxu0 0.0
        %4883 = vmatpush1.msra.mxu0 %v4768
        %4884 = vmatprep.subr.mxu0 0.0
        %4885 = vmatpush1.msra.mxu0 %v4769
        %4886 = vmatprep.subr.mxu0 0.0
        %4887 = vmatpush1.msra.mxu0 %v4770
        %4888 = vmatprep.subr.mxu0 0.0
        %4889 = vmatpush1.msra.mxu0 %v4771
        %4890 = vmatprep.subr.mxu0 0.0
        %4891 = vmatpush1.msra.mxu0 %v4772
        %4892 = vmatprep.subr.mxu0 0.0
        %4893 = vmatpush1.msra.mxu0 %v4773
        %4894 = vmatprep.subr.mxu0 0.0
        %4895 = vmatpush1.msra.mxu0 %v4774
        %4896 = vmatprep.subr.mxu0 0.0
        %4897 = vmatpush1.msra.mxu0 %v4775
        %4898 = vmatprep.subr.mxu0 0.0
        %4899 = vmatpush1.msra.mxu0 %v4776
        %4900 = vmatprep.subr.mxu0 0.0
        %4901 = vmatpush1.msra.mxu0 %v4777
        %4902 = vmatprep.subr.mxu0 0.0
        %4903 = vmatpush1.msra.mxu0 %v4778
        %4904 = vmatprep.subr.mxu0 0.0
        %4905 = vmatpush1.msra.mxu0 %v4779
        %4906 = vmatprep.subr.mxu0 0.0
        %4907 = vmatpush1.msra.mxu0 %v4780
        %4908 = vmatprep.subr.mxu0 0.0
        %4909 = vmatpush1.msra.mxu0 %v4781
        %4910 = vmatprep.subr.mxu0 0.0
        %4911 = vmatpush1.msra.mxu0 %v4782
        %4912 = vmatprep.subr.mxu0 0.0
        %4913 = vmatpush1.msra.mxu0 %v4783
        %4914 = vmatprep.subr.mxu0 0.0
        %4915 = vmatpush1.msra.mxu0 %v4784
        %4916 = vmatprep.subr.mxu0 0.0
        %4917 = vmatpush1.msra.mxu0 %v4785
        %4918 = vmatprep.subr.mxu0 0.0
        %4919 = vmatpush1.msra.mxu0 %v4786
        %4920 = vmatprep.subr.mxu0 0.0
        %4921 = vmatpush1.msra.mxu0 %v4787
        %4922 = vmatprep.subr.mxu0 0.0
        %4923 = vmatpush1.msra.mxu0 %v4788
        %4924 = vmatprep.subr.mxu0 0.0
        %4925 = vmatpush1.msra.mxu0 %v4789
        %4926 = vmatprep.subr.mxu0 0.0
        %4927 = vmatpush1.msra.mxu0 %v4790
        %4928 = vmatprep.subr.mxu0 0.0
        %4929 = vmatpush1.msra.mxu0 %v4791
        %4930 = vmatprep.subr.mxu0 0.0
        %4931 = vmatpush1.msra.mxu0 %v4792
        %4932 = vmatprep.subr.mxu0 0.0
        %4933 = vmatpush1.msra.mxu0 %v4793
        %4934 = vmatprep.subr.mxu0 0.0
        %4935 = vmatpush1.msra.mxu0 %v4794
        %4936 = vmatprep.mubr.f32.mxu0 %v4730
        %4937 = vmatmul.mubr.f32.gmra.mrb[0].mxu0 %v4729
        %v4938 = vpop.f32.mrb[0].mxu0
        %v4939 = vadd.f32 %v4869, %v4938
        %v4940 = vpop.f32.mrb[0].mxu0
        %4941 = vdwg.mxu0
        %4942 = vst [vmem:[%s927] sm:$0x3f] %v4939
        %p4943 = scmp.lt.s32.totalorder %s44, 1
        %s4944 = scalar_select %p4943, %s44, 1
        %s4945 = smul.addr %s4944, 8
        %s4946 = scalar_lea.vmem %s24, %s4945
        // Predicated region
        $region165: #{hifanet_forward.1} parent=115 // pred_check
          %p4947 = pneg %p576
        $region166: #{hifanet_forward.1} parent=115 // pred_check_branch
          %4949 = sbr.rel (%p4947) target = $region168
        $region167: #{hifanet_forward.1} parent=115 // pred_region
          _
        $region168: #{hifanet_forward.1} parent=115 // pred_fallthru
          _
      $region116: #{hifanet_forward.1} parent=5 // pred_fallthru
        _
      %p4950 = scmp.le.s32.totalorder 2, %s39
      // Predicated region
      $region169: #{hifanet_forward.1} parent=5 // pred_check
        %p4951 = pneg %p4950
      $region170: #{hifanet_forward.1} parent=5 // pred_check_branch
        %4953 = sbr.rel (%p4951) target = $region172
      $region171: #{hifanet_forward.1} parent=5 // pred_region
        %s4954 = ssub.s32 %s39, 2
        // Predicated region
        $region173: #{hifanet_forward.1} parent=171 // pred_check
          %p4955 = pneg %p582
        $region174: #{hifanet_forward.1} parent=171 // pred_check_branch
          %4957 = sbr.rel (%p4955) target = $region176
        $region175: #{hifanet_forward.1} parent=171 // pred_region
          %p4958 = scmp.lt.s32.totalorder %s45, 1
          %s4959 = scalar_select %p4958, %s45, 1
          %s4960 = smul.addr %s4959, 8
          %s4961 = scalar_lea.vmem %s24, %s4960
        $region176: #{hifanet_forward.1} parent=171 // pred_fallthru
          _
      $region172: #{hifanet_forward.1} parent=5 // pred_fallthru
        _
    $region6: #{hifanet_forward.1} parent=1 // loop_footer
      %s43 = sadd.s32 1, %s39
    $region7: #{hifanet_forward.1} parent=1 // loop_footer_branch
      %38 = sbr.rel target = $region3
    $region8: #{hifanet_forward.1} parent=1 // loop_exit
      _
    %4962 = vsyncpa [#allocation3], 1
    %s4963 = scalar_lea.sflag [#allocation3], 1
    %4964 = vsyncpa %s4963, 1
    %4965 = vsyncpa [#allocation5], 1
    %4966 = vsyncpa [#allocation8], 1
    %4967 = vsyncpa [#allocation11], 1
    %4968 = vsyncpa [#allocation14], 1
    %4969 = vsyncpa [#allocation17], 1
    %4970 = vsyncpa [#allocation20], 1

</llo_original>
